<compile_context>
chip_gen: v7x
topology: tpu7x:2x2x1
jax: 0.10.0
libtpu: 0.0.40
codegen_flags: <defaults>
</compile_context>

<pallas_src>
import functools
import math
import numpy as np
import jax
import jax.numpy as jnp
from jax.experimental import pallas as pl
from jax.experimental.pallas import tpu as pltpu


# ----------------------------- anchor utilities (host-side glue) -----------------------------
def base_anchor_generator(base_size=16, ratios=(0.5, 1.0, 2.0), scales=(8, 16, 32)):
    py = base_size / 2.0
    px = base_size / 2.0
    ab = np.zeros((len(ratios) * len(scales), 4), dtype=np.float32)
    for i, r in enumerate(ratios):
        for j, s in enumerate(scales):
            h = base_size * s * np.sqrt(r)
            w = base_size * s * np.sqrt(1.0 / r)
            idx = i * len(scales) + j
            ab[idx, 0] = py - h / 2.0
            ab[idx, 1] = px - w / 2.0
            ab[idx, 2] = py + h / 2.0
            ab[idx, 3] = px + w / 2.0
    return ab


def enumerate_shift_anchor(anchor_base, feat_stride, H, W):
    shift_y = np.arange(0, H * feat_stride, feat_stride)
    shift_x = np.arange(0, W * feat_stride, feat_stride)
    shift_x, shift_y = np.meshgrid(shift_x, shift_y)
    shift = np.stack((shift_y.ravel(), shift_x.ravel(),
                      shift_y.ravel(), shift_x.ravel()), axis=1)
    A = anchor_base.shape[0]
    K = shift.shape[0]
    anchor = anchor_base.reshape((1, A, 4)) + \
        shift.reshape((1, K, 4)).transpose((1, 0, 2))
    return anchor.reshape((K * A, 4)).astype(np.float32)


# ----------------------------- fused Pallas kernel -----------------------------
def rpn_fused_kernel(x_ref, w1_ref, b1_ref, wh_ref, bh_ref, anc_ref, out_ref,
                     *, A, cin, th, w, img_h, img_w):
    # x_ref:   (th+2, w+2, cin) bf16 NHWC row band with 1-row/1-col halo (in-kernel im2col)
    # w1_ref:  (9*cin, cmid) bf16 conv weight, rows ordered (dy*3+dx)*cin + c; b1_ref: (1, cmid) f32
    # wh_ref:  (cmid, 7*A) bf16 fused heads [score 2A | loc coord-major 4A | fg-bg diff A]
    # anc_ref: (th*w, 4*A) f32 anchors, center-size coord-major [cy|cx|h|w]
    # out_ref: (th*w, 128) f32 lane-dense slab [score 2A | loc_cm 4A | fg A | proposals 4A | pad]
    thw = th * w
    cmid = w1_ref.shape[-1]
    xb = x_ref[...]
    w1 = w1_ref[...]

    # 3x3 conv + bias + ReLU: 9 accumulated matmuls against static VMEM tap slices
    acc = jnp.zeros((thw, cmid), jnp.float32)
    for dy in range(3):
        for dx in range(3):
            tap = xb[dy:dy + th, dx:dx + w, :].reshape(thw, cin)
            k0 = (dy * 3 + dx) * cin
            acc = acc + jnp.dot(tap, w1[k0:k0 + cin, :],
                                preferred_element_type=jnp.float32)
    h = jnp.maximum(acc + b1_ref[...], 0.0).astype(jnp.bfloat16)

    # fused 1x1 heads (one matmul)
    res = jnp.dot(h, wh_ref[...], preferred_element_type=jnp.float32) + bh_ref[...]

    # foreground prob = softmax(bg, fg)[fg] == sigmoid(fg_logit - bg_logit)   (exact)
    fg = 1.0 / (1.0 + jnp.exp(-res[:, 6 * A:7 * A]))

    # decode against center-size anchors and clip to the image
    d_y = res[:, 2 * A:3 * A]
    d_x = res[:, 3 * A:4 * A]
    d_h = res[:, 4 * A:5 * A]
    d_w = res[:, 5 * A:6 * A]
    anc = anc_ref[...]
    acy = anc[:, 0:A]
    acx = anc[:, A:2 * A]
    ah = anc[:, 2 * A:3 * A]
    aw = anc[:, 3 * A:4 * A]
    cy = d_y * ah + acy
    cx = d_x * aw + acx
    nh = jnp.exp(d_h) * ah
    nw = jnp.exp(d_w) * aw

    pieces = [res[:, 0:6 * A],
              fg,
              jnp.clip(cy - 0.5 * nh, 0.0, img_h),
              jnp.clip(cx - 0.5 * nw, 0.0, img_w),
              jnp.clip(cy + 0.5 * nh, 0.0, img_h),
              jnp.clip(cx + 0.5 * nw, 0.0, img_w)]
    pad_w = out_ref.shape[-1] - 11 * A
    if pad_w:
        pieces.append(jnp.zeros((thw, pad_w), jnp.float32))
    # one full-vreg, 128-lane-dense store
    out_ref[...] = jnp.concatenate(pieces, axis=-1)


# ----------------------------- parameters -----------------------------
def make_params(key, cin, cmid, ratios=(0.5, 1.0, 2.0), scales=(8, 16, 32)):
    anchor_base = base_anchor_generator(16, ratios, scales)
    A = anchor_base.shape[0]
    k1, k2, k3 = jax.random.split(key, 3)

    def xavier(k, shape, fan_in, fan_out):
        b = float(np.sqrt(6.0 / (fan_in + fan_out)))
        return jax.random.uniform(k, shape, jnp.float32, -b, b)

    # conv weight laid out so that reshape(9*cin, cmid) row order matches tap order (dy*3+dx)*cin + c
    w1 = xavier(k1, (3, 3, cin, cmid), cin * 9, cmid * 9).reshape(9 * cin, cmid)
    b1 = jnp.full((1, cmid), 0.1, jnp.float32)

    w_score = xavier(k2, (cmid, A * 2), cmid, A * 2)      # columns: a*2 + cls (torch layout)
    b_score = jnp.full((1, A * 2), 0.1, jnp.float32)
    w_loc = xavier(k3, (cmid, A * 4), cmid, A * 4)        # columns: a*4 + coord (torch layout)
    b_loc = jnp.full((1, A * 4), 0.1, jnp.float32)

    # coordinate-major permutation of the loc columns: the kernel decodes straight from these,
    # the torch-layout rpn_loc is rebuilt by a tiny wrapper transpose (no duplicate output columns)
    w_loc_cm = w_loc.reshape(cmid, A, 4).transpose(0, 2, 1).reshape(cmid, 4 * A)
    b_loc_cm = b_loc.reshape(1, A, 4).transpose(0, 2, 1).reshape(1, 4 * A)

    # fg-minus-bg logit difference columns: softmax fg prob == sigmoid(diff)
    w_diff = w_score[:, 1::2] - w_score[:, 0::2]
    b_diff = b_score[:, 1::2] - b_score[:, 0::2]

    w_heads = jnp.concatenate([w_score, w_loc_cm, w_diff], axis=1)   # (cmid, 7*A)
    b_heads = jnp.concatenate([b_score, b_loc_cm, b_diff], axis=1)   # (1, 7*A)

    return dict(anchor_base=anchor_base, n_anchor=A,
                w1=w1.astype(jnp.bfloat16), b1=b1,
                w_heads=w_heads.astype(jnp.bfloat16), b_heads=b_heads)


# ----------------------------- tiling helper -----------------------------
def _legalize_h_tile(th, H, W):
    # keep (th*W) % 8 == 0 (block-shape rule) unless a single full tile is used
    g = 8 // math.gcd(W, 8)
    th = ((th + g - 1) // g) * g
    if th >= H:
        th = H
    return max(1, th)


def _pick_h_tile(H, W, target_rows=512):
    th = max(1, min(H, target_rows // max(W, 1)))
    if H >= 2:
        th = min(th, (H + 1) // 2)      # force >= 2 H-tiles: pipelining + v7x 2-TC load balance
    return _legalize_h_tile(th, H, W)


# ----------------------------- forward pass -----------------------------
def rpn_forward(params, x, img_size, n_pre_nms, n_post_nms, scale,
                feat_stride=16, min_size=16.0, h_tile=None):
    N, Cin, H, W = x.shape
    A = params["n_anchor"]
    Cmid = params["w1"].shape[-1]
    CH = params["w_heads"].shape[-1]                      # 7*A head columns
    HW = H * W
    M = HW * A

    # ---- host-side anchors: corner form (returned) + center-size coord-major (for the kernel)
    anchor = enumerate_shift_anchor(params["anchor_base"], feat_stride, H, W)   # (M, 4) f32
    anc = anchor.reshape(HW, A, 4)
    a_h = anc[:, :, 2] - anc[:, :, 0]
    a_w = anc[:, :, 3] - anc[:, :, 1]
    a_cy = anc[:, :, 0] + 0.5 * a_h
    a_cx = anc[:, :, 1] + 0.5 * a_w
    anchors_csz = np.concatenate([a_cy, a_cx, a_h, a_w], axis=1)                # (HW, 4A)

    # ---- tiling along H: cdiv grid with a zero-padded tail so any feature-map size pipelines
    if h_tile is not None:
        TH = _legalize_h_tile(int(max(1, min(h_tile, H))), H, W)
    else:
        TH = _pick_h_tile(H, W)
    n_tiles = (H + TH - 1) // TH
    Hp = n_tiles * TH
    THW = TH * W

    # ---- glue: NCHW -> NHWC bf16, pad (halo + H tail), gather overlapping row bands ----
    x_nhwc = jnp.transpose(x, (0, 2, 3, 1)).astype(jnp.bfloat16)
    x_padded = jnp.pad(x_nhwc, ((0, 0), (1, 1 + Hp - H), (1, 1), (0, 0)))       # (N, Hp+2, W+2, Cin)
    bands = jnp.stack([x_padded[:, t * TH:t * TH + TH + 2]
                       for t in range(n_tiles)], axis=1)                        # (N, T, TH+2, W+2, Cin)

    anc_pad = np.zeros((Hp * W, 4 * A), np.float32)
    anc_pad[:HW] = anchors_csz
    anchors_dev = jnp.asarray(anc_pad)

    c_out = ((11 * A + 127) // 128) * 128          # lane-dense output slab width (128 for A=9)

    kernel = functools.partial(rpn_fused_kernel, A=A, cin=Cin, th=TH, w=W,
                               img_h=float(img_size[0]), img_w=float(img_size[1]))

    # advisory cost estimate for XLA scheduling around the custom call
    flops = 2 * N * Hp * W * (9 * Cin * Cmid + Cmid * CH)
    bytes_accessed = int(bands.size * 2
                         + params["w1"].size * 2 + params["b1"].size * 4
                         + params["w_heads"].size * 2 + params["b_heads"].size * 4
                         + anchors_dev.size * 4
                         + N * Hp * W * c_out * 4)
    cost = pl.CostEstimate(flops=flops, transcendentals=N * Hp * W * 3 * A,
                           bytes_accessed=bytes_accessed)

    # VMEM limit sized from the actual per-block footprint (double-buffered varying blocks,
    # single-buffered resident weights) + headroom; clamped to v7x's 64 MiB physical VMEM.
    band_blk = (TH + 2) * (W + 2) * Cin * 2
    anc_blk = THW * 4 * A * 4
    out_blk = THW * c_out * 4
    w_bytes = (params["w1"].size + params["w_heads"].size) * 2 \
        + (params["b1"].size + params["b_heads"].size) * 4
    vmem_limit = 2 * (band_blk + anc_blk + out_blk) + 2 * w_bytes + (8 << 20)
    vmem_limit = int(min(64 << 20, max(16 << 20, vmem_limit)))

    def build_call(single_buffer_weights):
        wkw = dict(pipeline_mode=pl.Buffered(1)) if single_buffer_weights else {}
        in_specs = [
            pl.BlockSpec((None, None, TH + 2, W + 2, Cin), lambda t, n: (n, t, 0, 0, 0)),
            pl.BlockSpec((9 * Cin, Cmid), lambda t, n: (0, 0), **wkw),
            pl.BlockSpec((1, Cmid), lambda t, n: (0, 0), **wkw),
            pl.BlockSpec((Cmid, CH), lambda t, n: (0, 0), **wkw),
            pl.BlockSpec((1, CH), lambda t, n: (0, 0), **wkw),
            pl.BlockSpec((THW, 4 * A), lambda t, n: (t, 0)),   # constant over inner batch loop
        ]
        return pl.pallas_call(
            kernel,
            out_shape=jax.ShapeDtypeStruct((N, Hp * W, c_out), jnp.float32),
            grid=(n_tiles, N),                                  # tiles outermost: no anchor refetch per batch
            in_specs=in_specs,
            out_specs=pl.BlockSpec((None, THW, c_out), lambda t, n: (n, t, 0)),
            compiler_params=pltpu.CompilerParams(
                dimension_semantics=("parallel", "parallel"),
                vmem_limit_bytes=vmem_limit),
            cost_estimate=cost,
        )

    args = (bands, params["w1"], params["b1"], params["w_heads"], params["b_heads"], anchors_dev)
    try:
        out = build_call(True)(*args)
    except Exception:
        # fallback for Pallas builds without BlockSpec.pipeline_mode / Buffered(1) support
        out = build_call(False)(*args)

    # ---- split the lane-dense slab (static slices in the wrapper, padded rows dropped) ----
    out = out[:, :HW, :]
    score = out[..., 0:2 * A]
    loc_cm = out[..., 2 * A:6 * A]
    fg = out[..., 6 * A:7 * A]
    props_cm = out[..., 7 * A:11 * A]

    rpn_score = score.reshape(N, HW, A, 2).reshape(N, M, 2)
    rpn_loc = loc_cm.reshape(N, HW, 4, A).transpose(0, 1, 3, 2).reshape(N, M, 4)
    rpn_fg_score = fg.reshape(N, M)                     # proposal m = hw*A + a

    # ---- simplified ProposalCreator (plain JAX glue), proposals stay coordinate-major ----
    props4 = props_cm.reshape(N, HW, 4, A)
    hs = (props4[:, :, 2, :] - props4[:, :, 0, :]).reshape(N, M)
    ws = (props4[:, :, 3, :] - props4[:, :, 1, :]).reshape(N, M)
    keep = (hs >= min_size * scale) & (ws >= min_size * scale)
    masked = jnp.where(keep, rpn_fg_score, -jnp.inf)
    # TODO(synk): NMS (variable-length, data-dependent suppression) has no clean Pallas
    # equivalent; proposals are selected by plain top-k fg score (n_pre_nms is ignored).
    k = min(int(n_post_nms), M)
    _, top_idx = jax.lax.top_k(masked, k)
    top_hw = top_idx // A
    top_a = top_idx % A
    coords = jnp.arange(4, dtype=top_idx.dtype)
    gidx = top_hw[..., None] * (4 * A) + coords[None, None, :] * A + top_a[..., None]   # (N,k,4)
    rois = jnp.take_along_axis(props_cm.reshape(N, HW * 4 * A),
                               gidx.reshape(N, k * 4), axis=1).reshape(N * k, 4)
    roi_indices = jnp.repeat(jnp.arange(N, dtype=jnp.int32), k)

    return rpn_loc, rpn_score, rois, roi_indices, jnp.asarray(anchor)


# ----------------------------- demo -----------------------------
if __name__ == "__main__":
    key = jax.random.PRNGKey(0)
    k_param, k_x = jax.random.split(key)

    N, Cin, Cmid, H, W = 2, 32, 32, 16, 16
    feat_stride = 16
    params = make_params(k_param, Cin, Cmid)

    x = jax.random.normal(k_x, (N, Cin, H, W), jnp.float32)
    img_size = (H * feat_stride, W * feat_stride)

    outs = rpn_forward(params, x, img_size=img_size,
                       n_pre_nms=64, n_post_nms=16, scale=1.0,
                       feat_stride=feat_stride)
    jax.block_until_ready(outs)

    rpn_loc, rpn_score, rois, roi_indices, anchor = outs
    A = params["n_anchor"]
    M = H * W * A
    assert rpn_loc.shape == (N, M, 4)
    assert rpn_score.shape == (N, M, 2)
    assert rois.shape == (N * 16, 4) and roi_indices.shape == (N * 16,)
    assert anchor.shape == (M, 4)
    assert bool(jnp.all(jnp.isfinite(rois)))
    assert bool(jnp.all(jnp.isfinite(rpn_loc))) and bool(jnp.all(jnp.isfinite(rpn_score)))
    print("KERNEL_OK")
</pallas_src>

<mosaic_0001>
module attributes {stable_mosaic.version = 11 : i64} {
  func.func @rpn_fused_kernel(%arg0: i32, %arg1: i32, %arg2: memref<1x1x10x18x32xbf16, #tpu.memory_space<vmem>>, %arg3: memref<288x32xbf16, #tpu.memory_space<vmem>>, %arg4: memref<1x32xf32, #tpu.memory_space<vmem>>, %arg5: memref<32x63xbf16, #tpu.memory_space<vmem>>, %arg6: memref<1x63xf32, #tpu.memory_space<vmem>>, %arg7: memref<128x36xf32, #tpu.memory_space<vmem>>, %arg8: memref<1x128x128xf32, #tpu.memory_space<vmem>>) attributes {dimension_semantics = [#tpu.dimension_semantics<parallel>, #tpu.dimension_semantics<parallel>], iteration_bounds = array<i64: 2, 2>, scalar_prefetch = 0 : i64, scratch_operands = 0 : i64, tpu.core_type = #tpu.core_type<tc>, window_params = [{transform_indices = @transform_0, window_bounds = array<i64: 1, 1, 10, 18, 32>}, {pipeline_mode = #tpu.pipeline_mode<synchronous>, transform_indices = @transform_1, window_bounds = array<i64: 288, 32>}, {pipeline_mode = #tpu.pipeline_mode<synchronous>, transform_indices = @transform_2, window_bounds = array<i64: 1, 32>}, {pipeline_mode = #tpu.pipeline_mode<synchronous>, transform_indices = @transform_3, window_bounds = array<i64: 32, 63>}, {pipeline_mode = #tpu.pipeline_mode<synchronous>, transform_indices = @transform_4, window_bounds = array<i64: 1, 63>}, {transform_indices = @transform_5, window_bounds = array<i64: 128, 36>}, {transform_indices = @transform_6, window_bounds = array<i64: 1, 128, 128>}]} {
    %c0 = arith.constant 0 : index
    %c0_0 = arith.constant 0 : index
    %c0_1 = arith.constant 0 : index
    %c0_2 = arith.constant 0 : index
    %c0_3 = arith.constant 0 : index
    %0 = vector.load %arg2[%c0, %c0_0, %c0_1, %c0_2, %c0_3] : memref<1x1x10x18x32xbf16, #tpu.memory_space<vmem>>, vector<1x1x10x18x32xbf16>
    %1 = vector.shape_cast %0 : vector<1x1x10x18x32xbf16> to vector<10x18x32xbf16>
    %c0_4 = arith.constant 0 : index
    %c0_5 = arith.constant 0 : index
    %2 = vector.load %arg3[%c0_4, %c0_5] : memref<288x32xbf16, #tpu.memory_space<vmem>>, vector<288x32xbf16>
    %cst = arith.constant 0.000000e+00 : f32
    %3 = vector.broadcast %cst : f32 to vector<128x32xf32>
    %4 = vector.extract_strided_slice %1 {offsets = [0, 0, 0], sizes = [8, 16, 32], strides = [1, 1, 1]} : vector<10x18x32xbf16> to vector<8x16x32xbf16>
    %5 = vector.shape_cast %4 : vector<8x16x32xbf16> to vector<128x32xbf16>
    %6 = vector.extract_strided_slice %2 {offsets = [0, 0], sizes = [32, 32], strides = [1, 1]} : vector<288x32xbf16> to vector<32x32xbf16>
    %cst_6 = arith.constant dense<0.000000e+00> : vector<128x32xf32>
    %7 = tpu.matmul %5, %6, %cst_6 {dimension_numbers = #tpu.dot_dimension_numbers<[1], [0], [0], [1], [0, 0, 1, 1], [], []>} : vector<128x32xbf16>, vector<32x32xbf16>, vector<128x32xf32> -> vector<128x32xf32>
    %8 = arith.addf %3, %7 : vector<128x32xf32>
    %9 = vector.extract_strided_slice %1 {offsets = [0, 1, 0], sizes = [8, 16, 32], strides = [1, 1, 1]} : vector<10x18x32xbf16> to vector<8x16x32xbf16>
    %10 = vector.shape_cast %9 : vector<8x16x32xbf16> to vector<128x32xbf16>
    %11 = vector.extract_strided_slice %2 {offsets = [32, 0], sizes = [32, 32], strides = [1, 1]} : vector<288x32xbf16> to vector<32x32xbf16>
    %cst_7 = arith.constant dense<0.000000e+00> : vector<128x32xf32>
    %12 = tpu.matmul %10, %11, %cst_7 {dimension_numbers = #tpu.dot_dimension_numbers<[1], [0], [0], [1], [0, 0, 1, 1], [], []>} : vector<128x32xbf16>, vector<32x32xbf16>, vector<128x32xf32> -> vector<128x32xf32>
    %13 = arith.addf %8, %12 : vector<128x32xf32>
    %14 = vector.extract_strided_slice %1 {offsets = [0, 2, 0], sizes = [8, 16, 32], strides = [1, 1, 1]} : vector<10x18x32xbf16> to vector<8x16x32xbf16>
    %15 = vector.shape_cast %14 : vector<8x16x32xbf16> to vector<128x32xbf16>
    %16 = vector.extract_strided_slice %2 {offsets = [64, 0], sizes = [32, 32], strides = [1, 1]} : vector<288x32xbf16> to vector<32x32xbf16>
    %cst_8 = arith.constant dense<0.000000e+00> : vector<128x32xf32>
    %17 = tpu.matmul %15, %16, %cst_8 {dimension_numbers = #tpu.dot_dimension_numbers<[1], [0], [0], [1], [0, 0, 1, 1], [], []>} : vector<128x32xbf16>, vector<32x32xbf16>, vector<128x32xf32> -> vector<128x32xf32>
    %18 = arith.addf %13, %17 : vector<128x32xf32>
    %19 = vector.extract_strided_slice %1 {offsets = [1, 0, 0], sizes = [8, 16, 32], strides = [1, 1, 1]} : vector<10x18x32xbf16> to vector<8x16x32xbf16>
    %20 = vector.shape_cast %19 : vector<8x16x32xbf16> to vector<128x32xbf16>
    %21 = vector.extract_strided_slice %2 {offsets = [96, 0], sizes = [32, 32], strides = [1, 1]} : vector<288x32xbf16> to vector<32x32xbf16>
    %cst_9 = arith.constant dense<0.000000e+00> : vector<128x32xf32>
    %22 = tpu.matmul %20, %21, %cst_9 {dimension_numbers = #tpu.dot_dimension_numbers<[1], [0], [0], [1], [0, 0, 1, 1], [], []>} : vector<128x32xbf16>, vector<32x32xbf16>, vector<128x32xf32> -> vector<128x32xf32>
    %23 = arith.addf %18, %22 : vector<128x32xf32>
    %24 = vector.extract_strided_slice %1 {offsets = [1, 1, 0], sizes = [8, 16, 32], strides = [1, 1, 1]} : vector<10x18x32xbf16> to vector<8x16x32xbf16>
    %25 = vector.shape_cast %24 : vector<8x16x32xbf16> to vector<128x32xbf16>
    %26 = vector.extract_strided_slice %2 {offsets = [128, 0], sizes = [32, 32], strides = [1, 1]} : vector<288x32xbf16> to vector<32x32xbf16>
    %cst_10 = arith.constant dense<0.000000e+00> : vector<128x32xf32>
    %27 = tpu.matmul %25, %26, %cst_10 {dimension_numbers = #tpu.dot_dimension_numbers<[1], [0], [0], [1], [0, 0, 1, 1], [], []>} : vector<128x32xbf16>, vector<32x32xbf16>, vector<128x32xf32> -> vector<128x32xf32>
    %28 = arith.addf %23, %27 : vector<128x32xf32>
    %29 = vector.extract_strided_slice %1 {offsets = [1, 2, 0], sizes = [8, 16, 32], strides = [1, 1, 1]} : vector<10x18x32xbf16> to vector<8x16x32xbf16>
    %30 = vector.shape_cast %29 : vector<8x16x32xbf16> to vector<128x32xbf16>
    %31 = vector.extract_strided_slice %2 {offsets = [160, 0], sizes = [32, 32], strides = [1, 1]} : vector<288x32xbf16> to vector<32x32xbf16>
    %cst_11 = arith.constant dense<0.000000e+00> : vector<128x32xf32>
    %32 = tpu.matmul %30, %31, %cst_11 {dimension_numbers = #tpu.dot_dimension_numbers<[1], [0], [0], [1], [0, 0, 1, 1], [], []>} : vector<128x32xbf16>, vector<32x32xbf16>, vector<128x32xf32> -> vector<128x32xf32>
    %33 = arith.addf %28, %32 : vector<128x32xf32>
    %34 = vector.extract_strided_slice %1 {offsets = [2, 0, 0], sizes = [8, 16, 32], strides = [1, 1, 1]} : vector<10x18x32xbf16> to vector<8x16x32xbf16>
    %35 = vector.shape_cast %34 : vector<8x16x32xbf16> to vector<128x32xbf16>
    %36 = vector.extract_strided_slice %2 {offsets = [192, 0], sizes = [32, 32], strides = [1, 1]} : vector<288x32xbf16> to vector<32x32xbf16>
    %cst_12 = arith.constant dense<0.000000e+00> : vector<128x32xf32>
    %37 = tpu.matmul %35, %36, %cst_12 {dimension_numbers = #tpu.dot_dimension_numbers<[1], [0], [0], [1], [0, 0, 1, 1], [], []>} : vector<128x32xbf16>, vector<32x32xbf16>, vector<128x32xf32> -> vector<128x32xf32>
    %38 = arith.addf %33, %37 : vector<128x32xf32>
    %39 = vector.extract_strided_slice %1 {offsets = [2, 1, 0], sizes = [8, 16, 32], strides = [1, 1, 1]} : vector<10x18x32xbf16> to vector<8x16x32xbf16>
    %40 = vector.shape_cast %39 : vector<8x16x32xbf16> to vector<128x32xbf16>
    %41 = vector.extract_strided_slice %2 {offsets = [224, 0], sizes = [32, 32], strides = [1, 1]} : vector<288x32xbf16> to vector<32x32xbf16>
    %cst_13 = arith.constant dense<0.000000e+00> : vector<128x32xf32>
    %42 = tpu.matmul %40, %41, %cst_13 {dimension_numbers = #tpu.dot_dimension_numbers<[1], [0], [0], [1], [0, 0, 1, 1], [], []>} : vector<128x32xbf16>, vector<32x32xbf16>, vector<128x32xf32> -> vector<128x32xf32>
    %43 = arith.addf %38, %42 : vector<128x32xf32>
    %44 = vector.extract_strided_slice %1 {offsets = [2, 2, 0], sizes = [8, 16, 32], strides = [1, 1, 1]} : vector<10x18x32xbf16> to vector<8x16x32xbf16>
    %45 = vector.shape_cast %44 : vector<8x16x32xbf16> to vector<128x32xbf16>
    %46 = vector.extract_strided_slice %2 {offsets = [256, 0], sizes = [32, 32], strides = [1, 1]} : vector<288x32xbf16> to vector<32x32xbf16>
    %cst_14 = arith.constant dense<0.000000e+00> : vector<128x32xf32>
    %47 = tpu.matmul %45, %46, %cst_14 {dimension_numbers = #tpu.dot_dimension_numbers<[1], [0], [0], [1], [0, 0, 1, 1], [], []>} : vector<128x32xbf16>, vector<32x32xbf16>, vector<128x32xf32> -> vector<128x32xf32>
    %48 = arith.addf %43, %47 : vector<128x32xf32>
    %c0_15 = arith.constant 0 : index
    %c0_16 = arith.constant 0 : index
    %49 = vector.load %arg4[%c0_15, %c0_16] : memref<1x32xf32, #tpu.memory_space<vmem>>, vector<1x32xf32>
    %50 = vector.broadcast %49 : vector<1x32xf32> to vector<128x32xf32>
    %51 = arith.addf %48, %50 : vector<128x32xf32>
    %cst_17 = arith.constant 0.000000e+00 : f32
    %52 = vector.broadcast %cst_17 : f32 to vector<128x32xf32>
    %53 = arith.maximumf %51, %52 : vector<128x32xf32>
    %54 = arith.truncf %53 : vector<128x32xf32> to vector<128x32xbf16>
    %c0_18 = arith.constant 0 : index
    %c0_19 = arith.constant 0 : index
    %55 = vector.load %arg5[%c0_18, %c0_19] : memref<32x63xbf16, #tpu.memory_space<vmem>>, vector<32x63xbf16>
    %cst_20 = arith.constant dense<0.000000e+00> : vector<128x63xf32>
    %56 = tpu.matmul %54, %55, %cst_20 {dimension_numbers = #tpu.dot_dimension_numbers<[1], [0], [0], [1], [0, 0, 1, 1], [], []>} : vector<128x32xbf16>, vector<32x63xbf16>, vector<128x63xf32> -> vector<128x63xf32>
    %c0_21 = arith.constant 0 : index
    %c0_22 = arith.constant 0 : index
    %57 = vector.load %arg6[%c0_21, %c0_22] : memref<1x63xf32, #tpu.memory_space<vmem>>, vector<1x63xf32>
    %58 = vector.broadcast %57 : vector<1x63xf32> to vector<128x63xf32>
    %59 = arith.addf %56, %58 : vector<128x63xf32>
    %60 = vector.extract_strided_slice %59 {offsets = [0, 54], sizes = [128, 9], strides = [1, 1]} : vector<128x63xf32> to vector<128x9xf32>
    %cst_23 = arith.constant 0.000000e+00 : f32
    %61 = vector.broadcast %cst_23 : f32 to vector<128x9xf32>
    %62 = arith.subf %61, %60 : vector<128x9xf32>
    %63 = math.exp %62 : vector<128x9xf32>
    %cst_24 = arith.constant 1.000000e+00 : f32
    %64 = vector.broadcast %cst_24 : f32 to vector<128x9xf32>
    %65 = arith.addf %64, %63 : vector<128x9xf32>
    %cst_25 = arith.constant 1.000000e+00 : f32
    %66 = vector.broadcast %cst_25 : f32 to vector<128x9xf32>
    %67 = arith.divf %66, %65 : vector<128x9xf32>
    %68 = vector.extract_strided_slice %59 {offsets = [0, 18], sizes = [128, 9], strides = [1, 1]} : vector<128x63xf32> to vector<128x9xf32>
    %69 = vector.extract_strided_slice %59 {offsets = [0, 27], sizes = [128, 9], strides = [1, 1]} : vector<128x63xf32> to vector<128x9xf32>
    %70 = vector.extract_strided_slice %59 {offsets = [0, 36], sizes = [128, 9], strides = [1, 1]} : vector<128x63xf32> to vector<128x9xf32>
    %71 = vector.extract_strided_slice %59 {offsets = [0, 45], sizes = [128, 9], strides = [1, 1]} : vector<128x63xf32> to vector<128x9xf32>
    %c0_26 = arith.constant 0 : index
    %c0_27 = arith.constant 0 : index
    %72 = vector.load %arg7[%c0_26, %c0_27] : memref<128x36xf32, #tpu.memory_space<vmem>>, vector<128x36xf32>
    %73 = vector.extract_strided_slice %72 {offsets = [0, 0], sizes = [128, 9], strides = [1, 1]} : vector<128x36xf32> to vector<128x9xf32>
    %74 = vector.extract_strided_slice %72 {offsets = [0, 9], sizes = [128, 9], strides = [1, 1]} : vector<128x36xf32> to vector<128x9xf32>
    %75 = vector.extract_strided_slice %72 {offsets = [0, 18], sizes = [128, 9], strides = [1, 1]} : vector<128x36xf32> to vector<128x9xf32>
    %76 = vector.extract_strided_slice %72 {offsets = [0, 27], sizes = [128, 9], strides = [1, 1]} : vector<128x36xf32> to vector<128x9xf32>
    %77 = arith.mulf %68, %75 : vector<128x9xf32>
    %78 = arith.addf %77, %73 : vector<128x9xf32>
    %79 = arith.mulf %69, %76 : vector<128x9xf32>
    %80 = arith.addf %79, %74 : vector<128x9xf32>
    %81 = math.exp %70 : vector<128x9xf32>
    %82 = arith.mulf %81, %75 : vector<128x9xf32>
    %83 = math.exp %71 : vector<128x9xf32>
    %84 = arith.mulf %83, %76 : vector<128x9xf32>
    %85 = vector.extract_strided_slice %59 {offsets = [0, 0], sizes = [128, 54], strides = [1, 1]} : vector<128x63xf32> to vector<128x54xf32>
    %cst_28 = arith.constant 5.000000e-01 : f32
    %86 = vector.broadcast %cst_28 : f32 to vector<128x9xf32>
    %87 = arith.mulf %86, %82 : vector<128x9xf32>
    %88 = arith.subf %78, %87 : vector<128x9xf32>
    %cst_29 = arith.constant 0.000000e+00 : f32
    %cst_30 = arith.constant 2.560000e+02 : f32
    %89 = vector.broadcast %cst_29 : f32 to vector<128x9xf32>
    %90 = arith.maximumf %89, %88 : vector<128x9xf32>
    %91 = vector.broadcast %cst_30 : f32 to vector<128x9xf32>
    %92 = arith.minimumf %91, %90 : vector<128x9xf32>
    %cst_31 = arith.constant 5.000000e-01 : f32
    %93 = vector.broadcast %cst_31 : f32 to vector<128x9xf32>
    %94 = arith.mulf %93, %84 : vector<128x9xf32>
    %95 = arith.subf %80, %94 : vector<128x9xf32>
    %cst_32 = arith.constant 0.000000e+00 : f32
    %cst_33 = arith.constant 2.560000e+02 : f32
    %96 = vector.broadcast %cst_32 : f32 to vector<128x9xf32>
    %97 = arith.maximumf %96, %95 : vector<128x9xf32>
    %98 = vector.broadcast %cst_33 : f32 to vector<128x9xf32>
    %99 = arith.minimumf %98, %97 : vector<128x9xf32>
    %cst_34 = arith.constant 5.000000e-01 : f32
    %100 = vector.broadcast %cst_34 : f32 to vector<128x9xf32>
    %101 = arith.mulf %100, %82 : vector<128x9xf32>
    %102 = arith.addf %78, %101 : vector<128x9xf32>
    %cst_35 = arith.constant 0.000000e+00 : f32
    %cst_36 = arith.constant 2.560000e+02 : f32
    %103 = vector.broadcast %cst_35 : f32 to vector<128x9xf32>
    %104 = arith.maximumf %103, %102 : vector<128x9xf32>
    %105 = vector.broadcast %cst_36 : f32 to vector<128x9xf32>
    %106 = arith.minimumf %105, %104 : vector<128x9xf32>
    %cst_37 = arith.constant 5.000000e-01 : f32
    %107 = vector.broadcast %cst_37 : f32 to vector<128x9xf32>
    %108 = arith.mulf %107, %84 : vector<128x9xf32>
    %109 = arith.addf %80, %108 : vector<128x9xf32>
    %cst_38 = arith.constant 0.000000e+00 : f32
    %cst_39 = arith.constant 2.560000e+02 : f32
    %110 = vector.broadcast %cst_38 : f32 to vector<128x9xf32>
    %111 = arith.maximumf %110, %109 : vector<128x9xf32>
    %112 = vector.broadcast %cst_39 : f32 to vector<128x9xf32>
    %113 = arith.minimumf %112, %111 : vector<128x9xf32>
    %cst_40 = arith.constant 0.000000e+00 : f32
    %114 = vector.broadcast %cst_40 : f32 to vector<128x29xf32>
    %115 = tpu.concatenate %85, %67, %92, %99, %106, %113, %114 in 1 : vector<128x54xf32>, vector<128x9xf32>, vector<128x9xf32>, vector<128x9xf32>, vector<128x9xf32>, vector<128x9xf32>, vector<128x29xf32> -> vector<128x128xf32>
    %c0_41 = arith.constant 0 : index
    %c0_42 = arith.constant 0 : index
    %c0_43 = arith.constant 0 : index
    %116 = vector.load %arg8[%c0_41, %c0_42, %c0_43] : memref<1x128x128xf32, #tpu.memory_space<vmem>>, vector<1x128x128xf32>
    %117 = vector.shape_cast %116 : vector<1x128x128xf32> to vector<128x128xf32>
    %118 = vector.shape_cast %115 : vector<128x128xf32> to vector<1x128x128xf32>
    tpu.vector_store %arg8[%c0_41, %c0_42, %c0_43], %118 {strides = array<i32>} : memref<1x128x128xf32, #tpu.memory_space<vmem>>, vector<1x128x128xf32>,
    return
  }
  func.func @transform_0(%arg0: i32, %arg1: i32) -> (i32, i32, i32, i32, i32) {
    %c0_i32 = arith.constant 0 : i32
    %c0_i32_0 = arith.constant 0 : i32
    %c0_i32_1 = arith.constant 0 : i32
    %c0_i32_2 = arith.constant 0 : i32
    return %arg1, %arg0, %c0_i32, %c0_i32_0, %c0_i32_1 : i32, i32, i32, i32, i32
  }
  func.func @transform_1(%arg0: i32, %arg1: i32) -> (i32, i32) {
    %c0_i32 = arith.constant 0 : i32
    %c0_i32_0 = arith.constant 0 : i32
    %c0_i32_1 = arith.constant 0 : i32
    return %c0_i32, %c0_i32_0 : i32, i32
  }
  func.func @transform_2(%arg0: i32, %arg1: i32) -> (i32, i32) {
    %c0_i32 = arith.constant 0 : i32
    %c0_i32_0 = arith.constant 0 : i32
    %c0_i32_1 = arith.constant 0 : i32
    return %c0_i32, %c0_i32_0 : i32, i32
  }
  func.func @transform_3(%arg0: i32, %arg1: i32) -> (i32, i32) {
    %c0_i32 = arith.constant 0 : i32
    %c0_i32_0 = arith.constant 0 : i32
    %c0_i32_1 = arith.constant 0 : i32
    return %c0_i32, %c0_i32_0 : i32, i32
  }
  func.func @transform_4(%arg0: i32, %arg1: i32) -> (i32, i32) {
    %c0_i32 = arith.constant 0 : i32
    %c0_i32_0 = arith.constant 0 : i32
    %c0_i32_1 = arith.constant 0 : i32
    return %c0_i32, %c0_i32_0 : i32, i32
  }
  func.func @transform_5(%arg0: i32, %arg1: i32) -> (i32, i32) {
    %c0_i32 = arith.constant 0 : i32
    %c0_i32_0 = arith.constant 0 : i32
    return %arg0, %c0_i32 : i32, i32
  }
  func.func @transform_6(%arg0: i32, %arg1: i32) -> (i32, i32, i32) {
    %c0_i32 = arith.constant 0 : i32
    %c0_i32_0 = arith.constant 0 : i32
    return %arg1, %arg0, %c0_i32 : i32, i32, i32
  }
}

module attributes {stable_mosaic.version = 11 : i64} {
  func.func @rpn_fused_kernel(%arg0: i32, %arg1: i32, %arg2: memref<1x1x10x18x32xbf16, #tpu.memory_space<vmem>>, %arg3: memref<288x32xbf16, #tpu.memory_space<vmem>>, %arg4: memref<1x32xf32, #tpu.memory_space<vmem>>, %arg5: memref<32x63xbf16, #tpu.memory_space<vmem>>, %arg6: memref<1x63xf32, #tpu.memory_space<vmem>>, %arg7: memref<128x36xf32, #tpu.memory_space<vmem>>, %arg8: memref<1x128x128xf32, #tpu.memory_space<vmem>>) attributes {dimension_semantics = [#tpu.dimension_semantics<parallel>, #tpu.dimension_semantics<parallel>], iteration_bounds = array<i64: 2, 2>, scalar_prefetch = 0 : i64, scratch_operands = 0 : i64, tpu.core_type = #tpu.core_type<tc>, window_params = [{transform_indices = @transform_0, window_bounds = array<i64: 1, 1, 10, 18, 32>}, {pipeline_mode = #tpu.pipeline_mode<synchronous>, transform_indices = @transform_1, window_bounds = array<i64: 288, 32>}, {pipeline_mode = #tpu.pipeline_mode<synchronous>, transform_indices = @transform_2, window_bounds = array<i64: 1, 32>}, {pipeline_mode = #tpu.pipeline_mode<synchronous>, transform_indices = @transform_3, window_bounds = array<i64: 32, 63>}, {pipeline_mode = #tpu.pipeline_mode<synchronous>, transform_indices = @transform_4, window_bounds = array<i64: 1, 63>}, {transform_indices = @transform_5, window_bounds = array<i64: 128, 36>}, {transform_indices = @transform_6, window_bounds = array<i64: 1, 128, 128>}]} {
    %c0 = arith.constant 0 : index
    %c0_0 = arith.constant 0 : index
    %c0_1 = arith.constant 0 : index
    %c0_2 = arith.constant 0 : index
    %c0_3 = arith.constant 0 : index
    %0 = vector.load %arg2[%c0, %c0_0, %c0_1, %c0_2, %c0_3] : memref<1x1x10x18x32xbf16, #tpu.memory_space<vmem>>, vector<1x1x10x18x32xbf16>
    %1 = vector.shape_cast %0 : vector<1x1x10x18x32xbf16> to vector<10x18x32xbf16>
    %c0_4 = arith.constant 0 : index
    %c0_5 = arith.constant 0 : index
    %2 = vector.load %arg3[%c0_4, %c0_5] : memref<288x32xbf16, #tpu.memory_space<vmem>>, vector<288x32xbf16>
    %cst = arith.constant 0.000000e+00 : f32
    %3 = vector.broadcast %cst : f32 to vector<128x32xf32>
    %4 = vector.extract_strided_slice %1 {offsets = [0, 0, 0], sizes = [8, 16, 32], strides = [1, 1, 1]} : vector<10x18x32xbf16> to vector<8x16x32xbf16>
    %5 = vector.shape_cast %4 : vector<8x16x32xbf16> to vector<128x32xbf16>
    %6 = vector.extract_strided_slice %2 {offsets = [0, 0], sizes = [32, 32], strides = [1, 1]} : vector<288x32xbf16> to vector<32x32xbf16>
    %cst_6 = arith.constant dense<0.000000e+00> : vector<128x32xf32>
    %7 = tpu.matmul %5, %6, %cst_6 {dimension_numbers = #tpu.dot_dimension_numbers<[1], [0], [0], [1], [0, 0, 1, 1], [], []>} : vector<128x32xbf16>, vector<32x32xbf16>, vector<128x32xf32> -> vector<128x32xf32>
    %8 = arith.addf %3, %7 : vector<128x32xf32>
    %9 = vector.extract_strided_slice %1 {offsets = [0, 1, 0], sizes = [8, 16, 32], strides = [1, 1, 1]} : vector<10x18x32xbf16> to vector<8x16x32xbf16>
    %10 = vector.shape_cast %9 : vector<8x16x32xbf16> to vector<128x32xbf16>
    %11 = vector.extract_strided_slice %2 {offsets = [32, 0], sizes = [32, 32], strides = [1, 1]} : vector<288x32xbf16> to vector<32x32xbf16>
    %cst_7 = arith.constant dense<0.000000e+00> : vector<128x32xf32>
    %12 = tpu.matmul %10, %11, %cst_7 {dimension_numbers = #tpu.dot_dimension_numbers<[1], [0], [0], [1], [0, 0, 1, 1], [], []>} : vector<128x32xbf16>, vector<32x32xbf16>, vector<128x32xf32> -> vector<128x32xf32>
    %13 = arith.addf %8, %12 : vector<128x32xf32>
    %14 = vector.extract_strided_slice %1 {offsets = [0, 2, 0], sizes = [8, 16, 32], strides = [1, 1, 1]} : vector<10x18x32xbf16> to vector<8x16x32xbf16>
    %15 = vector.shape_cast %14 : vector<8x16x32xbf16> to vector<128x32xbf16>
    %16 = vector.extract_strided_slice %2 {offsets = [64, 0], sizes = [32, 32], strides = [1, 1]} : vector<288x32xbf16> to vector<32x32xbf16>
    %cst_8 = arith.constant dense<0.000000e+00> : vector<128x32xf32>
    %17 = tpu.matmul %15, %16, %cst_8 {dimension_numbers = #tpu.dot_dimension_numbers<[1], [0], [0], [1], [0, 0, 1, 1], [], []>} : vector<128x32xbf16>, vector<32x32xbf16>, vector<128x32xf32> -> vector<128x32xf32>
    %18 = arith.addf %13, %17 : vector<128x32xf32>
    %19 = vector.extract_strided_slice %1 {offsets = [1, 0, 0], sizes = [8, 16, 32], strides = [1, 1, 1]} : vector<10x18x32xbf16> to vector<8x16x32xbf16>
    %20 = vector.shape_cast %19 : vector<8x16x32xbf16> to vector<128x32xbf16>
    %21 = vector.extract_strided_slice %2 {offsets = [96, 0], sizes = [32, 32], strides = [1, 1]} : vector<288x32xbf16> to vector<32x32xbf16>
    %cst_9 = arith.constant dense<0.000000e+00> : vector<128x32xf32>
    %22 = tpu.matmul %20, %21, %cst_9 {dimension_numbers = #tpu.dot_dimension_numbers<[1], [0], [0], [1], [0, 0, 1, 1], [], []>} : vector<128x32xbf16>, vector<32x32xbf16>, vector<128x32xf32> -> vector<128x32xf32>
    %23 = arith.addf %18, %22 : vector<128x32xf32>
    %24 = vector.extract_strided_slice %1 {offsets = [1, 1, 0], sizes = [8, 16, 32], strides = [1, 1, 1]} : vector<10x18x32xbf16> to vector<8x16x32xbf16>
    %25 = vector.shape_cast %24 : vector<8x16x32xbf16> to vector<128x32xbf16>
    %26 = vector.extract_strided_slice %2 {offsets = [128, 0], sizes = [32, 32], strides = [1, 1]} : vector<288x32xbf16> to vector<32x32xbf16>
    %cst_10 = arith.constant dense<0.000000e+00> : vector<128x32xf32>
    %27 = tpu.matmul %25, %26, %cst_10 {dimension_numbers = #tpu.dot_dimension_numbers<[1], [0], [0], [1], [0, 0, 1, 1], [], []>} : vector<128x32xbf16>, vector<32x32xbf16>, vector<128x32xf32> -> vector<128x32xf32>
    %28 = arith.addf %23, %27 : vector<128x32xf32>
    %29 = vector.extract_strided_slice %1 {offsets = [1, 2, 0], sizes = [8, 16, 32], strides = [1, 1, 1]} : vector<10x18x32xbf16> to vector<8x16x32xbf16>
    %30 = vector.shape_cast %29 : vector<8x16x32xbf16> to vector<128x32xbf16>
    %31 = vector.extract_strided_slice %2 {offsets = [160, 0], sizes = [32, 32], strides = [1, 1]} : vector<288x32xbf16> to vector<32x32xbf16>
    %cst_11 = arith.constant dense<0.000000e+00> : vector<128x32xf32>
    %32 = tpu.matmul %30, %31, %cst_11 {dimension_numbers = #tpu.dot_dimension_numbers<[1], [0], [0], [1], [0, 0, 1, 1], [], []>} : vector<128x32xbf16>, vector<32x32xbf16>, vector<128x32xf32> -> vector<128x32xf32>
    %33 = arith.addf %28, %32 : vector<128x32xf32>
    %34 = vector.extract_strided_slice %1 {offsets = [2, 0, 0], sizes = [8, 16, 32], strides = [1, 1, 1]} : vector<10x18x32xbf16> to vector<8x16x32xbf16>
    %35 = vector.shape_cast %34 : vector<8x16x32xbf16> to vector<128x32xbf16>
    %36 = vector.extract_strided_slice %2 {offsets = [192, 0], sizes = [32, 32], strides = [1, 1]} : vector<288x32xbf16> to vector<32x32xbf16>
    %cst_12 = arith.constant dense<0.000000e+00> : vector<128x32xf32>
    %37 = tpu.matmul %35, %36, %cst_12 {dimension_numbers = #tpu.dot_dimension_numbers<[1], [0], [0], [1], [0, 0, 1, 1], [], []>} : vector<128x32xbf16>, vector<32x32xbf16>, vector<128x32xf32> -> vector<128x32xf32>
    %38 = arith.addf %33, %37 : vector<128x32xf32>
    %39 = vector.extract_strided_slice %1 {offsets = [2, 1, 0], sizes = [8, 16, 32], strides = [1, 1, 1]} : vector<10x18x32xbf16> to vector<8x16x32xbf16>
    %40 = vector.shape_cast %39 : vector<8x16x32xbf16> to vector<128x32xbf16>
    %41 = vector.extract_strided_slice %2 {offsets = [224, 0], sizes = [32, 32], strides = [1, 1]} : vector<288x32xbf16> to vector<32x32xbf16>
    %cst_13 = arith.constant dense<0.000000e+00> : vector<128x32xf32>
    %42 = tpu.matmul %40, %41, %cst_13 {dimension_numbers = #tpu.dot_dimension_numbers<[1], [0], [0], [1], [0, 0, 1, 1], [], []>} : vector<128x32xbf16>, vector<32x32xbf16>, vector<128x32xf32> -> vector<128x32xf32>
    %43 = arith.addf %38, %42 : vector<128x32xf32>
    %44 = vector.extract_strided_slice %1 {offsets = [2, 2, 0], sizes = [8, 16, 32], strides = [1, 1, 1]} : vector<10x18x32xbf16> to vector<8x16x32xbf16>
    %45 = vector.shape_cast %44 : vector<8x16x32xbf16> to vector<128x32xbf16>
    %46 = vector.extract_strided_slice %2 {offsets = [256, 0], sizes = [32, 32], strides = [1, 1]} : vector<288x32xbf16> to vector<32x32xbf16>
    %cst_14 = arith.constant dense<0.000000e+00> : vector<128x32xf32>
    %47 = tpu.matmul %45, %46, %cst_14 {dimension_numbers = #tpu.dot_dimension_numbers<[1], [0], [0], [1], [0, 0, 1, 1], [], []>} : vector<128x32xbf16>, vector<32x32xbf16>, vector<128x32xf32> -> vector<128x32xf32>
    %48 = arith.addf %43, %47 : vector<128x32xf32>
    %c0_15 = arith.constant 0 : index
    %c0_16 = arith.constant 0 : index
    %49 = vector.load %arg4[%c0_15, %c0_16] : memref<1x32xf32, #tpu.memory_space<vmem>>, vector<1x32xf32>
    %50 = vector.broadcast %49 : vector<1x32xf32> to vector<128x32xf32>
    %51 = arith.addf %48, %50 : vector<128x32xf32>
    %cst_17 = arith.constant 0.000000e+00 : f32
    %52 = vector.broadcast %cst_17 : f32 to vector<128x32xf32>
    %53 = arith.maximumf %51, %52 : vector<128x32xf32>
    %54 = arith.truncf %53 : vector<128x32xf32> to vector<128x32xbf16>
    %c0_18 = arith.constant 0 : index
    %c0_19 = arith.constant 0 : index
    %55 = vector.load %arg5[%c0_18, %c0_19] : memref<32x63xbf16, #tpu.memory_space<vmem>>, vector<32x63xbf16>
    %cst_20 = arith.constant dense<0.000000e+00> : vector<128x63xf32>
    %56 = tpu.matmul %54, %55, %cst_20 {dimension_numbers = #tpu.dot_dimension_numbers<[1], [0], [0], [1], [0, 0, 1, 1], [], []>} : vector<128x32xbf16>, vector<32x63xbf16>, vector<128x63xf32> -> vector<128x63xf32>
    %c0_21 = arith.constant 0 : index
    %c0_22 = arith.constant 0 : index
    %57 = vector.load %arg6[%c0_21, %c0_22] : memref<1x63xf32, #tpu.memory_space<vmem>>, vector<1x63xf32>
    %58 = vector.broadcast %57 : vector<1x63xf32> to vector<128x63xf32>
    %59 = arith.addf %56, %58 : vector<128x63xf32>
    %60 = vector.extract_strided_slice %59 {offsets = [0, 54], sizes = [128, 9], strides = [1, 1]} : vector<128x63xf32> to vector<128x9xf32>
    %cst_23 = arith.constant 0.000000e+00 : f32
    %61 = vector.broadcast %cst_23 : f32 to vector<128x9xf32>
    %62 = arith.subf %61, %60 : vector<128x9xf32>
    %63 = math.exp %62 : vector<128x9xf32>
    %cst_24 = arith.constant 1.000000e+00 : f32
    %64 = vector.broadcast %cst_24 : f32 to vector<128x9xf32>
    %65 = arith.addf %64, %63 : vector<128x9xf32>
    %cst_25 = arith.constant 1.000000e+00 : f32
    %66 = vector.broadcast %cst_25 : f32 to vector<128x9xf32>
    %67 = arith.divf %66, %65 : vector<128x9xf32>
    %68 = vector.extract_strided_slice %59 {offsets = [0, 18], sizes = [128, 9], strides = [1, 1]} : vector<128x63xf32> to vector<128x9xf32>
    %69 = vector.extract_strided_slice %59 {offsets = [0, 27], sizes = [128, 9], strides = [1, 1]} : vector<128x63xf32> to vector<128x9xf32>
    %70 = vector.extract_strided_slice %59 {offsets = [0, 36], sizes = [128, 9], strides = [1, 1]} : vector<128x63xf32> to vector<128x9xf32>
    %71 = vector.extract_strided_slice %59 {offsets = [0, 45], sizes = [128, 9], strides = [1, 1]} : vector<128x63xf32> to vector<128x9xf32>
    %c0_26 = arith.constant 0 : index
    %c0_27 = arith.constant 0 : index
    %72 = vector.load %arg7[%c0_26, %c0_27] : memref<128x36xf32, #tpu.memory_space<vmem>>, vector<128x36xf32>
    %73 = vector.extract_strided_slice %72 {offsets = [0, 0], sizes = [128, 9], strides = [1, 1]} : vector<128x36xf32> to vector<128x9xf32>
    %74 = vector.extract_strided_slice %72 {offsets = [0, 9], sizes = [128, 9], strides = [1, 1]} : vector<128x36xf32> to vector<128x9xf32>
    %75 = vector.extract_strided_slice %72 {offsets = [0, 18], sizes = [128, 9], strides = [1, 1]} : vector<128x36xf32> to vector<128x9xf32>
    %76 = vector.extract_strided_slice %72 {offsets = [0, 27], sizes = [128, 9], strides = [1, 1]} : vector<128x36xf32> to vector<128x9xf32>
    %77 = arith.mulf %68, %75 : vector<128x9xf32>
    %78 = arith.addf %77, %73 : vector<128x9xf32>
    %79 = arith.mulf %69, %76 : vector<128x9xf32>
    %80 = arith.addf %79, %74 : vector<128x9xf32>
    %81 = math.exp %70 : vector<128x9xf32>
    %82 = arith.mulf %81, %75 : vector<128x9xf32>
    %83 = math.exp %71 : vector<128x9xf32>
    %84 = arith.mulf %83, %76 : vector<128x9xf32>
    %85 = vector.extract_strided_slice %59 {offsets = [0, 0], sizes = [128, 54], strides = [1, 1]} : vector<128x63xf32> to vector<128x54xf32>
    %cst_28 = arith.constant 5.000000e-01 : f32
    %86 = vector.broadcast %cst_28 : f32 to vector<128x9xf32>
    %87 = arith.mulf %86, %82 : vector<128x9xf32>
    %88 = arith.subf %78, %87 : vector<128x9xf32>
    %cst_29 = arith.constant 0.000000e+00 : f32
    %cst_30 = arith.constant 2.560000e+02 : f32
    %89 = vector.broadcast %cst_29 : f32 to vector<128x9xf32>
    %90 = arith.maximumf %89, %88 : vector<128x9xf32>
    %91 = vector.broadcast %cst_30 : f32 to vector<128x9xf32>
    %92 = arith.minimumf %91, %90 : vector<128x9xf32>
    %cst_31 = arith.constant 5.000000e-01 : f32
    %93 = vector.broadcast %cst_31 : f32 to vector<128x9xf32>
    %94 = arith.mulf %93, %84 : vector<128x9xf32>
    %95 = arith.subf %80, %94 : vector<128x9xf32>
    %cst_32 = arith.constant 0.000000e+00 : f32
    %cst_33 = arith.constant 2.560000e+02 : f32
    %96 = vector.broadcast %cst_32 : f32 to vector<128x9xf32>
    %97 = arith.maximumf %96, %95 : vector<128x9xf32>
    %98 = vector.broadcast %cst_33 : f32 to vector<128x9xf32>
    %99 = arith.minimumf %98, %97 : vector<128x9xf32>
    %cst_34 = arith.constant 5.000000e-01 : f32
    %100 = vector.broadcast %cst_34 : f32 to vector<128x9xf32>
    %101 = arith.mulf %100, %82 : vector<128x9xf32>
    %102 = arith.addf %78, %101 : vector<128x9xf32>
    %cst_35 = arith.constant 0.000000e+00 : f32
    %cst_36 = arith.constant 2.560000e+02 : f32
    %103 = vector.broadcast %cst_35 : f32 to vector<128x9xf32>
    %104 = arith.maximumf %103, %102 : vector<128x9xf32>
    %105 = vector.broadcast %cst_36 : f32 to vector<128x9xf32>
    %106 = arith.minimumf %105, %104 : vector<128x9xf32>
    %cst_37 = arith.constant 5.000000e-01 : f32
    %107 = vector.broadcast %cst_37 : f32 to vector<128x9xf32>
    %108 = arith.mulf %107, %84 : vector<128x9xf32>
    %109 = arith.addf %80, %108 : vector<128x9xf32>
    %cst_38 = arith.constant 0.000000e+00 : f32
    %cst_39 = arith.constant 2.560000e+02 : f32
    %110 = vector.broadcast %cst_38 : f32 to vector<128x9xf32>
    %111 = arith.maximumf %110, %109 : vector<128x9xf32>
    %112 = vector.broadcast %cst_39 : f32 to vector<128x9xf32>
    %113 = arith.minimumf %112, %111 : vector<128x9xf32>
    %cst_40 = arith.constant 0.000000e+00 : f32
    %114 = vector.broadcast %cst_40 : f32 to vector<128x29xf32>
    %115 = tpu.concatenate %85, %67, %92, %99, %106, %113, %114 in 1 : vector<128x54xf32>, vector<128x9xf32>, vector<128x9xf32>, vector<128x9xf32>, vector<128x9xf32>, vector<128x9xf32>, vector<128x29xf32> -> vector<128x128xf32>
    %c0_41 = arith.constant 0 : index
    %c0_42 = arith.constant 0 : index
    %c0_43 = arith.constant 0 : index
    %116 = vector.load %arg8[%c0_41, %c0_42, %c0_43] : memref<1x128x128xf32, #tpu.memory_space<vmem>>, vector<1x128x128xf32>
    %117 = vector.shape_cast %116 : vector<1x128x128xf32> to vector<128x128xf32>
    %118 = vector.shape_cast %115 : vector<128x128xf32> to vector<1x128x128xf32>
    tpu.vector_store %arg8[%c0_41, %c0_42, %c0_43], %118 {strides = array<i32>} : memref<1x128x128xf32, #tpu.memory_space<vmem>>, vector<1x128x128xf32>,
    return
  }
  func.func @transform_0(%arg0: i32, %arg1: i32) -> (i32, i32, i32, i32, i32) {
    %c0_i32 = arith.constant 0 : i32
    %c0_i32_0 = arith.constant 0 : i32
    %c0_i32_1 = arith.constant 0 : i32
    %c0_i32_2 = arith.constant 0 : i32
    return %arg1, %arg0, %c0_i32, %c0_i32_0, %c0_i32_1 : i32, i32, i32, i32, i32
  }
  func.func @transform_1(%arg0: i32, %arg1: i32) -> (i32, i32) {
    %c0_i32 = arith.constant 0 : i32
    %c0_i32_0 = arith.constant 0 : i32
    %c0_i32_1 = arith.constant 0 : i32
    return %c0_i32, %c0_i32_0 : i32, i32
  }
  func.func @transform_2(%arg0: i32, %arg1: i32) -> (i32, i32) {
    %c0_i32 = arith.constant 0 : i32
    %c0_i32_0 = arith.constant 0 : i32
    %c0_i32_1 = arith.constant 0 : i32
    return %c0_i32, %c0_i32_0 : i32, i32
  }
  func.func @transform_3(%arg0: i32, %arg1: i32) -> (i32, i32) {
    %c0_i32 = arith.constant 0 : i32
    %c0_i32_0 = arith.constant 0 : i32
    %c0_i32_1 = arith.constant 0 : i32
    return %c0_i32, %c0_i32_0 : i32, i32
  }
  func.func @transform_4(%arg0: i32, %arg1: i32) -> (i32, i32) {
    %c0_i32 = arith.constant 0 : i32
    %c0_i32_0 = arith.constant 0 : i32
    %c0_i32_1 = arith.constant 0 : i32
    return %c0_i32, %c0_i32_0 : i32, i32
  }
  func.func @transform_5(%arg0: i32, %arg1: i32) -> (i32, i32) {
    %c0_i32 = arith.constant 0 : i32
    %c0_i32_0 = arith.constant 0 : i32
    return %arg0, %c0_i32 : i32, i32
  }
  func.func @transform_6(%arg0: i32, %arg1: i32) -> (i32, i32, i32) {
    %c0_i32 = arith.constant 0 : i32
    %c0_i32_0 = arith.constant 0 : i32
    return %arg1, %arg0, %c0_i32 : i32, i32, i32
  }
}

</mosaic_0001>

<llo_original>
// kernel: tpu_custom_call.1
$region0: #{tpu_custom_call.1}
  #allocation0 [shape = 'u32[]', space=smem, size = 0x4, offset = 0x4, fixed_abs, tag = 'smem constant byte address 0x4 - core index']
  #allocation1 [shape = 'u32[144,128]{1,0:T(1,128)}', space=vmem, size = 0x12000, scoped, tag = 'internal scratch']
  %s0 = inlined_call_operand.vmem [shape: bf16[2,2,10,18,32], index: 0, kind: input, shape index: {}]
  %s1 = inlined_call_operand.vmem [shape: bf16[288,32], index: 1, kind: input, shape index: {}]
  %s2 = inlined_call_operand.vmem [shape: f32[1,32], index: 2, kind: input, shape index: {}]
  %s3 = inlined_call_operand.vmem [shape: bf16[32,63], index: 3, kind: input, shape index: {}]
  %s4 = inlined_call_operand.vmem [shape: f32[1,63], index: 4, kind: input, shape index: {}]
  %s5 = inlined_call_operand.vmem [shape: f32[256,36], index: 5, kind: input, shape index: {}]
  %s6 = inlined_call_operand.hbm [shape: f32[2,256,128], index: 6, kind: output, shape index: {}]
  %s7 = sld [smem:[#allocation0]]
  $region57: #{tpu_custom_call.1} parent=0
    _
  %s9 = ssub.s32 1, %s7
  %s10 = scalar_select 0, %s9, %s7
  $region1: #{tpu_custom_call.1} parent=0
    #allocation2 [shape = 'u8[131072]{0}', space=vmem, size = 0x20000, scoped, tag = 'output window, operand 0']
    #allocation3 [shape = 's32[2]{0}', space=sflag, size = 0x8, scoped, tag = 'scoped memory for tpu_custom_call.1']
    %11 = vsyncpa [#allocation3], 0
    %s12 = scalar_lea.sflag [#allocation3], 1
    %13 = vsyncpa %s12, 0
    loop: start=0, step=1, limit=6
    $region2: #{tpu_custom_call.1} parent=1 // loop_pre_header
      _
    $region3: #{tpu_custom_call.1} parent=1 // loop_header
      %s15 = sphi 0, %s19
      %p16 = scmp.ge.s32.totalorder %s15, 6
      %s22 = sphi 0, %s34
      %s23 = sphi 0, %s30
      %s24 = sphi 0, %s22
      %s25 = sphi 0, %s23
      %s26 = sphi 0, %s24
      %s27 = sphi 0, %s25
      %s39 = sphi 0, %s41
      %s42 = sphi 0, %s39
      %s43 = sphi 0, %s42
      %s59 = sphi 0, %s43
      %s63 = sphi 0, %s63
      %s65 = sphi 0, %s63
      %s66 = sphi 0, %s65
      %s80 = sphi 0, %s66
      %s84 = sphi 0, %s84
      %s86 = sphi 0, %s84
      %s87 = sphi 0, %s86
      %s101 = sphi 0, %s87
      %s105 = sphi 0, %s105
      %s107 = sphi 0, %s105
      %s108 = sphi 0, %s107
      %s122 = sphi 0, %s108
      %s126 = sphi 0, %s126
      %s128 = sphi 0, %s126
      %s129 = sphi 0, %s128
      %s143 = sphi 0, %s129
      %s149 = sphi 0, %s151
      %s152 = sphi 0, %s149
      %s153 = sphi 0, %s152
      %s169 = sphi 0, %s153
      %s177 = sphi 0, %s179
      %s180 = sphi 0, %s177
      %s181 = sphi 0, %s180
      %s197 = sphi 0, %s181
    $region4: #{tpu_custom_call.1} parent=1 // loop_header_branch
      %18 = sbr.rel (%p16) target = $region8
    $region5: #{tpu_custom_call.1} parent=1 // loop_body
      %s20 = ssub.s32 %s15, 1
      %s21 = ssub.s32 %s15, 2
      %s28 = sadd.s32 1, %s23
      %p29 = scmp.ge.s32.totalorder %s28, 2
      %s30 = scalar_select %p29, 0, %s28
      %s31 = sadd.s32 1, %s22
      %s32 = scalar_select %p29, %s31, %s22
      %p33 = scmp.ge.s32.totalorder %s32, 2
      %s34 = scalar_select %p33, 0, %s32
      %s35 = ssub.s32 %s23, %s30
      %s36 = ssub.s32 %s22, %s34
      %s37 = sor.u32 %s35, %s36
      %p38 = scmp.eq.s32.totalorder %s37, 0
      %s40 = sadd.s32 %s39, 1
      %s41 = scalar_select %p38, %s39, %s40
      %p44 = pneg %p38
      %p45 = scmp.eq.s32.totalorder %s15, 3
      %p46 = por %p44, %p45
      %p47 = scmp.ne.s32.totalorder %s39, %s42
      %p48 = scmp.eq.s32.totalorder %s15, 0
      %p49 = por %p47, %p48
      %p50 = scmp.ne.s32.totalorder %s39, %s42
      %p51 = scmp.eq.s32.totalorder %s20, 3
      %p52 = por %p50, %p51
      %p53 = scmp.ne.s32.totalorder %s42, %s43
      %p54 = scmp.eq.s32.totalorder %s20, 0
      %p55 = por %p53, %p54
      %p56 = scmp.ne.s32.totalorder %s42, %s43
      %p57 = scmp.eq.s32.totalorder %s21, 3
      %p58 = por %p56, %p57
      %p60 = scmp.ne.s32.totalorder %s43, %s59
      %p61 = scmp.eq.s32.totalorder %s21, 0
      %p62 = por %p60, %p61
      %s64 = sadd.s32 %s63, 1
      %p67 = scmp.eq.s32.totalorder %s15, 3
      %p68 = scmp.ne.s32.totalorder %s63, %s65
      %p69 = scmp.eq.s32.totalorder %s15, 0
      %p70 = por %p68, %p69
      %p71 = scmp.ne.s32.totalorder %s63, %s65
      %p72 = scmp.eq.s32.totalorder %s20, 3
      %p73 = por %p71, %p72
      %p74 = scmp.ne.s32.totalorder %s65, %s66
      %p75 = scmp.eq.s32.totalorder %s20, 0
      %p76 = por %p74, %p75
      %p77 = scmp.ne.s32.totalorder %s65, %s66
      %p78 = scmp.eq.s32.totalorder %s21, 3
      %p79 = por %p77, %p78
      %p81 = scmp.ne.s32.totalorder %s66, %s80
      %p82 = scmp.eq.s32.totalorder %s21, 0
      %p83 = por %p81, %p82
      %s85 = sadd.s32 %s84, 1
      %p88 = scmp.eq.s32.totalorder %s15, 3
      %p89 = scmp.ne.s32.totalorder %s84, %s86
      %p90 = scmp.eq.s32.totalorder %s15, 0
      %p91 = por %p89, %p90
      %p92 = scmp.ne.s32.totalorder %s84, %s86
      %p93 = scmp.eq.s32.totalorder %s20, 3
      %p94 = por %p92, %p93
      %p95 = scmp.ne.s32.totalorder %s86, %s87
      %p96 = scmp.eq.s32.totalorder %s20, 0
      %p97 = por %p95, %p96
      %p98 = scmp.ne.s32.totalorder %s86, %s87
      %p99 = scmp.eq.s32.totalorder %s21, 3
      %p100 = por %p98, %p99
      %p102 = scmp.ne.s32.totalorder %s87, %s101
      %p103 = scmp.eq.s32.totalorder %s21, 0
      %p104 = por %p102, %p103
      %s106 = sadd.s32 %s105, 1
      %p109 = scmp.eq.s32.totalorder %s15, 3
      %p110 = scmp.ne.s32.totalorder %s105, %s107
      %p111 = scmp.eq.s32.totalorder %s15, 0
      %p112 = por %p110, %p111
      %p113 = scmp.ne.s32.totalorder %s105, %s107
      %p114 = scmp.eq.s32.totalorder %s20, 3
      %p115 = por %p113, %p114
      %p116 = scmp.ne.s32.totalorder %s107, %s108
      %p117 = scmp.eq.s32.totalorder %s20, 0
      %p118 = por %p116, %p117
      %p119 = scmp.ne.s32.totalorder %s107, %s108
      %p120 = scmp.eq.s32.totalorder %s21, 3
      %p121 = por %p119, %p120
      %p123 = scmp.ne.s32.totalorder %s108, %s122
      %p124 = scmp.eq.s32.totalorder %s21, 0
      %p125 = por %p123, %p124
      %s127 = sadd.s32 %s126, 1
      %p130 = scmp.eq.s32.totalorder %s15, 3
      %p131 = scmp.ne.s32.totalorder %s126, %s128
      %p132 = scmp.eq.s32.totalorder %s15, 0
      %p133 = por %p131, %p132
      %p134 = scmp.ne.s32.totalorder %s126, %s128
      %p135 = scmp.eq.s32.totalorder %s20, 3
      %p136 = por %p134, %p135
      %p137 = scmp.ne.s32.totalorder %s128, %s129
      %p138 = scmp.eq.s32.totalorder %s20, 0
      %p139 = por %p137, %p138
      %p140 = scmp.ne.s32.totalorder %s128, %s129
      %p141 = scmp.eq.s32.totalorder %s21, 3
      %p142 = por %p140, %p141
      %p144 = scmp.ne.s32.totalorder %s129, %s143
      %p145 = scmp.eq.s32.totalorder %s21, 0
      %p146 = por %p144, %p145
      %s147 = ssub.s32 %s22, %s34
      %p148 = scmp.eq.s32.totalorder %s147, 0
      %s150 = sadd.s32 %s149, 1
      %s151 = scalar_select %p148, %s149, %s150
      %p154 = pneg %p148
      %p155 = scmp.eq.s32.totalorder %s15, 3
      %p156 = por %p154, %p155
      %p157 = scmp.ne.s32.totalorder %s149, %s152
      %p158 = scmp.eq.s32.totalorder %s15, 0
      %p159 = por %p157, %p158
      %p160 = scmp.ne.s32.totalorder %s149, %s152
      %p161 = scmp.eq.s32.totalorder %s20, 3
      %p162 = por %p160, %p161
      %p163 = scmp.ne.s32.totalorder %s152, %s153
      %p164 = scmp.eq.s32.totalorder %s20, 0
      %p165 = por %p163, %p164
      %p166 = scmp.ne.s32.totalorder %s152, %s153
      %p167 = scmp.eq.s32.totalorder %s21, 3
      %p168 = por %p166, %p167
      %p170 = scmp.ne.s32.totalorder %s153, %s169
      %p171 = scmp.eq.s32.totalorder %s21, 0
      %p172 = por %p170, %p171
      %s173 = ssub.s32 %s23, %s30
      %s174 = ssub.s32 %s22, %s34
      %s175 = sor.u32 %s173, %s174
      %p176 = scmp.eq.s32.totalorder %s175, 0
      %s178 = sadd.s32 %s177, 1
      %s179 = scalar_select %p176, %s177, %s178
      %p182 = pneg %p176
      %p183 = scmp.eq.s32.totalorder %s15, 3
      %p184 = por %p182, %p183
      %p185 = scmp.ne.s32.totalorder %s177, %s180
      %p186 = scmp.eq.s32.totalorder %s15, 0
      %p187 = por %p185, %p186
      %p188 = scmp.ne.s32.totalorder %s177, %s180
      %p189 = scmp.eq.s32.totalorder %s20, 3
      %p190 = por %p188, %p189
      %p191 = scmp.ne.s32.totalorder %s180, %s181
      %p192 = scmp.eq.s32.totalorder %s20, 0
      %p193 = por %p191, %p192
      %p194 = scmp.ne.s32.totalorder %s180, %s181
      %p195 = scmp.eq.s32.totalorder %s21, 3
      %p196 = por %p194, %p195
      %p198 = scmp.ne.s32.totalorder %s181, %s197
      %p199 = scmp.eq.s32.totalorder %s21, 0
      %p200 = por %p198, %p199
      %p201 = scmp.le.s32.totalorder 1, %s15
      %p202 = scmp.lt.s32.totalorder %s15, 5
      %p203 = pnand %p201, %p202
      %p204 = pneg %p203
      // Predicated region
      $region9: #{tpu_custom_call.1} parent=5 // pred_check
        _
      $region10: #{tpu_custom_call.1} parent=5 // pred_check_branch
        %206 = sbr.rel (%p203) target = $region12
      $region11: #{tpu_custom_call.1} parent=5 // pred_region
        %s207 = ssub.s32 %s15, 1
        // Predicated region
        $region13: #{tpu_custom_call.1} parent=11 // pred_check
          %p208 = pneg %p76
        $region14: #{tpu_custom_call.1} parent=11 // pred_check_branch
          %210 = sbr.rel (%p208) target = $region16
        $region15: #{tpu_custom_call.1} parent=11 // pred_region
          _
        $region16: #{tpu_custom_call.1} parent=11 // pred_fallthru
          _
        // Predicated region
        $region17: #{tpu_custom_call.1} parent=11 // pred_check
          %p211 = pneg %p97
        $region18: #{tpu_custom_call.1} parent=11 // pred_check_branch
          %213 = sbr.rel (%p211) target = $region20
        $region19: #{tpu_custom_call.1} parent=11 // pred_region
          _
        $region20: #{tpu_custom_call.1} parent=11 // pred_fallthru
          _
        // Predicated region
        $region21: #{tpu_custom_call.1} parent=11 // pred_check
          %p214 = pneg %p118
        $region22: #{tpu_custom_call.1} parent=11 // pred_check_branch
          %216 = sbr.rel (%p214) target = $region24
        $region23: #{tpu_custom_call.1} parent=11 // pred_region
          _
        $region24: #{tpu_custom_call.1} parent=11 // pred_fallthru
          _
        // Predicated region
        $region25: #{tpu_custom_call.1} parent=11 // pred_check
          %p217 = pneg %p139
        $region26: #{tpu_custom_call.1} parent=11 // pred_check_branch
          %219 = sbr.rel (%p217) target = $region28
        $region27: #{tpu_custom_call.1} parent=11 // pred_region
          _
        $region28: #{tpu_custom_call.1} parent=11 // pred_fallthru
          _
      $region12: #{tpu_custom_call.1} parent=5 // pred_fallthru
        _
      %p220 = scmp.lt.s32.totalorder %s15, 4
      // Predicated region
      $region29: #{tpu_custom_call.1} parent=5 // pred_check
        %p221 = pneg %p220
      $region30: #{tpu_custom_call.1} parent=5 // pred_check_branch
        %223 = sbr.rel (%p221) target = $region32
      $region31: #{tpu_custom_call.1} parent=5 // pred_region
        // Predicated region
        $region33: #{tpu_custom_call.1} parent=31 // pred_check
          %p224 = pneg %p49
        $region34: #{tpu_custom_call.1} parent=31 // pred_check_branch
          %226 = sbr.rel (%p224) target = $region36
        $region35: #{tpu_custom_call.1} parent=31 // pred_region
          %p227 = scmp.lt.s32.totalorder %s23, 1
          %s228 = scalar_select %p227, %s23, 1
          %p229 = scmp.lt.s32.totalorder %s22, 1
          %s230 = scalar_select %p229, %s22, 1
          %s231 = smul.addr %s230, 30
          %s232 = smul.addr %s228, 60
          %s233 = sadd.s32 %s231, %s232
          %s234 = smul.addr %s233, 4
          %s235 = scalar_lea.vmem %s0, %s234
        $region36: #{tpu_custom_call.1} parent=31 // pred_fallthru
          _
        // Predicated region
        $region37: #{tpu_custom_call.1} parent=31 // pred_check
          %p236 = pneg %p159
        $region38: #{tpu_custom_call.1} parent=31 // pred_check_branch
          %238 = sbr.rel (%p236) target = $region40
        $region39: #{tpu_custom_call.1} parent=31 // pred_region
          %s239 = smul.u32 16, %s22
          %p240 = scmp.lt.s32.totalorder %s239, 31
          %s241 = scalar_select %p240, %s239, 31
          %s242 = smul.addr %s241, 8
          %s243 = scalar_lea.vmem %s5, %s242
          %s244 = smul.u32 16, %s22
        $region40: #{tpu_custom_call.1} parent=31 // pred_fallthru
          _
      $region32: #{tpu_custom_call.1} parent=5 // pred_fallthru
        _
      %p245 = scmp.le.s32.totalorder 1, %s15
      %p246 = scmp.lt.s32.totalorder %s15, 5
      %p247 = pnand %p245, %p246
      %p248 = pneg %p247
      // Predicated region
      $region41: #{tpu_custom_call.1} parent=5 // pred_check
        _
      $region42: #{tpu_custom_call.1} parent=5 // pred_check_branch
        %250 = sbr.rel (%p247) target = $region44
      $region43: #{tpu_custom_call.1} parent=5 // pred_region
        %s251 = ssub.s32 %s15, 1
        %p252 = scmp.lt.s32.totalorder %s25, 1
        %s253 = scalar_select %p252, %s25, 1
        %p254 = scmp.lt.s32.totalorder %s24, 1
        %s255 = scalar_select %p254, %s24, 1
        %s256 = smul.addr %s255, 30
        %s257 = smul.addr %s253, 60
        %s258 = sadd.s32 %s256, %s257
        %s259 = smul.addr %s258, 4
        %s260 = scalar_lea.vmem %s0, %s259
        %p261 = pneg %p55
        %p262 = pneg %p52
        %p263 = pneg %p76
        %p264 = pneg %p73
        %p265 = pneg %p97
        %p266 = pneg %p94
        %p267 = pneg %p118
        %p268 = pneg %p115
        %p269 = pneg %p139
        %p270 = pneg %p136
        %s271 = smul.u32 16, %s24
        %p272 = scmp.lt.s32.totalorder %s271, 31
        %s273 = scalar_select %p272, %s271, 31
        %s274 = smul.addr %s273, 8
        %s275 = scalar_lea.vmem %s5, %s274
        %p276 = pneg %p165
        %p277 = pneg %p162
        %p278 = pneg %p193
        %p279 = pneg %p190
        %s280 = sand.u32 %s180, 1
        %s281 = scalar_lea.sflag [#allocation3], %s280
        %s282 = sand.u32 %s180, 1
        %s283 = smul.addr %s282, 128
        %s284 = scalar_lea.vmem [#allocation2], %s283
        %p285 = scmp.lt.s32.totalorder %s25, 1
        %s286 = scalar_select %p285, %s25, 1
        %p287 = scmp.lt.s32.totalorder %s24, 1
        %s288 = scalar_select %p287, %s24, 1
        %s289 = smul.addr %s288, 30
        %s290 = smul.addr %s286, 60
        %s291 = sadd.s32 %s289, %s290
        %s292 = smul.addr %s291, 4
        %s293 = scalar_lea.vmem %s0, %s292
        %s294 = smul.u32 16, %s24
        %p295 = scmp.lt.s32.totalorder %s294, 31
        %s296 = scalar_select %p295, %s294, 31
        %s297 = smul.addr %s296, 8
        %s298 = scalar_lea.vmem %s5, %s297
        %s299 = smul.u32 16, %s24
        %s300 = smul.u32 16, %s24
        %v302 = vld [vmem:[%s293] sm:$0xf]
        %v303 = vld [vmem:[%s293 + $0x4] sm:$0xf]
        %v304 = vld [vmem:[%s293 + $0x8] sm:$0x1]
        %v305 = vld [vmem:[%s293 + $0xc] sm:$0xf]
        %v306 = vld [vmem:[%s293 + $0x10] sm:$0xf]
        %v307 = vld [vmem:[%s293 + $0x14] sm:$0x1]
        %v308 = vld [vmem:[%s293 + $0x18] sm:$0xf]
        %v309 = vld [vmem:[%s293 + $0x1c] sm:$0xf]
        %v310 = vld [vmem:[%s293 + $0x20] sm:$0x1]
        %v311 = vld [vmem:[%s293 + $0x24] sm:$0xf]
        %v312 = vld [vmem:[%s293 + $0x28] sm:$0xf]
        %v313 = vld [vmem:[%s293 + $0x2c] sm:$0x1]
        %v314 = vld [vmem:[%s293 + $0x30] sm:$0xf]
        %v315 = vld [vmem:[%s293 + $0x34] sm:$0xf]
        %v316 = vld [vmem:[%s293 + $0x38] sm:$0x1]
        %v317 = vld [vmem:[%s293 + $0x3c] sm:$0xf]
        %v318 = vld [vmem:[%s293 + $0x40] sm:$0xf]
        %v319 = vld [vmem:[%s293 + $0x44] sm:$0x1]
        %v320 = vld [vmem:[%s293 + $0x48] sm:$0xf]
        %v321 = vld [vmem:[%s293 + $0x4c] sm:$0xf]
        %v322 = vld [vmem:[%s293 + $0x50] sm:$0x1]
        %v323 = vld [vmem:[%s293 + $0x54] sm:$0xf]
        %v324 = vld [vmem:[%s293 + $0x58] sm:$0xf]
        %v325 = vld [vmem:[%s293 + $0x5c] sm:$0x1]
        %v326 = vld [vmem:[%s293 + $0x60] sm:$0xf]
        %v327 = vld [vmem:[%s293 + $0x64] sm:$0xf]
        %v328 = vld [vmem:[%s293 + $0x68] sm:$0x1]
        %v329 = vld [vmem:[%s293 + $0x6c] sm:$0xf]
        %v330 = vld [vmem:[%s293 + $0x70] sm:$0xf]
        %v331 = vld [vmem:[%s293 + $0x74] sm:$0x1]
        %v332 = vld [vmem:[%s1] sm:$0xf]
        %v333 = vld [vmem:[%s1 + $0x4] sm:$0xf]
        %v334 = vld [vmem:[%s1 + $0x8] sm:$0xf]
        %v335 = vld [vmem:[%s1 + $0xc] sm:$0xf]
        %v336 = vld [vmem:[%s1 + $0x10] sm:$0xf]
        %v337 = vld [vmem:[%s1 + $0x14] sm:$0xf]
        %v338 = vld [vmem:[%s1 + $0x18] sm:$0xf]
        %v339 = vld [vmem:[%s1 + $0x1c] sm:$0xf]
        %v340 = vld [vmem:[%s1 + $0x20] sm:$0xf]
        %v341 = vld [vmem:[%s1 + $0x24] sm:$0xf]
        %v342 = vld [vmem:[%s1 + $0x28] sm:$0xf]
        %v343 = vld [vmem:[%s1 + $0x2c] sm:$0xf]
        %v344 = vld [vmem:[%s1 + $0x30] sm:$0xf]
        %v345 = vld [vmem:[%s1 + $0x34] sm:$0xf]
        %v346 = vld [vmem:[%s1 + $0x38] sm:$0xf]
        %v347 = vld [vmem:[%s1 + $0x3c] sm:$0xf]
        %v348 = vld [vmem:[%s1 + $0x40] sm:$0xf]
        %v349 = vld [vmem:[%s1 + $0x44] sm:$0xf]
        %v350 = vld [vmem:[%s1 + $0x48] sm:$0xf]
        %v351 = vld [vmem:[%s1 + $0x4c] sm:$0xf]
        %v352 = vld [vmem:[%s1 + $0x50] sm:$0xf]
        %v353 = vld [vmem:[%s1 + $0x54] sm:$0xf]
        %v354 = vld [vmem:[%s1 + $0x58] sm:$0xf]
        %v355 = vld [vmem:[%s1 + $0x5c] sm:$0xf]
        %v356 = vld [vmem:[%s1 + $0x60] sm:$0xf]
        %v357 = vld [vmem:[%s1 + $0x64] sm:$0xf]
        %v358 = vld [vmem:[%s1 + $0x68] sm:$0xf]
        %v359 = vld [vmem:[%s1 + $0x6c] sm:$0xf]
        %v360 = vld [vmem:[%s1 + $0x70] sm:$0xf]
        %v361 = vld [vmem:[%s1 + $0x74] sm:$0xf]
        %v362 = vld [vmem:[%s1 + $0x78] sm:$0xf]
        %v363 = vld [vmem:[%s1 + $0x7c] sm:$0xf]
        %v364 = vld [vmem:[%s1 + $0x80] sm:$0xf]
        %v365 = vld [vmem:[%s1 + $0x84] sm:$0xf]
        %v366 = vld [vmem:[%s1 + $0x88] sm:$0xf]
        %v367 = vld [vmem:[%s1 + $0x8c] sm:$0xf]
        %vm368 = vsmask.f32 3328
        %vm369 = vsmask.f32 7440
        %vm370 = vmor %vm368, %vm369
        %v372 = vshrl.u32 %v302, 16
        %v374 = vrot.slane %v372, 4
        %v375 = vshll.u32 %v302, 16
        %v377 = vrot.slane %v375, 5
        %v378 = vor.u32 %v374, %v377
        %v379 = vrot.slane %v378, 4
        %v381 = vshll.u32 %v303, 16
        %v383 = vrot.slane %v381, 5
        %v384 = vsel %vm370, %v379, %v383
        %v385 = vshrl.u32 %v303, 16
        %v387 = vrot.slane %v385, 4
        %v388 = vor.u32 %v387, %v383
        %v389 = vrot.slane %v388, 4
        %v391 = vshll.u32 %v304, 16
        %v393 = vrot.slane %v391, 5
        %v394 = vsel %vm370, %v389, %v393
        %v396 = vshrl.u32 %v305, 16
        %v398 = vrot.slane %v396, 4
        %v399 = vshll.u32 %v305, 16
        %v401 = vrot.slane %v399, 5
        %v402 = vor.u32 %v398, %v401
        %v403 = vrot.slane %v402, 4
        %v405 = vshll.u32 %v306, 16
        %v407 = vrot.slane %v405, 5
        %v408 = vsel %vm370, %v403, %v407
        %v409 = vshrl.u32 %v306, 16
        %v411 = vrot.slane %v409, 4
        %v412 = vor.u32 %v411, %v407
        %v413 = vrot.slane %v412, 4
        %v415 = vshll.u32 %v307, 16
        %v417 = vrot.slane %v415, 5
        %v418 = vsel %vm370, %v413, %v417
        %v420 = vshrl.u32 %v308, 16
        %v422 = vrot.slane %v420, 4
        %v423 = vshll.u32 %v308, 16
        %v425 = vrot.slane %v423, 5
        %v426 = vor.u32 %v422, %v425
        %v427 = vrot.slane %v426, 4
        %v429 = vshll.u32 %v309, 16
        %v431 = vrot.slane %v429, 5
        %v432 = vsel %vm370, %v427, %v431
        %v433 = vshrl.u32 %v309, 16
        %v435 = vrot.slane %v433, 4
        %v436 = vor.u32 %v435, %v431
        %v437 = vrot.slane %v436, 4
        %v439 = vshll.u32 %v310, 16
        %v441 = vrot.slane %v439, 5
        %v442 = vsel %vm370, %v437, %v441
        %v444 = vshrl.u32 %v311, 16
        %v446 = vrot.slane %v444, 4
        %v447 = vshll.u32 %v311, 16
        %v449 = vrot.slane %v447, 5
        %v450 = vor.u32 %v446, %v449
        %v451 = vrot.slane %v450, 4
        %v453 = vshll.u32 %v312, 16
        %v455 = vrot.slane %v453, 5
        %v456 = vsel %vm370, %v451, %v455
        %v457 = vshrl.u32 %v312, 16
        %v459 = vrot.slane %v457, 4
        %v460 = vor.u32 %v459, %v455
        %v461 = vrot.slane %v460, 4
        %v463 = vshll.u32 %v313, 16
        %v465 = vrot.slane %v463, 5
        %v466 = vsel %vm370, %v461, %v465
        %v468 = vshrl.u32 %v314, 16
        %v470 = vrot.slane %v468, 4
        %v471 = vshll.u32 %v314, 16
        %v473 = vrot.slane %v471, 5
        %v474 = vor.u32 %v470, %v473
        %v475 = vrot.slane %v474, 4
        %v477 = vshll.u32 %v315, 16
        %v479 = vrot.slane %v477, 5
        %v480 = vsel %vm370, %v475, %v479
        %v481 = vshrl.u32 %v315, 16
        %v483 = vrot.slane %v481, 4
        %v484 = vor.u32 %v483, %v479
        %v485 = vrot.slane %v484, 4
        %v487 = vshll.u32 %v316, 16
        %v489 = vrot.slane %v487, 5
        %v490 = vsel %vm370, %v485, %v489
        %v492 = vshrl.u32 %v317, 16
        %v494 = vrot.slane %v492, 4
        %v495 = vshll.u32 %v317, 16
        %v497 = vrot.slane %v495, 5
        %v498 = vor.u32 %v494, %v497
        %v499 = vrot.slane %v498, 4
        %v501 = vshll.u32 %v318, 16
        %v503 = vrot.slane %v501, 5
        %v504 = vsel %vm370, %v499, %v503
        %v505 = vshrl.u32 %v318, 16
        %v507 = vrot.slane %v505, 4
        %v508 = vor.u32 %v507, %v503
        %v509 = vrot.slane %v508, 4
        %v511 = vshll.u32 %v319, 16
        %v513 = vrot.slane %v511, 5
        %v514 = vsel %vm370, %v509, %v513
        %v516 = vshrl.u32 %v320, 16
        %v518 = vrot.slane %v516, 4
        %v519 = vshll.u32 %v320, 16
        %v521 = vrot.slane %v519, 5
        %v522 = vor.u32 %v518, %v521
        %v523 = vrot.slane %v522, 4
        %v525 = vshll.u32 %v321, 16
        %v527 = vrot.slane %v525, 5
        %v528 = vsel %vm370, %v523, %v527
        %v529 = vshrl.u32 %v321, 16
        %v531 = vrot.slane %v529, 4
        %v532 = vor.u32 %v531, %v527
        %v533 = vrot.slane %v532, 4
        %v535 = vshll.u32 %v322, 16
        %v537 = vrot.slane %v535, 5
        %v538 = vsel %vm370, %v533, %v537
        %v540 = vshrl.u32 %v323, 16
        %v542 = vrot.slane %v540, 4
        %v543 = vshll.u32 %v323, 16
        %v545 = vrot.slane %v543, 5
        %v546 = vor.u32 %v542, %v545
        %v547 = vrot.slane %v546, 4
        %v549 = vshll.u32 %v324, 16
        %v551 = vrot.slane %v549, 5
        %v552 = vsel %vm370, %v547, %v551
        %v553 = vshrl.u32 %v324, 16
        %v555 = vrot.slane %v553, 4
        %v556 = vor.u32 %v555, %v551
        %v557 = vrot.slane %v556, 4
        %v559 = vshll.u32 %v325, 16
        %v561 = vrot.slane %v559, 5
        %v562 = vsel %vm370, %v557, %v561
        %v563 = vunpack.c.l.b16 %v384
        %v564 = vunpack.c.l.b16 %v394
        %v565 = vunpack.c.l.b16 %v408
        %v566 = vunpack.c.l.b16 %v418
        %v567 = vunpack.c.l.b16 %v432
        %v568 = vunpack.c.l.b16 %v442
        %v569 = vunpack.c.l.b16 %v456
        %v570 = vunpack.c.l.b16 %v466
        %v571 = vunpack.c.l.b16 %v480
        %v572 = vunpack.c.l.b16 %v490
        %v573 = vunpack.c.l.b16 %v504
        %v574 = vunpack.c.l.b16 %v514
        %v575 = vunpack.c.l.b16 %v528
        %v576 = vunpack.c.l.b16 %v538
        %v577 = vunpack.c.l.b16 %v552
        %v578 = vunpack.c.l.b16 %v562
        %v579 = vpack.c.b16 %v564, %v563
        %v580 = vpack.c.b16 %v566, %v565
        %v581 = vpack.c.b16 %v568, %v567
        %v582 = vpack.c.b16 %v570, %v569
        %v583 = vpack.c.b16 %v572, %v571
        %v584 = vpack.c.b16 %v574, %v573
        %v585 = vpack.c.b16 %v576, %v575
        %v586 = vpack.c.b16 %v578, %v577
        %v591 = vunpack.c.l.b16 %v336
        %v592 = vunpack.c.l.b16 %v337
        %v593 = vunpack.c.l.b16 %v338
        %v594 = vunpack.c.l.b16 %v339
        %v595 = vpack.c.b16 %v592, %v591
        %v596 = vpack.c.b16 %v594, %v593
        %vm599 = vcmask 261120
        %v601 = vsel %vm599, %v579, 0
        %v604 = vsel %vm599, %v580, 0
        %v607 = vsel %vm599, %v581, 0
        %v610 = vsel %vm599, %v582, 0
        %v613 = vsel %vm599, %v583, 0
        %v616 = vsel %vm599, %v584, 0
        %v619 = vsel %vm599, %v585, 0
        %v622 = vsel %vm599, %v586, 0
        %624 = vmatprep.subr.bf16.mxu0 0
        %625 = vmatpush1.bf16.msra.mxu0 %v595
        %626 = vmatprep.subr.bf16.mxu0 0
        %627 = vmatpush1.bf16.msra.mxu0 %v596
        %628 = vmatprep.subr.bf16.mxu0 0
        %629 = vmatpush1.bf16.msra.mxu0 0
        %630 = vmatprep.subr.bf16.mxu0 0
        %631 = vmatpush1.bf16.msra.mxu0 0
        %632 = vmatprep.subr.bf16.mxu0 0
        %633 = vmatpush1.bf16.msra.mxu0 0
        %634 = vmatprep.subr.bf16.mxu0 0
        %635 = vmatpush1.bf16.msra.mxu0 0
        %636 = vmatprep.subr.bf16.mxu0 0
        %637 = vmatpush1.bf16.msra.mxu0 0
        %638 = vmatprep.subr.bf16.mxu0 0
        %639 = vmatpush1.bf16.msra.mxu0 0
        %640 = vmatprep.subr.bf16.mxu0 0
        %641 = vmatpush1.bf16.msra.mxu0 0
        %642 = vmatprep.subr.bf16.mxu0 0
        %643 = vmatpush1.bf16.msra.mxu0 0
        %644 = vmatprep.subr.bf16.mxu0 0
        %645 = vmatpush1.bf16.msra.mxu0 0
        %646 = vmatprep.subr.bf16.mxu0 0
        %647 = vmatpush1.bf16.msra.mxu0 0
        %648 = vmatprep.subr.bf16.mxu0 0
        %649 = vmatpush1.bf16.msra.mxu0 0
        %650 = vmatprep.subr.bf16.mxu0 0
        %651 = vmatpush1.bf16.msra.mxu0 0
        %652 = vmatprep.subr.bf16.mxu0 0
        %653 = vmatpush1.bf16.msra.mxu0 0
        %654 = vmatprep.subr.bf16.mxu0 0
        %655 = vmatpush1.bf16.msra.mxu0 0
        %656 = vmatprep.mubr.bf16.mxu0 0
        %657 = vmatmul.mubr.bf16.gmra.mrb[0].mxu0 %v601
        %v658 = vpop.f32.mrb[0].mxu0
        %v659 = vadd.f32 0.0, %v658
        %v660 = vpop.f32.mrb[0].mxu0
        %v661 = vpop.f32.mrb[0].mxu0
        %v662 = vadd.f32 0.0, %v661
        %v663 = vpop.f32.mrb[0].mxu0
        %664 = vmatprep.mubr.bf16.mxu0 0
        %665 = vmatmul.mubr.bf16.gmra.mrb[0].mxu0 %v604
        %v666 = vpop.f32.mrb[0].mxu0
        %v667 = vadd.f32 0.0, %v666
        %v668 = vpop.f32.mrb[0].mxu0
        %v669 = vpop.f32.mrb[0].mxu0
        %v670 = vadd.f32 0.0, %v669
        %v671 = vpop.f32.mrb[0].mxu0
        %672 = vmatprep.mubr.bf16.mxu0 0
        %673 = vmatmul.mubr.bf16.gmra.mrb[0].mxu0 %v607
        %v674 = vpop.f32.mrb[0].mxu0
        %v675 = vadd.f32 0.0, %v674
        %v676 = vpop.f32.mrb[0].mxu0
        %v677 = vpop.f32.mrb[0].mxu0
        %v678 = vadd.f32 0.0, %v677
        %v679 = vpop.f32.mrb[0].mxu0
        %680 = vmatprep.mubr.bf16.mxu0 0
        %681 = vmatmul.mubr.bf16.gmra.mrb[0].mxu0 %v610
        %v682 = vpop.f32.mrb[0].mxu0
        %v683 = vadd.f32 0.0, %v682
        %v684 = vpop.f32.mrb[0].mxu0
        %v685 = vpop.f32.mrb[0].mxu0
        %v686 = vadd.f32 0.0, %v685
        %v687 = vpop.f32.mrb[0].mxu0
        %688 = vmatprep.mubr.bf16.mxu0 0
        %689 = vmatmul.mubr.bf16.gmra.mrb[0].mxu0 %v613
        %v690 = vpop.f32.mrb[0].mxu0
        %v691 = vadd.f32 0.0, %v690
        %v692 = vpop.f32.mrb[0].mxu0
        %v693 = vpop.f32.mrb[0].mxu0
        %v694 = vadd.f32 0.0, %v693
        %v695 = vpop.f32.mrb[0].mxu0
        %696 = vmatprep.mubr.bf16.mxu0 0
        %697 = vmatmul.mubr.bf16.gmra.mrb[0].mxu0 %v616
        %v698 = vpop.f32.mrb[0].mxu0
        %v699 = vadd.f32 0.0, %v698
        %v700 = vpop.f32.mrb[0].mxu0
        %v701 = vpop.f32.mrb[0].mxu0
        %v702 = vadd.f32 0.0, %v701
        %v703 = vpop.f32.mrb[0].mxu0
        %704 = vmatprep.mubr.bf16.mxu0 0
        %705 = vmatmul.mubr.bf16.gmra.mrb[0].mxu0 %v619
        %v706 = vpop.f32.mrb[0].mxu0
        %v707 = vadd.f32 0.0, %v706
        %v708 = vpop.f32.mrb[0].mxu0
        %v709 = vpop.f32.mrb[0].mxu0
        %v710 = vadd.f32 0.0, %v709
        %v711 = vpop.f32.mrb[0].mxu0
        %712 = vmatprep.mubr.bf16.mxu0 0
        %713 = vmatmul.mubr.bf16.gmra.mrb[0].mxu0 %v622
        %v714 = vpop.f32.mrb[0].mxu0
        %v715 = vadd.f32 0.0, %v714
        %v716 = vpop.f32.mrb[0].mxu0
        %v717 = vpop.f32.mrb[0].mxu0
        %v718 = vadd.f32 0.0, %v717
        %v719 = vpop.f32.mrb[0].mxu0
        %720 = vdwg.mxu0
        %v737 = vunpack.c.l.b16 %v302
        %v738 = vunpack.c.l.b16 %v303
        %v739 = vunpack.c.l.b16 %v305
        %v740 = vunpack.c.l.b16 %v306
        %v741 = vunpack.c.l.b16 %v308
        %v742 = vunpack.c.l.b16 %v309
        %v743 = vunpack.c.l.b16 %v311
        %v744 = vunpack.c.l.b16 %v312
        %v745 = vunpack.c.l.b16 %v314
        %v746 = vunpack.c.l.b16 %v315
        %v747 = vunpack.c.l.b16 %v317
        %v748 = vunpack.c.l.b16 %v318
        %v749 = vunpack.c.l.b16 %v320
        %v750 = vunpack.c.l.b16 %v321
        %v751 = vunpack.c.l.b16 %v323
        %v752 = vunpack.c.l.b16 %v324
        %v753 = vpack.c.b16 %v738, %v737
        %v754 = vpack.c.b16 %v740, %v739
        %v755 = vpack.c.b16 %v742, %v741
        %v756 = vpack.c.b16 %v744, %v743
        %v757 = vpack.c.b16 %v746, %v745
        %v758 = vpack.c.b16 %v748, %v747
        %v759 = vpack.c.b16 %v750, %v749
        %v760 = vpack.c.b16 %v752, %v751
        %v765 = vunpack.c.l.b16 %v332
        %v766 = vunpack.c.l.b16 %v333
        %v767 = vunpack.c.l.b16 %v334
        %v768 = vunpack.c.l.b16 %v335
        %v769 = vpack.c.b16 %v766, %v765
        %v770 = vpack.c.b16 %v768, %v767
        %v774 = vsel %vm599, %v753, 0
        %v777 = vsel %vm599, %v754, 0
        %v780 = vsel %vm599, %v755, 0
        %v783 = vsel %vm599, %v756, 0
        %v786 = vsel %vm599, %v757, 0
        %v789 = vsel %vm599, %v758, 0
        %v792 = vsel %vm599, %v759, 0
        %v795 = vsel %vm599, %v760, 0
        %797 = vmatprep.subr.bf16.mxu0 0
        %798 = vmatpush1.bf16.msra.mxu0 %v769
        %799 = vmatprep.subr.bf16.mxu0 0
        %800 = vmatpush1.bf16.msra.mxu0 %v770
        %801 = vmatprep.subr.bf16.mxu0 0
        %802 = vmatpush1.bf16.msra.mxu0 0
        %803 = vmatprep.subr.bf16.mxu0 0
        %804 = vmatpush1.bf16.msra.mxu0 0
        %805 = vmatprep.subr.bf16.mxu0 0
        %806 = vmatpush1.bf16.msra.mxu0 0
        %807 = vmatprep.subr.bf16.mxu0 0
        %808 = vmatpush1.bf16.msra.mxu0 0
        %809 = vmatprep.subr.bf16.mxu0 0
        %810 = vmatpush1.bf16.msra.mxu0 0
        %811 = vmatprep.subr.bf16.mxu0 0
        %812 = vmatpush1.bf16.msra.mxu0 0
        %813 = vmatprep.subr.bf16.mxu0 0
        %814 = vmatpush1.bf16.msra.mxu0 0
        %815 = vmatprep.subr.bf16.mxu0 0
        %816 = vmatpush1.bf16.msra.mxu0 0
        %817 = vmatprep.subr.bf16.mxu0 0
        %818 = vmatpush1.bf16.msra.mxu0 0
        %819 = vmatprep.subr.bf16.mxu0 0
        %820 = vmatpush1.bf16.msra.mxu0 0
        %821 = vmatprep.subr.bf16.mxu0 0
        %822 = vmatpush1.bf16.msra.mxu0 0
        %823 = vmatprep.subr.bf16.mxu0 0
        %824 = vmatpush1.bf16.msra.mxu0 0
        %825 = vmatprep.subr.bf16.mxu0 0
        %826 = vmatpush1.bf16.msra.mxu0 0
        %827 = vmatprep.subr.bf16.mxu0 0
        %828 = vmatpush1.bf16.msra.mxu0 0
        %829 = vmatprep.mubr.bf16.mxu0 0
        %830 = vmatmul.mubr.bf16.gmra.mrb[0].mxu0 %v774
        %v831 = vpop.f32.mrb[0].mxu0
        %v832 = vadd.f32 %v659, %v831
        %v833 = vpop.f32.mrb[0].mxu0
        %v834 = vpop.f32.mrb[0].mxu0
        %v835 = vadd.f32 %v662, %v834
        %v836 = vpop.f32.mrb[0].mxu0
        %837 = vmatprep.mubr.bf16.mxu0 0
        %838 = vmatmul.mubr.bf16.gmra.mrb[0].mxu0 %v777
        %v839 = vpop.f32.mrb[0].mxu0
        %v840 = vadd.f32 %v667, %v839
        %v841 = vpop.f32.mrb[0].mxu0
        %v842 = vpop.f32.mrb[0].mxu0
        %v843 = vadd.f32 %v670, %v842
        %v844 = vpop.f32.mrb[0].mxu0
        %845 = vmatprep.mubr.bf16.mxu0 0
        %846 = vmatmul.mubr.bf16.gmra.mrb[0].mxu0 %v780
        %v847 = vpop.f32.mrb[0].mxu0
        %v848 = vadd.f32 %v675, %v847
        %v849 = vpop.f32.mrb[0].mxu0
        %v850 = vpop.f32.mrb[0].mxu0
        %v851 = vadd.f32 %v678, %v850
        %v852 = vpop.f32.mrb[0].mxu0
        %853 = vmatprep.mubr.bf16.mxu0 0
        %854 = vmatmul.mubr.bf16.gmra.mrb[0].mxu0 %v783
        %v855 = vpop.f32.mrb[0].mxu0
        %v856 = vadd.f32 %v683, %v855
        %v857 = vpop.f32.mrb[0].mxu0
        %v858 = vpop.f32.mrb[0].mxu0
        %v859 = vadd.f32 %v686, %v858
        %v860 = vpop.f32.mrb[0].mxu0
        %861 = vmatprep.mubr.bf16.mxu0 0
        %862 = vmatmul.mubr.bf16.gmra.mrb[0].mxu0 %v786
        %v863 = vpop.f32.mrb[0].mxu0
        %v864 = vadd.f32 %v691, %v863
        %v865 = vpop.f32.mrb[0].mxu0
        %v866 = vpop.f32.mrb[0].mxu0
        %v867 = vadd.f32 %v694, %v866
        %v868 = vpop.f32.mrb[0].mxu0
        %869 = vmatprep.mubr.bf16.mxu0 0
        %870 = vmatmul.mubr.bf16.gmra.mrb[0].mxu0 %v789
        %v871 = vpop.f32.mrb[0].mxu0
        %v872 = vadd.f32 %v699, %v871
        %v873 = vpop.f32.mrb[0].mxu0
        %v874 = vpop.f32.mrb[0].mxu0
        %v875 = vadd.f32 %v702, %v874
        %v876 = vpop.f32.mrb[0].mxu0
        %877 = vmatprep.mubr.bf16.mxu0 0
        %878 = vmatmul.mubr.bf16.gmra.mrb[0].mxu0 %v792
        %v879 = vpop.f32.mrb[0].mxu0
        %v880 = vadd.f32 %v707, %v879
        %v881 = vpop.f32.mrb[0].mxu0
        %v882 = vpop.f32.mrb[0].mxu0
        %v883 = vadd.f32 %v710, %v882
        %v884 = vpop.f32.mrb[0].mxu0
        %885 = vmatprep.mubr.bf16.mxu0 0
        %886 = vmatmul.mubr.bf16.gmra.mrb[0].mxu0 %v795
        %v887 = vpop.f32.mrb[0].mxu0
        %v888 = vadd.f32 %v715, %v887
        %v889 = vpop.f32.mrb[0].mxu0
        %v890 = vpop.f32.mrb[0].mxu0
        %v891 = vadd.f32 %v718, %v890
        %v892 = vpop.f32.mrb[0].mxu0
        %893 = vdwg.mxu0
        %vm902 = vcmask 1042432
        %vm903 = vcmask 1046532
        %vm904 = vmor %vm902, %vm903
        %v905 = vrot.slane %v302, 5
        %v906 = vrot.slane %v905, 4
        %v907 = vrot.slane %v303, 5
        %v908 = vsel %vm904, %v906, %v907
        %v909 = vrot.slane %v907, 4
        %v910 = vrot.slane %v304, 5
        %v911 = vsel %vm904, %v909, %v910
        %v912 = vrot.slane %v305, 5
        %v913 = vrot.slane %v912, 4
        %v914 = vrot.slane %v306, 5
        %v915 = vsel %vm904, %v913, %v914
        %v916 = vrot.slane %v914, 4
        %v917 = vrot.slane %v307, 5
        %v918 = vsel %vm904, %v916, %v917
        %v919 = vrot.slane %v308, 5
        %v920 = vrot.slane %v919, 4
        %v921 = vrot.slane %v309, 5
        %v922 = vsel %vm904, %v920, %v921
        %v923 = vrot.slane %v921, 4
        %v924 = vrot.slane %v310, 5
        %v925 = vsel %vm904, %v923, %v924
        %v926 = vrot.slane %v311, 5
        %v927 = vrot.slane %v926, 4
        %v928 = vrot.slane %v312, 5
        %v929 = vsel %vm904, %v927, %v928
        %v930 = vrot.slane %v928, 4
        %v931 = vrot.slane %v313, 5
        %v932 = vsel %vm904, %v930, %v931
        %v933 = vrot.slane %v314, 5
        %v934 = vrot.slane %v933, 4
        %v935 = vrot.slane %v315, 5
        %v936 = vsel %vm904, %v934, %v935
        %v937 = vrot.slane %v935, 4
        %v938 = vrot.slane %v316, 5
        %v939 = vsel %vm904, %v937, %v938
        %v940 = vrot.slane %v317, 5
        %v941 = vrot.slane %v940, 4
        %v942 = vrot.slane %v318, 5
        %v943 = vsel %vm904, %v941, %v942
        %v944 = vrot.slane %v942, 4
        %v945 = vrot.slane %v319, 5
        %v946 = vsel %vm904, %v944, %v945
        %v947 = vrot.slane %v320, 5
        %v948 = vrot.slane %v947, 4
        %v949 = vrot.slane %v321, 5
        %v950 = vsel %vm904, %v948, %v949
        %v951 = vrot.slane %v949, 4
        %v952 = vrot.slane %v322, 5
        %v953 = vsel %vm904, %v951, %v952
        %v954 = vrot.slane %v323, 5
        %v955 = vrot.slane %v954, 4
        %v956 = vrot.slane %v324, 5
        %v957 = vsel %vm904, %v955, %v956
        %v958 = vrot.slane %v956, 4
        %v959 = vrot.slane %v325, 5
        %v960 = vsel %vm904, %v958, %v959
        %v961 = vunpack.c.l.b16 %v908
        %v962 = vunpack.c.l.b16 %v911
        %v963 = vunpack.c.l.b16 %v915
        %v964 = vunpack.c.l.b16 %v918
        %v965 = vunpack.c.l.b16 %v922
        %v966 = vunpack.c.l.b16 %v925
        %v967 = vunpack.c.l.b16 %v929
        %v968 = vunpack.c.l.b16 %v932
        %v969 = vunpack.c.l.b16 %v936
        %v970 = vunpack.c.l.b16 %v939
        %v971 = vunpack.c.l.b16 %v943
        %v972 = vunpack.c.l.b16 %v946
        %v973 = vunpack.c.l.b16 %v950
        %v974 = vunpack.c.l.b16 %v953
        %v975 = vunpack.c.l.b16 %v957
        %v976 = vunpack.c.l.b16 %v960
        %v977 = vpack.c.b16 %v962, %v961
        %v978 = vpack.c.b16 %v964, %v963
        %v979 = vpack.c.b16 %v966, %v965
        %v980 = vpack.c.b16 %v968, %v967
        %v981 = vpack.c.b16 %v970, %v969
        %v982 = vpack.c.b16 %v972, %v971
        %v983 = vpack.c.b16 %v974, %v973
        %v984 = vpack.c.b16 %v976, %v975
        %v989 = vunpack.c.l.b16 %v340
        %v990 = vunpack.c.l.b16 %v341
        %v991 = vunpack.c.l.b16 %v342
        %v992 = vunpack.c.l.b16 %v343
        %v993 = vpack.c.b16 %v990, %v989
        %v994 = vpack.c.b16 %v992, %v991
        %v998 = vsel %vm599, %v977, 0
        %v1001 = vsel %vm599, %v978, 0
        %v1004 = vsel %vm599, %v979, 0
        %v1007 = vsel %vm599, %v980, 0
        %v1010 = vsel %vm599, %v981, 0
        %v1013 = vsel %vm599, %v982, 0
        %v1016 = vsel %vm599, %v983, 0
        %v1019 = vsel %vm599, %v984, 0
        %1021 = vmatprep.subr.bf16.mxu0 0
        %1022 = vmatpush1.bf16.msra.mxu0 %v993
        %1023 = vmatprep.subr.bf16.mxu0 0
        %1024 = vmatpush1.bf16.msra.mxu0 %v994
        %1025 = vmatprep.subr.bf16.mxu0 0
        %1026 = vmatpush1.bf16.msra.mxu0 0
        %1027 = vmatprep.subr.bf16.mxu0 0
        %1028 = vmatpush1.bf16.msra.mxu0 0
        %1029 = vmatprep.subr.bf16.mxu0 0
        %1030 = vmatpush1.bf16.msra.mxu0 0
        %1031 = vmatprep.subr.bf16.mxu0 0
        %1032 = vmatpush1.bf16.msra.mxu0 0
        %1033 = vmatprep.subr.bf16.mxu0 0
        %1034 = vmatpush1.bf16.msra.mxu0 0
        %1035 = vmatprep.subr.bf16.mxu0 0
        %1036 = vmatpush1.bf16.msra.mxu0 0
        %1037 = vmatprep.subr.bf16.mxu0 0
        %1038 = vmatpush1.bf16.msra.mxu0 0
        %1039 = vmatprep.subr.bf16.mxu0 0
        %1040 = vmatpush1.bf16.msra.mxu0 0
        %1041 = vmatprep.subr.bf16.mxu0 0
        %1042 = vmatpush1.bf16.msra.mxu0 0
        %1043 = vmatprep.subr.bf16.mxu0 0
        %1044 = vmatpush1.bf16.msra.mxu0 0
        %1045 = vmatprep.subr.bf16.mxu0 0
        %1046 = vmatpush1.bf16.msra.mxu0 0
        %1047 = vmatprep.subr.bf16.mxu0 0
        %1048 = vmatpush1.bf16.msra.mxu0 0
        %1049 = vmatprep.subr.bf16.mxu0 0
        %1050 = vmatpush1.bf16.msra.mxu0 0
        %1051 = vmatprep.subr.bf16.mxu0 0
        %1052 = vmatpush1.bf16.msra.mxu0 0
        %1053 = vmatprep.mubr.bf16.mxu0 0
        %1054 = vmatmul.mubr.bf16.gmra.mrb[0].mxu0 %v998
        %v1055 = vpop.f32.mrb[0].mxu0
        %v1056 = vadd.f32 0.0, %v1055
        %v1057 = vpop.f32.mrb[0].mxu0
        %v1058 = vpop.f32.mrb[0].mxu0
        %v1059 = vadd.f32 0.0, %v1058
        %v1060 = vpop.f32.mrb[0].mxu0
        %1061 = vmatprep.mubr.bf16.mxu0 0
        %1062 = vmatmul.mubr.bf16.gmra.mrb[0].mxu0 %v1001
        %v1063 = vpop.f32.mrb[0].mxu0
        %v1064 = vadd.f32 0.0, %v1063
        %v1065 = vpop.f32.mrb[0].mxu0
        %v1066 = vpop.f32.mrb[0].mxu0
        %v1067 = vadd.f32 0.0, %v1066
        %v1068 = vpop.f32.mrb[0].mxu0
        %1069 = vmatprep.mubr.bf16.mxu0 0
        %1070 = vmatmul.mubr.bf16.gmra.mrb[0].mxu0 %v1004
        %v1071 = vpop.f32.mrb[0].mxu0
        %v1072 = vadd.f32 0.0, %v1071
        %v1073 = vpop.f32.mrb[0].mxu0
        %v1074 = vpop.f32.mrb[0].mxu0
        %v1075 = vadd.f32 0.0, %v1074
        %v1076 = vpop.f32.mrb[0].mxu0
        %1077 = vmatprep.mubr.bf16.mxu0 0
        %1078 = vmatmul.mubr.bf16.gmra.mrb[0].mxu0 %v1007
        %v1079 = vpop.f32.mrb[0].mxu0
        %v1080 = vadd.f32 0.0, %v1079
        %v1081 = vpop.f32.mrb[0].mxu0
        %v1082 = vpop.f32.mrb[0].mxu0
        %v1083 = vadd.f32 0.0, %v1082
        %v1084 = vpop.f32.mrb[0].mxu0
        %1085 = vmatprep.mubr.bf16.mxu0 0
        %1086 = vmatmul.mubr.bf16.gmra.mrb[0].mxu0 %v1010
        %v1087 = vpop.f32.mrb[0].mxu0
        %v1088 = vadd.f32 0.0, %v1087
        %v1089 = vpop.f32.mrb[0].mxu0
        %v1090 = vpop.f32.mrb[0].mxu0
        %v1091 = vadd.f32 0.0, %v1090
        %v1092 = vpop.f32.mrb[0].mxu0
        %1093 = vmatprep.mubr.bf16.mxu0 0
        %1094 = vmatmul.mubr.bf16.gmra.mrb[0].mxu0 %v1013
        %v1095 = vpop.f32.mrb[0].mxu0
        %v1096 = vadd.f32 0.0, %v1095
        %v1097 = vpop.f32.mrb[0].mxu0
        %v1098 = vpop.f32.mrb[0].mxu0
        %v1099 = vadd.f32 0.0, %v1098
        %v1100 = vpop.f32.mrb[0].mxu0
        %1101 = vmatprep.mubr.bf16.mxu0 0
        %1102 = vmatmul.mubr.bf16.gmra.mrb[0].mxu0 %v1016
        %v1103 = vpop.f32.mrb[0].mxu0
        %v1104 = vadd.f32 0.0, %v1103
        %v1105 = vpop.f32.mrb[0].mxu0
        %v1106 = vpop.f32.mrb[0].mxu0
        %v1107 = vadd.f32 0.0, %v1106
        %v1108 = vpop.f32.mrb[0].mxu0
        %1109 = vmatprep.mubr.bf16.mxu0 0
        %1110 = vmatmul.mubr.bf16.gmra.mrb[0].mxu0 %v1019
        %v1111 = vpop.f32.mrb[0].mxu0
        %v1112 = vadd.f32 0.0, %v1111
        %v1113 = vpop.f32.mrb[0].mxu0
        %v1114 = vpop.f32.mrb[0].mxu0
        %v1115 = vadd.f32 0.0, %v1114
        %v1116 = vpop.f32.mrb[0].mxu0
        %1117 = vdwg.mxu0
        %v1118 = vadd.f32 %v832, %v1056
        %v1119 = vadd.f32 %v835, %v1059
        %v1120 = vadd.f32 %v840, %v1064
        %v1121 = vadd.f32 %v843, %v1067
        %v1122 = vadd.f32 %v848, %v1072
        %v1123 = vadd.f32 %v851, %v1075
        %v1124 = vadd.f32 %v856, %v1080
        %v1125 = vadd.f32 %v859, %v1083
        %v1126 = vadd.f32 %v864, %v1088
        %v1127 = vadd.f32 %v867, %v1091
        %v1128 = vadd.f32 %v872, %v1096
        %v1129 = vadd.f32 %v875, %v1099
        %v1130 = vadd.f32 %v880, %v1104
        %v1131 = vadd.f32 %v883, %v1107
        %v1132 = vadd.f32 %v888, %v1112
        %v1133 = vadd.f32 %v891, %v1115
        %v1136 = vunpack.c.l.b16 %v326
        %v1137 = vunpack.c.l.b16 %v327
        %v1138 = vpack.c.b16 %v1137, %v1136
        %v1143 = vunpack.c.l.b16 %v344
        %v1144 = vunpack.c.l.b16 %v345
        %v1145 = vunpack.c.l.b16 %v346
        %v1146 = vunpack.c.l.b16 %v347
        %v1147 = vpack.c.b16 %v1144, %v1143
        %v1148 = vpack.c.b16 %v1146, %v1145
        %v1152 = vsel %vm599, %v1138, 0
        %1154 = vmatprep.subr.bf16.mxu0 0
        %1155 = vmatpush1.bf16.msra.mxu0 %v1147
        %1156 = vmatprep.subr.bf16.mxu0 0
        %1157 = vmatpush1.bf16.msra.mxu0 %v1148
        %1158 = vmatprep.subr.bf16.mxu0 0
        %1159 = vmatpush1.bf16.msra.mxu0 0
        %1160 = vmatprep.subr.bf16.mxu0 0
        %1161 = vmatpush1.bf16.msra.mxu0 0
        %1162 = vmatprep.subr.bf16.mxu0 0
        %1163 = vmatpush1.bf16.msra.mxu0 0
        %1164 = vmatprep.subr.bf16.mxu0 0
        %1165 = vmatpush1.bf16.msra.mxu0 0
        %1166 = vmatprep.subr.bf16.mxu0 0
        %1167 = vmatpush1.bf16.msra.mxu0 0
        %1168 = vmatprep.subr.bf16.mxu0 0
        %1169 = vmatpush1.bf16.msra.mxu0 0
        %1170 = vmatprep.subr.bf16.mxu0 0
        %1171 = vmatpush1.bf16.msra.mxu0 0
        %1172 = vmatprep.subr.bf16.mxu0 0
        %1173 = vmatpush1.bf16.msra.mxu0 0
        %1174 = vmatprep.subr.bf16.mxu0 0
        %1175 = vmatpush1.bf16.msra.mxu0 0
        %1176 = vmatprep.subr.bf16.mxu0 0
        %1177 = vmatpush1.bf16.msra.mxu0 0
        %1178 = vmatprep.subr.bf16.mxu0 0
        %1179 = vmatpush1.bf16.msra.mxu0 0
        %1180 = vmatprep.subr.bf16.mxu0 0
        %1181 = vmatpush1.bf16.msra.mxu0 0
        %1182 = vmatprep.subr.bf16.mxu0 0
        %1183 = vmatpush1.bf16.msra.mxu0 0
        %1184 = vmatprep.subr.bf16.mxu0 0
        %1185 = vmatpush1.bf16.msra.mxu0 0
        %1186 = vmatprep.mubr.bf16.mxu0 0
        %1187 = vmatmul.mubr.bf16.gmra.mrb[0].mxu0 %v777
        %v1188 = vpop.f32.mrb[0].mxu0
        %v1189 = vadd.f32 0.0, %v1188
        %v1190 = vpop.f32.mrb[0].mxu0
        %v1191 = vpop.f32.mrb[0].mxu0
        %v1192 = vadd.f32 0.0, %v1191
        %v1193 = vpop.f32.mrb[0].mxu0
        %1194 = vmatprep.mubr.bf16.mxu0 0
        %1195 = vmatmul.mubr.bf16.gmra.mrb[0].mxu0 %v780
        %v1196 = vpop.f32.mrb[0].mxu0
        %v1197 = vadd.f32 0.0, %v1196
        %v1198 = vpop.f32.mrb[0].mxu0
        %v1199 = vpop.f32.mrb[0].mxu0
        %v1200 = vadd.f32 0.0, %v1199
        %v1201 = vpop.f32.mrb[0].mxu0
        %1202 = vmatprep.mubr.bf16.mxu0 0
        %1203 = vmatmul.mubr.bf16.gmra.mrb[0].mxu0 %v783
        %v1204 = vpop.f32.mrb[0].mxu0
        %v1205 = vadd.f32 0.0, %v1204
        %v1206 = vpop.f32.mrb[0].mxu0
        %v1207 = vpop.f32.mrb[0].mxu0
        %v1208 = vadd.f32 0.0, %v1207
        %v1209 = vpop.f32.mrb[0].mxu0
        %1210 = vmatprep.mubr.bf16.mxu0 0
        %1211 = vmatmul.mubr.bf16.gmra.mrb[0].mxu0 %v786
        %v1212 = vpop.f32.mrb[0].mxu0
        %v1213 = vadd.f32 0.0, %v1212
        %v1214 = vpop.f32.mrb[0].mxu0
        %v1215 = vpop.f32.mrb[0].mxu0
        %v1216 = vadd.f32 0.0, %v1215
        %v1217 = vpop.f32.mrb[0].mxu0
        %1218 = vmatprep.mubr.bf16.mxu0 0
        %1219 = vmatmul.mubr.bf16.gmra.mrb[0].mxu0 %v789
        %v1220 = vpop.f32.mrb[0].mxu0
        %v1221 = vadd.f32 0.0, %v1220
        %v1222 = vpop.f32.mrb[0].mxu0
        %v1223 = vpop.f32.mrb[0].mxu0
        %v1224 = vadd.f32 0.0, %v1223
        %v1225 = vpop.f32.mrb[0].mxu0
        %1226 = vmatprep.mubr.bf16.mxu0 0
        %1227 = vmatmul.mubr.bf16.gmra.mrb[0].mxu0 %v792
        %v1228 = vpop.f32.mrb[0].mxu0
        %v1229 = vadd.f32 0.0, %v1228
        %v1230 = vpop.f32.mrb[0].mxu0
        %v1231 = vpop.f32.mrb[0].mxu0
        %v1232 = vadd.f32 0.0, %v1231
        %v1233 = vpop.f32.mrb[0].mxu0
        %1234 = vmatprep.mubr.bf16.mxu0 0
        %1235 = vmatmul.mubr.bf16.gmra.mrb[0].mxu0 %v795
        %v1236 = vpop.f32.mrb[0].mxu0
        %v1237 = vadd.f32 0.0, %v1236
        %v1238 = vpop.f32.mrb[0].mxu0
        %v1239 = vpop.f32.mrb[0].mxu0
        %v1240 = vadd.f32 0.0, %v1239
        %v1241 = vpop.f32.mrb[0].mxu0
        %1242 = vmatprep.mubr.bf16.mxu0 0
        %1243 = vmatmul.mubr.bf16.gmra.mrb[0].mxu0 %v1152
        %v1244 = vpop.f32.mrb[0].mxu0
        %v1245 = vadd.f32 0.0, %v1244
        %v1246 = vpop.f32.mrb[0].mxu0
        %v1247 = vpop.f32.mrb[0].mxu0
        %v1248 = vadd.f32 0.0, %v1247
        %v1249 = vpop.f32.mrb[0].mxu0
        %1250 = vdwg.mxu0
        %v1251 = vadd.f32 %v1118, %v1189
        %v1252 = vadd.f32 %v1119, %v1192
        %v1253 = vadd.f32 %v1120, %v1197
        %v1254 = vadd.f32 %v1121, %v1200
        %v1255 = vadd.f32 %v1122, %v1205
        %v1256 = vadd.f32 %v1123, %v1208
        %v1257 = vadd.f32 %v1124, %v1213
        %v1258 = vadd.f32 %v1125, %v1216
        %v1259 = vadd.f32 %v1126, %v1221
        %v1260 = vadd.f32 %v1127, %v1224
        %v1261 = vadd.f32 %v1128, %v1229
        %v1262 = vadd.f32 %v1129, %v1232
        %v1263 = vadd.f32 %v1130, %v1237
        %v1264 = vadd.f32 %v1131, %v1240
        %v1265 = vadd.f32 %v1132, %v1245
        %v1266 = vadd.f32 %v1133, %v1248
        %v1268 = vshrl.u32 %v326, 16
        %v1270 = vrot.slane %v1268, 4
        %v1271 = vshll.u32 %v326, 16
        %v1273 = vrot.slane %v1271, 5
        %v1274 = vor.u32 %v1270, %v1273
        %v1275 = vrot.slane %v1274, 4
        %v1277 = vshll.u32 %v327, 16
        %v1279 = vrot.slane %v1277, 5
        %v1280 = vsel %vm370, %v1275, %v1279
        %v1281 = vshrl.u32 %v327, 16
        %v1283 = vrot.slane %v1281, 4
        %v1284 = vor.u32 %v1283, %v1279
        %v1285 = vrot.slane %v1284, 4
        %v1287 = vshll.u32 %v328, 16
        %v1289 = vrot.slane %v1287, 5
        %v1290 = vsel %vm370, %v1285, %v1289
        %v1291 = vunpack.c.l.b16 %v1280
        %v1292 = vunpack.c.l.b16 %v1290
        %v1293 = vpack.c.b16 %v1292, %v1291
        %v1298 = vunpack.c.l.b16 %v348
        %v1299 = vunpack.c.l.b16 %v349
        %v1300 = vunpack.c.l.b16 %v350
        %v1301 = vunpack.c.l.b16 %v351
        %v1302 = vpack.c.b16 %v1299, %v1298
        %v1303 = vpack.c.b16 %v1301, %v1300
        %v1307 = vsel %vm599, %v1293, 0
        %1309 = vmatprep.subr.bf16.mxu0 0
        %1310 = vmatpush1.bf16.msra.mxu0 %v1302
        %1311 = vmatprep.subr.bf16.mxu0 0
        %1312 = vmatpush1.bf16.msra.mxu0 %v1303
        %1313 = vmatprep.subr.bf16.mxu0 0
        %1314 = vmatpush1.bf16.msra.mxu0 0
        %1315 = vmatprep.subr.bf16.mxu0 0
        %1316 = vmatpush1.bf16.msra.mxu0 0
        %1317 = vmatprep.subr.bf16.mxu0 0
        %1318 = vmatpush1.bf16.msra.mxu0 0
        %1319 = vmatprep.subr.bf16.mxu0 0
        %1320 = vmatpush1.bf16.msra.mxu0 0
        %1321 = vmatprep.subr.bf16.mxu0 0
        %1322 = vmatpush1.bf16.msra.mxu0 0
        %1323 = vmatprep.subr.bf16.mxu0 0
        %1324 = vmatpush1.bf16.msra.mxu0 0
        %1325 = vmatprep.subr.bf16.mxu0 0
        %1326 = vmatpush1.bf16.msra.mxu0 0
        %1327 = vmatprep.subr.bf16.mxu0 0
        %1328 = vmatpush1.bf16.msra.mxu0 0
        %1329 = vmatprep.subr.bf16.mxu0 0
        %1330 = vmatpush1.bf16.msra.mxu0 0
        %1331 = vmatprep.subr.bf16.mxu0 0
        %1332 = vmatpush1.bf16.msra.mxu0 0
        %1333 = vmatprep.subr.bf16.mxu0 0
        %1334 = vmatpush1.bf16.msra.mxu0 0
        %1335 = vmatprep.subr.bf16.mxu0 0
        %1336 = vmatpush1.bf16.msra.mxu0 0
        %1337 = vmatprep.subr.bf16.mxu0 0
        %1338 = vmatpush1.bf16.msra.mxu0 0
        %1339 = vmatprep.subr.bf16.mxu0 0
        %1340 = vmatpush1.bf16.msra.mxu0 0
        %1341 = vmatprep.mubr.bf16.mxu0 0
        %1342 = vmatmul.mubr.bf16.gmra.mrb[0].mxu0 %v604
        %v1343 = vpop.f32.mrb[0].mxu0
        %v1344 = vadd.f32 0.0, %v1343
        %v1345 = vpop.f32.mrb[0].mxu0
        %v1346 = vpop.f32.mrb[0].mxu0
        %v1347 = vadd.f32 0.0, %v1346
        %v1348 = vpop.f32.mrb[0].mxu0
        %1349 = vmatprep.mubr.bf16.mxu0 0
        %1350 = vmatmul.mubr.bf16.gmra.mrb[0].mxu0 %v607
        %v1351 = vpop.f32.mrb[0].mxu0
        %v1352 = vadd.f32 0.0, %v1351
        %v1353 = vpop.f32.mrb[0].mxu0
        %v1354 = vpop.f32.mrb[0].mxu0
        %v1355 = vadd.f32 0.0, %v1354
        %v1356 = vpop.f32.mrb[0].mxu0
        %1357 = vmatprep.mubr.bf16.mxu0 0
        %1358 = vmatmul.mubr.bf16.gmra.mrb[0].mxu0 %v610
        %v1359 = vpop.f32.mrb[0].mxu0
        %v1360 = vadd.f32 0.0, %v1359
        %v1361 = vpop.f32.mrb[0].mxu0
        %v1362 = vpop.f32.mrb[0].mxu0
        %v1363 = vadd.f32 0.0, %v1362
        %v1364 = vpop.f32.mrb[0].mxu0
        %1365 = vmatprep.mubr.bf16.mxu0 0
        %1366 = vmatmul.mubr.bf16.gmra.mrb[0].mxu0 %v613
        %v1367 = vpop.f32.mrb[0].mxu0
        %v1368 = vadd.f32 0.0, %v1367
        %v1369 = vpop.f32.mrb[0].mxu0
        %v1370 = vpop.f32.mrb[0].mxu0
        %v1371 = vadd.f32 0.0, %v1370
        %v1372 = vpop.f32.mrb[0].mxu0
        %1373 = vmatprep.mubr.bf16.mxu0 0
        %1374 = vmatmul.mubr.bf16.gmra.mrb[0].mxu0 %v616
        %v1375 = vpop.f32.mrb[0].mxu0
        %v1376 = vadd.f32 0.0, %v1375
        %v1377 = vpop.f32.mrb[0].mxu0
        %v1378 = vpop.f32.mrb[0].mxu0
        %v1379 = vadd.f32 0.0, %v1378
        %v1380 = vpop.f32.mrb[0].mxu0
        %1381 = vmatprep.mubr.bf16.mxu0 0
        %1382 = vmatmul.mubr.bf16.gmra.mrb[0].mxu0 %v619
        %v1383 = vpop.f32.mrb[0].mxu0
        %v1384 = vadd.f32 0.0, %v1383
        %v1385 = vpop.f32.mrb[0].mxu0
        %v1386 = vpop.f32.mrb[0].mxu0
        %v1387 = vadd.f32 0.0, %v1386
        %v1388 = vpop.f32.mrb[0].mxu0
        %1389 = vmatprep.mubr.bf16.mxu0 0
        %1390 = vmatmul.mubr.bf16.gmra.mrb[0].mxu0 %v622
        %v1391 = vpop.f32.mrb[0].mxu0
        %v1392 = vadd.f32 0.0, %v1391
        %v1393 = vpop.f32.mrb[0].mxu0
        %v1394 = vpop.f32.mrb[0].mxu0
        %v1395 = vadd.f32 0.0, %v1394
        %v1396 = vpop.f32.mrb[0].mxu0
        %1397 = vmatprep.mubr.bf16.mxu0 0
        %1398 = vmatmul.mubr.bf16.gmra.mrb[0].mxu0 %v1307
        %v1399 = vpop.f32.mrb[0].mxu0
        %v1400 = vadd.f32 0.0, %v1399
        %v1401 = vpop.f32.mrb[0].mxu0
        %v1402 = vpop.f32.mrb[0].mxu0
        %v1403 = vadd.f32 0.0, %v1402
        %v1404 = vpop.f32.mrb[0].mxu0
        %1405 = vdwg.mxu0
        %v1406 = vadd.f32 %v1251, %v1344
        %v1407 = vadd.f32 %v1252, %v1347
        %v1408 = vadd.f32 %v1253, %v1352
        %v1409 = vadd.f32 %v1254, %v1355
        %v1410 = vadd.f32 %v1255, %v1360
        %v1411 = vadd.f32 %v1256, %v1363
        %v1412 = vadd.f32 %v1257, %v1368
        %v1413 = vadd.f32 %v1258, %v1371
        %v1414 = vadd.f32 %v1259, %v1376
        %v1415 = vadd.f32 %v1260, %v1379
        %v1416 = vadd.f32 %v1261, %v1384
        %v1417 = vadd.f32 %v1262, %v1387
        %v1418 = vadd.f32 %v1263, %v1392
        %v1419 = vadd.f32 %v1264, %v1395
        %v1420 = vadd.f32 %v1265, %v1400
        %v1421 = vadd.f32 %v1266, %v1403
        %v1423 = vrot.slane %v326, 5
        %v1424 = vrot.slane %v1423, 4
        %v1425 = vrot.slane %v327, 5
        %v1426 = vsel %vm904, %v1424, %v1425
        %v1427 = vrot.slane %v1425, 4
        %v1428 = vrot.slane %v328, 5
        %v1429 = vsel %vm904, %v1427, %v1428
        %v1430 = vunpack.c.l.b16 %v1426
        %v1431 = vunpack.c.l.b16 %v1429
        %v1432 = vpack.c.b16 %v1431, %v1430
        %v1437 = vunpack.c.l.b16 %v352
        %v1438 = vunpack.c.l.b16 %v353
        %v1439 = vunpack.c.l.b16 %v354
        %v1440 = vunpack.c.l.b16 %v355
        %v1441 = vpack.c.b16 %v1438, %v1437
        %v1442 = vpack.c.b16 %v1440, %v1439
        %v1446 = vsel %vm599, %v1432, 0
        %1448 = vmatprep.subr.bf16.mxu0 0
        %1449 = vmatpush1.bf16.msra.mxu0 %v1441
        %1450 = vmatprep.subr.bf16.mxu0 0
        %1451 = vmatpush1.bf16.msra.mxu0 %v1442
        %1452 = vmatprep.subr.bf16.mxu0 0
        %1453 = vmatpush1.bf16.msra.mxu0 0
        %1454 = vmatprep.subr.bf16.mxu0 0
        %1455 = vmatpush1.bf16.msra.mxu0 0
        %1456 = vmatprep.subr.bf16.mxu0 0
        %1457 = vmatpush1.bf16.msra.mxu0 0
        %1458 = vmatprep.subr.bf16.mxu0 0
        %1459 = vmatpush1.bf16.msra.mxu0 0
        %1460 = vmatprep.subr.bf16.mxu0 0
        %1461 = vmatpush1.bf16.msra.mxu0 0
        %1462 = vmatprep.subr.bf16.mxu0 0
        %1463 = vmatpush1.bf16.msra.mxu0 0
        %1464 = vmatprep.subr.bf16.mxu0 0
        %1465 = vmatpush1.bf16.msra.mxu0 0
        %1466 = vmatprep.subr.bf16.mxu0 0
        %1467 = vmatpush1.bf16.msra.mxu0 0
        %1468 = vmatprep.subr.bf16.mxu0 0
        %1469 = vmatpush1.bf16.msra.mxu0 0
        %1470 = vmatprep.subr.bf16.mxu0 0
        %1471 = vmatpush1.bf16.msra.mxu0 0
        %1472 = vmatprep.subr.bf16.mxu0 0
        %1473 = vmatpush1.bf16.msra.mxu0 0
        %1474 = vmatprep.subr.bf16.mxu0 0
        %1475 = vmatpush1.bf16.msra.mxu0 0
        %1476 = vmatprep.subr.bf16.mxu0 0
        %1477 = vmatpush1.bf16.msra.mxu0 0
        %1478 = vmatprep.subr.bf16.mxu0 0
        %1479 = vmatpush1.bf16.msra.mxu0 0
        %1480 = vmatprep.mubr.bf16.mxu0 0
        %1481 = vmatmul.mubr.bf16.gmra.mrb[0].mxu0 %v1001
        %v1482 = vpop.f32.mrb[0].mxu0
        %v1483 = vadd.f32 0.0, %v1482
        %v1484 = vpop.f32.mrb[0].mxu0
        %v1485 = vpop.f32.mrb[0].mxu0
        %v1486 = vadd.f32 0.0, %v1485
        %v1487 = vpop.f32.mrb[0].mxu0
        %1488 = vmatprep.mubr.bf16.mxu0 0
        %1489 = vmatmul.mubr.bf16.gmra.mrb[0].mxu0 %v1004
        %v1490 = vpop.f32.mrb[0].mxu0
        %v1491 = vadd.f32 0.0, %v1490
        %v1492 = vpop.f32.mrb[0].mxu0
        %v1493 = vpop.f32.mrb[0].mxu0
        %v1494 = vadd.f32 0.0, %v1493
        %v1495 = vpop.f32.mrb[0].mxu0
        %1496 = vmatprep.mubr.bf16.mxu0 0
        %1497 = vmatmul.mubr.bf16.gmra.mrb[0].mxu0 %v1007
        %v1498 = vpop.f32.mrb[0].mxu0
        %v1499 = vadd.f32 0.0, %v1498
        %v1500 = vpop.f32.mrb[0].mxu0
        %v1501 = vpop.f32.mrb[0].mxu0
        %v1502 = vadd.f32 0.0, %v1501
        %v1503 = vpop.f32.mrb[0].mxu0
        %1504 = vmatprep.mubr.bf16.mxu0 0
        %1505 = vmatmul.mubr.bf16.gmra.mrb[0].mxu0 %v1010
        %v1506 = vpop.f32.mrb[0].mxu0
        %v1507 = vadd.f32 0.0, %v1506
        %v1508 = vpop.f32.mrb[0].mxu0
        %v1509 = vpop.f32.mrb[0].mxu0
        %v1510 = vadd.f32 0.0, %v1509
        %v1511 = vpop.f32.mrb[0].mxu0
        %1512 = vmatprep.mubr.bf16.mxu0 0
        %1513 = vmatmul.mubr.bf16.gmra.mrb[0].mxu0 %v1013
        %v1514 = vpop.f32.mrb[0].mxu0
        %v1515 = vadd.f32 0.0, %v1514
        %v1516 = vpop.f32.mrb[0].mxu0
        %v1517 = vpop.f32.mrb[0].mxu0
        %v1518 = vadd.f32 0.0, %v1517
        %v1519 = vpop.f32.mrb[0].mxu0
        %1520 = vmatprep.mubr.bf16.mxu0 0
        %1521 = vmatmul.mubr.bf16.gmra.mrb[0].mxu0 %v1016
        %v1522 = vpop.f32.mrb[0].mxu0
        %v1523 = vadd.f32 0.0, %v1522
        %v1524 = vpop.f32.mrb[0].mxu0
        %v1525 = vpop.f32.mrb[0].mxu0
        %v1526 = vadd.f32 0.0, %v1525
        %v1527 = vpop.f32.mrb[0].mxu0
        %1528 = vmatprep.mubr.bf16.mxu0 0
        %1529 = vmatmul.mubr.bf16.gmra.mrb[0].mxu0 %v1019
        %v1530 = vpop.f32.mrb[0].mxu0
        %v1531 = vadd.f32 0.0, %v1530
        %v1532 = vpop.f32.mrb[0].mxu0
        %v1533 = vpop.f32.mrb[0].mxu0
        %v1534 = vadd.f32 0.0, %v1533
        %v1535 = vpop.f32.mrb[0].mxu0
        %1536 = vmatprep.mubr.bf16.mxu0 0
        %1537 = vmatmul.mubr.bf16.gmra.mrb[0].mxu0 %v1446
        %v1538 = vpop.f32.mrb[0].mxu0
        %v1539 = vadd.f32 0.0, %v1538
        %v1540 = vpop.f32.mrb[0].mxu0
        %v1541 = vpop.f32.mrb[0].mxu0
        %v1542 = vadd.f32 0.0, %v1541
        %v1543 = vpop.f32.mrb[0].mxu0
        %1544 = vdwg.mxu0
        %v1545 = vadd.f32 %v1406, %v1483
        %v1546 = vadd.f32 %v1407, %v1486
        %v1547 = vadd.f32 %v1408, %v1491
        %v1548 = vadd.f32 %v1409, %v1494
        %v1549 = vadd.f32 %v1410, %v1499
        %v1550 = vadd.f32 %v1411, %v1502
        %v1551 = vadd.f32 %v1412, %v1507
        %v1552 = vadd.f32 %v1413, %v1510
        %v1553 = vadd.f32 %v1414, %v1515
        %v1554 = vadd.f32 %v1415, %v1518
        %v1555 = vadd.f32 %v1416, %v1523
        %v1556 = vadd.f32 %v1417, %v1526
        %v1557 = vadd.f32 %v1418, %v1531
        %v1558 = vadd.f32 %v1419, %v1534
        %v1559 = vadd.f32 %v1420, %v1539
        %v1560 = vadd.f32 %v1421, %v1542
        %v1563 = vunpack.c.l.b16 %v329
        %v1564 = vunpack.c.l.b16 %v330
        %v1565 = vpack.c.b16 %v1564, %v1563
        %v1570 = vunpack.c.l.b16 %v356
        %v1571 = vunpack.c.l.b16 %v357
        %v1572 = vunpack.c.l.b16 %v358
        %v1573 = vunpack.c.l.b16 %v359
        %v1574 = vpack.c.b16 %v1571, %v1570
        %v1575 = vpack.c.b16 %v1573, %v1572
        %v1579 = vsel %vm599, %v1565, 0
        %1581 = vmatprep.subr.bf16.mxu0 0
        %1582 = vmatpush1.bf16.msra.mxu0 %v1574
        %1583 = vmatprep.subr.bf16.mxu0 0
        %1584 = vmatpush1.bf16.msra.mxu0 %v1575
        %1585 = vmatprep.subr.bf16.mxu0 0
        %1586 = vmatpush1.bf16.msra.mxu0 0
        %1587 = vmatprep.subr.bf16.mxu0 0
        %1588 = vmatpush1.bf16.msra.mxu0 0
        %1589 = vmatprep.subr.bf16.mxu0 0
        %1590 = vmatpush1.bf16.msra.mxu0 0
        %1591 = vmatprep.subr.bf16.mxu0 0
        %1592 = vmatpush1.bf16.msra.mxu0 0
        %1593 = vmatprep.subr.bf16.mxu0 0
        %1594 = vmatpush1.bf16.msra.mxu0 0
        %1595 = vmatprep.subr.bf16.mxu0 0
        %1596 = vmatpush1.bf16.msra.mxu0 0
        %1597 = vmatprep.subr.bf16.mxu0 0
        %1598 = vmatpush1.bf16.msra.mxu0 0
        %1599 = vmatprep.subr.bf16.mxu0 0
        %1600 = vmatpush1.bf16.msra.mxu0 0
        %1601 = vmatprep.subr.bf16.mxu0 0
        %1602 = vmatpush1.bf16.msra.mxu0 0
        %1603 = vmatprep.subr.bf16.mxu0 0
        %1604 = vmatpush1.bf16.msra.mxu0 0
        %1605 = vmatprep.subr.bf16.mxu0 0
        %1606 = vmatpush1.bf16.msra.mxu0 0
        %1607 = vmatprep.subr.bf16.mxu0 0
        %1608 = vmatpush1.bf16.msra.mxu0 0
        %1609 = vmatprep.subr.bf16.mxu0 0
        %1610 = vmatpush1.bf16.msra.mxu0 0
        %1611 = vmatprep.subr.bf16.mxu0 0
        %1612 = vmatpush1.bf16.msra.mxu0 0
        %1613 = vmatprep.mubr.bf16.mxu0 0
        %1614 = vmatmul.mubr.bf16.gmra.mrb[0].mxu0 %v780
        %v1615 = vpop.f32.mrb[0].mxu0
        %v1616 = vadd.f32 0.0, %v1615
        %v1617 = vpop.f32.mrb[0].mxu0
        %v1618 = vpop.f32.mrb[0].mxu0
        %v1619 = vadd.f32 0.0, %v1618
        %v1620 = vpop.f32.mrb[0].mxu0
        %1621 = vmatprep.mubr.bf16.mxu0 0
        %1622 = vmatmul.mubr.bf16.gmra.mrb[0].mxu0 %v783
        %v1623 = vpop.f32.mrb[0].mxu0
        %v1624 = vadd.f32 0.0, %v1623
        %v1625 = vpop.f32.mrb[0].mxu0
        %v1626 = vpop.f32.mrb[0].mxu0
        %v1627 = vadd.f32 0.0, %v1626
        %v1628 = vpop.f32.mrb[0].mxu0
        %1629 = vmatprep.mubr.bf16.mxu0 0
        %1630 = vmatmul.mubr.bf16.gmra.mrb[0].mxu0 %v786
        %v1631 = vpop.f32.mrb[0].mxu0
        %v1632 = vadd.f32 0.0, %v1631
        %v1633 = vpop.f32.mrb[0].mxu0
        %v1634 = vpop.f32.mrb[0].mxu0
        %v1635 = vadd.f32 0.0, %v1634
        %v1636 = vpop.f32.mrb[0].mxu0
        %1637 = vmatprep.mubr.bf16.mxu0 0
        %1638 = vmatmul.mubr.bf16.gmra.mrb[0].mxu0 %v789
        %v1639 = vpop.f32.mrb[0].mxu0
        %v1640 = vadd.f32 0.0, %v1639
        %v1641 = vpop.f32.mrb[0].mxu0
        %v1642 = vpop.f32.mrb[0].mxu0
        %v1643 = vadd.f32 0.0, %v1642
        %v1644 = vpop.f32.mrb[0].mxu0
        %1645 = vmatprep.mubr.bf16.mxu0 0
        %1646 = vmatmul.mubr.bf16.gmra.mrb[0].mxu0 %v792
        %v1647 = vpop.f32.mrb[0].mxu0
        %v1648 = vadd.f32 0.0, %v1647
        %v1649 = vpop.f32.mrb[0].mxu0
        %v1650 = vpop.f32.mrb[0].mxu0
        %v1651 = vadd.f32 0.0, %v1650
        %v1652 = vpop.f32.mrb[0].mxu0
        %1653 = vmatprep.mubr.bf16.mxu0 0
        %1654 = vmatmul.mubr.bf16.gmra.mrb[0].mxu0 %v795
        %v1655 = vpop.f32.mrb[0].mxu0
        %v1656 = vadd.f32 0.0, %v1655
        %v1657 = vpop.f32.mrb[0].mxu0
        %v1658 = vpop.f32.mrb[0].mxu0
        %v1659 = vadd.f32 0.0, %v1658
        %v1660 = vpop.f32.mrb[0].mxu0
        %1661 = vmatprep.mubr.bf16.mxu0 0
        %1662 = vmatmul.mubr.bf16.gmra.mrb[0].mxu0 %v1152
        %v1663 = vpop.f32.mrb[0].mxu0
        %v1664 = vadd.f32 0.0, %v1663
        %v1665 = vpop.f32.mrb[0].mxu0
        %v1666 = vpop.f32.mrb[0].mxu0
        %v1667 = vadd.f32 0.0, %v1666
        %v1668 = vpop.f32.mrb[0].mxu0
        %1669 = vmatprep.mubr.bf16.mxu0 0
        %1670 = vmatmul.mubr.bf16.gmra.mrb[0].mxu0 %v1579
        %v1671 = vpop.f32.mrb[0].mxu0
        %v1672 = vadd.f32 0.0, %v1671
        %v1673 = vpop.f32.mrb[0].mxu0
        %v1674 = vpop.f32.mrb[0].mxu0
        %v1675 = vadd.f32 0.0, %v1674
        %v1676 = vpop.f32.mrb[0].mxu0
        %1677 = vdwg.mxu0
        %v1678 = vadd.f32 %v1545, %v1616
        %v1679 = vadd.f32 %v1546, %v1619
        %v1680 = vadd.f32 %v1547, %v1624
        %v1681 = vadd.f32 %v1548, %v1627
        %v1682 = vadd.f32 %v1549, %v1632
        %v1683 = vadd.f32 %v1550, %v1635
        %v1684 = vadd.f32 %v1551, %v1640
        %v1685 = vadd.f32 %v1552, %v1643
        %v1686 = vadd.f32 %v1553, %v1648
        %v1687 = vadd.f32 %v1554, %v1651
        %v1688 = vadd.f32 %v1555, %v1656
        %v1689 = vadd.f32 %v1556, %v1659
        %v1690 = vadd.f32 %v1557, %v1664
        %v1691 = vadd.f32 %v1558, %v1667
        %v1692 = vadd.f32 %v1559, %v1672
        %v1693 = vadd.f32 %v1560, %v1675
        %v1695 = vshrl.u32 %v329, 16
        %v1697 = vrot.slane %v1695, 4
        %v1698 = vshll.u32 %v329, 16
        %v1700 = vrot.slane %v1698, 5
        %v1701 = vor.u32 %v1697, %v1700
        %v1702 = vrot.slane %v1701, 4
        %v1704 = vshll.u32 %v330, 16
        %v1706 = vrot.slane %v1704, 5
        %v1707 = vsel %vm370, %v1702, %v1706
        %v1708 = vshrl.u32 %v330, 16
        %v1710 = vrot.slane %v1708, 4
        %v1711 = vor.u32 %v1710, %v1706
        %v1712 = vrot.slane %v1711, 4
        %v1714 = vshll.u32 %v331, 16
        %v1716 = vrot.slane %v1714, 5
        %v1717 = vsel %vm370, %v1712, %v1716
        %v1718 = vunpack.c.l.b16 %v1707
        %v1719 = vunpack.c.l.b16 %v1717
        %v1720 = vpack.c.b16 %v1719, %v1718
        %v1725 = vunpack.c.l.b16 %v360
        %v1726 = vunpack.c.l.b16 %v361
        %v1727 = vunpack.c.l.b16 %v362
        %v1728 = vunpack.c.l.b16 %v363
        %v1729 = vpack.c.b16 %v1726, %v1725
        %v1730 = vpack.c.b16 %v1728, %v1727
        %v1734 = vsel %vm599, %v1720, 0
        %1736 = vmatprep.subr.bf16.mxu0 0
        %1737 = vmatpush1.bf16.msra.mxu0 %v1729
        %1738 = vmatprep.subr.bf16.mxu0 0
        %1739 = vmatpush1.bf16.msra.mxu0 %v1730
        %1740 = vmatprep.subr.bf16.mxu0 0
        %1741 = vmatpush1.bf16.msra.mxu0 0
        %1742 = vmatprep.subr.bf16.mxu0 0
        %1743 = vmatpush1.bf16.msra.mxu0 0
        %1744 = vmatprep.subr.bf16.mxu0 0
        %1745 = vmatpush1.bf16.msra.mxu0 0
        %1746 = vmatprep.subr.bf16.mxu0 0
        %1747 = vmatpush1.bf16.msra.mxu0 0
        %1748 = vmatprep.subr.bf16.mxu0 0
        %1749 = vmatpush1.bf16.msra.mxu0 0
        %1750 = vmatprep.subr.bf16.mxu0 0
        %1751 = vmatpush1.bf16.msra.mxu0 0
        %1752 = vmatprep.subr.bf16.mxu0 0
        %1753 = vmatpush1.bf16.msra.mxu0 0
        %1754 = vmatprep.subr.bf16.mxu0 0
        %1755 = vmatpush1.bf16.msra.mxu0 0
        %1756 = vmatprep.subr.bf16.mxu0 0
        %1757 = vmatpush1.bf16.msra.mxu0 0
        %1758 = vmatprep.subr.bf16.mxu0 0
        %1759 = vmatpush1.bf16.msra.mxu0 0
        %1760 = vmatprep.subr.bf16.mxu0 0
        %1761 = vmatpush1.bf16.msra.mxu0 0
        %1762 = vmatprep.subr.bf16.mxu0 0
        %1763 = vmatpush1.bf16.msra.mxu0 0
        %1764 = vmatprep.subr.bf16.mxu0 0
        %1765 = vmatpush1.bf16.msra.mxu0 0
        %1766 = vmatprep.subr.bf16.mxu0 0
        %1767 = vmatpush1.bf16.msra.mxu0 0
        %1768 = vmatprep.mubr.bf16.mxu0 0
        %1769 = vmatmul.mubr.bf16.gmra.mrb[0].mxu0 %v607
        %v1770 = vpop.f32.mrb[0].mxu0
        %v1771 = vadd.f32 0.0, %v1770
        %v1772 = vpop.f32.mrb[0].mxu0
        %v1773 = vpop.f32.mrb[0].mxu0
        %v1774 = vadd.f32 0.0, %v1773
        %v1775 = vpop.f32.mrb[0].mxu0
        %1776 = vmatprep.mubr.bf16.mxu0 0
        %1777 = vmatmul.mubr.bf16.gmra.mrb[0].mxu0 %v610
        %v1778 = vpop.f32.mrb[0].mxu0
        %v1779 = vadd.f32 0.0, %v1778
        %v1780 = vpop.f32.mrb[0].mxu0
        %v1781 = vpop.f32.mrb[0].mxu0
        %v1782 = vadd.f32 0.0, %v1781
        %v1783 = vpop.f32.mrb[0].mxu0
        %1784 = vmatprep.mubr.bf16.mxu0 0
        %1785 = vmatmul.mubr.bf16.gmra.mrb[0].mxu0 %v613
        %v1786 = vpop.f32.mrb[0].mxu0
        %v1787 = vadd.f32 0.0, %v1786
        %v1788 = vpop.f32.mrb[0].mxu0
        %v1789 = vpop.f32.mrb[0].mxu0
        %v1790 = vadd.f32 0.0, %v1789
        %v1791 = vpop.f32.mrb[0].mxu0
        %1792 = vmatprep.mubr.bf16.mxu0 0
        %1793 = vmatmul.mubr.bf16.gmra.mrb[0].mxu0 %v616
        %v1794 = vpop.f32.mrb[0].mxu0
        %v1795 = vadd.f32 0.0, %v1794
        %v1796 = vpop.f32.mrb[0].mxu0
        %v1797 = vpop.f32.mrb[0].mxu0
        %v1798 = vadd.f32 0.0, %v1797
        %v1799 = vpop.f32.mrb[0].mxu0
        %1800 = vmatprep.mubr.bf16.mxu0 0
        %1801 = vmatmul.mubr.bf16.gmra.mrb[0].mxu0 %v619
        %v1802 = vpop.f32.mrb[0].mxu0
        %v1803 = vadd.f32 0.0, %v1802
        %v1804 = vpop.f32.mrb[0].mxu0
        %v1805 = vpop.f32.mrb[0].mxu0
        %v1806 = vadd.f32 0.0, %v1805
        %v1807 = vpop.f32.mrb[0].mxu0
        %1808 = vmatprep.mubr.bf16.mxu0 0
        %1809 = vmatmul.mubr.bf16.gmra.mrb[0].mxu0 %v622
        %v1810 = vpop.f32.mrb[0].mxu0
        %v1811 = vadd.f32 0.0, %v1810
        %v1812 = vpop.f32.mrb[0].mxu0
        %v1813 = vpop.f32.mrb[0].mxu0
        %v1814 = vadd.f32 0.0, %v1813
        %v1815 = vpop.f32.mrb[0].mxu0
        %1816 = vmatprep.mubr.bf16.mxu0 0
        %1817 = vmatmul.mubr.bf16.gmra.mrb[0].mxu0 %v1307
        %v1818 = vpop.f32.mrb[0].mxu0
        %v1819 = vadd.f32 0.0, %v1818
        %v1820 = vpop.f32.mrb[0].mxu0
        %v1821 = vpop.f32.mrb[0].mxu0
        %v1822 = vadd.f32 0.0, %v1821
        %v1823 = vpop.f32.mrb[0].mxu0
        %1824 = vmatprep.mubr.bf16.mxu0 0
        %1825 = vmatmul.mubr.bf16.gmra.mrb[0].mxu0 %v1734
        %v1826 = vpop.f32.mrb[0].mxu0
        %v1827 = vadd.f32 0.0, %v1826
        %v1828 = vpop.f32.mrb[0].mxu0
        %v1829 = vpop.f32.mrb[0].mxu0
        %v1830 = vadd.f32 0.0, %v1829
        %v1831 = vpop.f32.mrb[0].mxu0
        %1832 = vdwg.mxu0
        %v1833 = vadd.f32 %v1678, %v1771
        %v1834 = vadd.f32 %v1679, %v1774
        %v1835 = vadd.f32 %v1680, %v1779
        %v1836 = vadd.f32 %v1681, %v1782
        %v1837 = vadd.f32 %v1682, %v1787
        %v1838 = vadd.f32 %v1683, %v1790
        %v1839 = vadd.f32 %v1684, %v1795
        %v1840 = vadd.f32 %v1685, %v1798
        %v1841 = vadd.f32 %v1686, %v1803
        %v1842 = vadd.f32 %v1687, %v1806
        %v1843 = vadd.f32 %v1688, %v1811
        %v1844 = vadd.f32 %v1689, %v1814
        %v1845 = vadd.f32 %v1690, %v1819
        %v1846 = vadd.f32 %v1691, %v1822
        %v1847 = vadd.f32 %v1692, %v1827
        %v1848 = vadd.f32 %v1693, %v1830
        %v1850 = vrot.slane %v329, 5
        %v1851 = vrot.slane %v1850, 4
        %v1852 = vrot.slane %v330, 5
        %v1853 = vsel %vm904, %v1851, %v1852
        %v1854 = vrot.slane %v1852, 4
        %v1855 = vrot.slane %v331, 5
        %v1856 = vsel %vm904, %v1854, %v1855
        %v1857 = vunpack.c.l.b16 %v1853
        %v1858 = vunpack.c.l.b16 %v1856
        %v1859 = vpack.c.b16 %v1858, %v1857
        %v1864 = vunpack.c.l.b16 %v364
        %v1865 = vunpack.c.l.b16 %v365
        %v1866 = vunpack.c.l.b16 %v366
        %v1867 = vunpack.c.l.b16 %v367
        %v1868 = vpack.c.b16 %v1865, %v1864
        %v1869 = vpack.c.b16 %v1867, %v1866
        %v1873 = vsel %vm599, %v1859, 0
        %1875 = vmatprep.subr.bf16.mxu0 0
        %1876 = vmatpush1.bf16.msra.mxu0 %v1868
        %1877 = vmatprep.subr.bf16.mxu0 0
        %1878 = vmatpush1.bf16.msra.mxu0 %v1869
        %1879 = vmatprep.subr.bf16.mxu0 0
        %1880 = vmatpush1.bf16.msra.mxu0 0
        %1881 = vmatprep.subr.bf16.mxu0 0
        %1882 = vmatpush1.bf16.msra.mxu0 0
        %1883 = vmatprep.subr.bf16.mxu0 0
        %1884 = vmatpush1.bf16.msra.mxu0 0
        %1885 = vmatprep.subr.bf16.mxu0 0
        %1886 = vmatpush1.bf16.msra.mxu0 0
        %1887 = vmatprep.subr.bf16.mxu0 0
        %1888 = vmatpush1.bf16.msra.mxu0 0
        %1889 = vmatprep.subr.bf16.mxu0 0
        %1890 = vmatpush1.bf16.msra.mxu0 0
        %1891 = vmatprep.subr.bf16.mxu0 0
        %1892 = vmatpush1.bf16.msra.mxu0 0
        %1893 = vmatprep.subr.bf16.mxu0 0
        %1894 = vmatpush1.bf16.msra.mxu0 0
        %1895 = vmatprep.subr.bf16.mxu0 0
        %1896 = vmatpush1.bf16.msra.mxu0 0
        %1897 = vmatprep.subr.bf16.mxu0 0
        %1898 = vmatpush1.bf16.msra.mxu0 0
        %1899 = vmatprep.subr.bf16.mxu0 0
        %1900 = vmatpush1.bf16.msra.mxu0 0
        %1901 = vmatprep.subr.bf16.mxu0 0
        %1902 = vmatpush1.bf16.msra.mxu0 0
        %1903 = vmatprep.subr.bf16.mxu0 0
        %1904 = vmatpush1.bf16.msra.mxu0 0
        %1905 = vmatprep.subr.bf16.mxu0 0
        %1906 = vmatpush1.bf16.msra.mxu0 0
        %1907 = vmatprep.mubr.bf16.mxu0 0
        %1908 = vmatmul.mubr.bf16.gmra.mrb[0].mxu0 %v1004
        %v1909 = vpop.f32.mrb[0].mxu0
        %v1910 = vadd.f32 0.0, %v1909
        %v1911 = vpop.f32.mrb[0].mxu0
        %v1912 = vpop.f32.mrb[0].mxu0
        %v1913 = vadd.f32 0.0, %v1912
        %v1914 = vpop.f32.mrb[0].mxu0
        %1915 = vmatprep.mubr.bf16.mxu0 0
        %1916 = vmatmul.mubr.bf16.gmra.mrb[0].mxu0 %v1007
        %v1917 = vpop.f32.mrb[0].mxu0
        %v1918 = vadd.f32 0.0, %v1917
        %v1919 = vpop.f32.mrb[0].mxu0
        %v1920 = vpop.f32.mrb[0].mxu0
        %v1921 = vadd.f32 0.0, %v1920
        %v1922 = vpop.f32.mrb[0].mxu0
        %1923 = vmatprep.mubr.bf16.mxu0 0
        %1924 = vmatmul.mubr.bf16.gmra.mrb[0].mxu0 %v1010
        %v1925 = vpop.f32.mrb[0].mxu0
        %v1926 = vadd.f32 0.0, %v1925
        %v1927 = vpop.f32.mrb[0].mxu0
        %v1928 = vpop.f32.mrb[0].mxu0
        %v1929 = vadd.f32 0.0, %v1928
        %v1930 = vpop.f32.mrb[0].mxu0
        %1931 = vmatprep.mubr.bf16.mxu0 0
        %1932 = vmatmul.mubr.bf16.gmra.mrb[0].mxu0 %v1013
        %v1933 = vpop.f32.mrb[0].mxu0
        %v1934 = vadd.f32 0.0, %v1933
        %v1935 = vpop.f32.mrb[0].mxu0
        %v1936 = vpop.f32.mrb[0].mxu0
        %v1937 = vadd.f32 0.0, %v1936
        %v1938 = vpop.f32.mrb[0].mxu0
        %1939 = vmatprep.mubr.bf16.mxu0 0
        %1940 = vmatmul.mubr.bf16.gmra.mrb[0].mxu0 %v1016
        %v1941 = vpop.f32.mrb[0].mxu0
        %v1942 = vadd.f32 0.0, %v1941
        %v1943 = vpop.f32.mrb[0].mxu0
        %v1944 = vpop.f32.mrb[0].mxu0
        %v1945 = vadd.f32 0.0, %v1944
        %v1946 = vpop.f32.mrb[0].mxu0
        %1947 = vmatprep.mubr.bf16.mxu0 0
        %1948 = vmatmul.mubr.bf16.gmra.mrb[0].mxu0 %v1019
        %v1949 = vpop.f32.mrb[0].mxu0
        %v1950 = vadd.f32 0.0, %v1949
        %v1951 = vpop.f32.mrb[0].mxu0
        %v1952 = vpop.f32.mrb[0].mxu0
        %v1953 = vadd.f32 0.0, %v1952
        %v1954 = vpop.f32.mrb[0].mxu0
        %1955 = vmatprep.mubr.bf16.mxu0 0
        %1956 = vmatmul.mubr.bf16.gmra.mrb[0].mxu0 %v1446
        %v1957 = vpop.f32.mrb[0].mxu0
        %v1958 = vadd.f32 0.0, %v1957
        %v1959 = vpop.f32.mrb[0].mxu0
        %v1960 = vpop.f32.mrb[0].mxu0
        %v1961 = vadd.f32 0.0, %v1960
        %v1962 = vpop.f32.mrb[0].mxu0
        %1963 = vmatprep.mubr.bf16.mxu0 0
        %1964 = vmatmul.mubr.bf16.gmra.mrb[0].mxu0 %v1873
        %v1965 = vpop.f32.mrb[0].mxu0
        %v1966 = vadd.f32 0.0, %v1965
        %v1967 = vpop.f32.mrb[0].mxu0
        %v1968 = vpop.f32.mrb[0].mxu0
        %v1969 = vadd.f32 0.0, %v1968
        %v1970 = vpop.f32.mrb[0].mxu0
        %1971 = vdwg.mxu0
        %v1972 = vadd.f32 %v1833, %v1910
        %v1973 = vadd.f32 %v1834, %v1913
        %v1974 = vadd.f32 %v1835, %v1918
        %v1975 = vadd.f32 %v1836, %v1921
        %v1976 = vadd.f32 %v1837, %v1926
        %v1977 = vadd.f32 %v1838, %v1929
        %v1978 = vadd.f32 %v1839, %v1934
        %v1979 = vadd.f32 %v1840, %v1937
        %v1980 = vadd.f32 %v1841, %v1942
        %v1981 = vadd.f32 %v1842, %v1945
        %v1982 = vadd.f32 %v1843, %v1950
        %v1983 = vadd.f32 %v1844, %v1953
        %v1984 = vadd.f32 %v1845, %v1958
        %v1985 = vadd.f32 %v1846, %v1961
        %v1986 = vadd.f32 %v1847, %v1966
        %v1987 = vadd.f32 %v1848, %v1969
        %v1988 = vld [vmem:[%s2] sm:$0x1]
        %v1990 = vlaneseq
        %v1991 = vshrl.u32 %v1990, 7
        %v1992 = vsub.s32 0, %v1991
        %v1993 = vrot.slane %v1988, %v1992
        %v1995 = vadd.f32 %v1972, %v1993
        %v1996 = vadd.f32 %v1973, %v1993
        %v1997 = vadd.f32 %v1974, %v1993
        %v1998 = vadd.f32 %v1975, %v1993
        %v1999 = vadd.f32 %v1976, %v1993
        %v2000 = vadd.f32 %v1977, %v1993
        %v2001 = vadd.f32 %v1978, %v1993
        %v2002 = vadd.f32 %v1979, %v1993
        %v2003 = vadd.f32 %v1980, %v1993
        %v2004 = vadd.f32 %v1981, %v1993
        %v2005 = vadd.f32 %v1982, %v1993
        %v2006 = vadd.f32 %v1983, %v1993
        %v2007 = vadd.f32 %v1984, %v1993
        %v2008 = vadd.f32 %v1985, %v1993
        %v2009 = vadd.f32 %v1986, %v1993
        %v2010 = vadd.f32 %v1987, %v1993
        %v2011 = vmax.f32 %v1995, 0.0
        %v2012 = vmax.f32 %v1996, 0.0
        %v2013 = vmax.f32 %v1997, 0.0
        %v2014 = vmax.f32 %v1998, 0.0
        %v2015 = vmax.f32 %v1999, 0.0
        %v2016 = vmax.f32 %v2000, 0.0
        %v2017 = vmax.f32 %v2001, 0.0
        %v2018 = vmax.f32 %v2002, 0.0
        %v2019 = vmax.f32 %v2003, 0.0
        %v2020 = vmax.f32 %v2004, 0.0
        %v2021 = vmax.f32 %v2005, 0.0
        %v2022 = vmax.f32 %v2006, 0.0
        %v2023 = vmax.f32 %v2007, 0.0
        %v2024 = vmax.f32 %v2008, 0.0
        %v2025 = vmax.f32 %v2009, 0.0
        %v2026 = vmax.f32 %v2010, 0.0
        %v2027 = vpack.c.bf16 %v2012, %v2011
        %v2028 = vpack.c.bf16 %v2014, %v2013
        %v2029 = vpack.c.bf16 %v2016, %v2015
        %v2030 = vpack.c.bf16 %v2018, %v2017
        %v2031 = vpack.c.bf16 %v2020, %v2019
        %v2032 = vpack.c.bf16 %v2022, %v2021
        %v2033 = vpack.c.bf16 %v2024, %v2023
        %v2034 = vpack.c.bf16 %v2026, %v2025
        %v2035 = vld [vmem:[%s3] sm:$0xf]
        %v2036 = vld [vmem:[%s3 + $0x4] sm:$0xf]
        %v2037 = vld [vmem:[%s3 + $0x8] sm:$0xf]
        %v2038 = vld [vmem:[%s3 + $0xc] sm:$0xf]
        %v2039 = vld [vmem:[%s4] sm:$0x1]
        %v2041 = vlaneseq
        %v2042 = vshrl.u32 %v2041, 7
        %v2043 = vsub.s32 0, %v2042
        %v2044 = vrot.slane %v2039, %v2043
        %v2050 = vunpack.c.l.b16 %v2035
        %v2051 = vunpack.c.l.b16 %v2036
        %v2052 = vunpack.c.l.b16 %v2037
        %v2053 = vunpack.c.l.b16 %v2038
        %v2054 = vpack.c.b16 %v2051, %v2050
        %v2055 = vpack.c.b16 %v2053, %v2052
        %v2059 = vsel %vm599, %v2027, 0
        %v2062 = vsel %vm599, %v2028, 0
        %v2065 = vsel %vm599, %v2029, 0
        %v2068 = vsel %vm599, %v2030, 0
        %v2071 = vsel %vm599, %v2031, 0
        %v2074 = vsel %vm599, %v2032, 0
        %v2077 = vsel %vm599, %v2033, 0
        %v2080 = vsel %vm599, %v2034, 0
        %2082 = vmatprep.subr.bf16.mxu0 0
        %2083 = vmatpush1.bf16.msra.mxu0 %v2054
        %2084 = vmatprep.subr.bf16.mxu0 0
        %2085 = vmatpush1.bf16.msra.mxu0 %v2055
        %2086 = vmatprep.subr.bf16.mxu0 0
        %2087 = vmatpush1.bf16.msra.mxu0 0
        %2088 = vmatprep.subr.bf16.mxu0 0
        %2089 = vmatpush1.bf16.msra.mxu0 0
        %2090 = vmatprep.subr.bf16.mxu0 0
        %2091 = vmatpush1.bf16.msra.mxu0 0
        %2092 = vmatprep.subr.bf16.mxu0 0
        %2093 = vmatpush1.bf16.msra.mxu0 0
        %2094 = vmatprep.subr.bf16.mxu0 0
        %2095 = vmatpush1.bf16.msra.mxu0 0
        %2096 = vmatprep.subr.bf16.mxu0 0
        %2097 = vmatpush1.bf16.msra.mxu0 0
        %2098 = vmatprep.subr.bf16.mxu0 0
        %2099 = vmatpush1.bf16.msra.mxu0 0
        %2100 = vmatprep.subr.bf16.mxu0 0
        %2101 = vmatpush1.bf16.msra.mxu0 0
        %2102 = vmatprep.subr.bf16.mxu0 0
        %2103 = vmatpush1.bf16.msra.mxu0 0
        %2104 = vmatprep.subr.bf16.mxu0 0
        %2105 = vmatpush1.bf16.msra.mxu0 0
        %2106 = vmatprep.subr.bf16.mxu0 0
        %2107 = vmatpush1.bf16.msra.mxu0 0
        %2108 = vmatprep.subr.bf16.mxu0 0
        %2109 = vmatpush1.bf16.msra.mxu0 0
        %2110 = vmatprep.subr.bf16.mxu0 0
        %2111 = vmatpush1.bf16.msra.mxu0 0
        %2112 = vmatprep.subr.bf16.mxu0 0
        %2113 = vmatpush1.bf16.msra.mxu0 0
        %2114 = vmatprep.mubr.bf16.mxu0 0
        %2115 = vmatmul.mubr.bf16.gmra.mrb[0].mxu0 %v2059
        %v2116 = vpop.f32.mrb[0].mxu0
        %v2117 = vadd.f32 %v2044, %v2116
        %v2118 = vpop.f32.mrb[0].mxu0
        %v2119 = vpop.f32.mrb[0].mxu0
        %v2120 = vadd.f32 %v2044, %v2119
        %v2121 = vpop.f32.mrb[0].mxu0
        %2122 = vmatprep.mubr.bf16.mxu0 0
        %2123 = vmatmul.mubr.bf16.gmra.mrb[0].mxu0 %v2062
        %v2124 = vpop.f32.mrb[0].mxu0
        %v2125 = vadd.f32 %v2044, %v2124
        %v2126 = vpop.f32.mrb[0].mxu0
        %v2127 = vpop.f32.mrb[0].mxu0
        %v2128 = vadd.f32 %v2044, %v2127
        %v2129 = vpop.f32.mrb[0].mxu0
        %2130 = vmatprep.mubr.bf16.mxu0 0
        %2131 = vmatmul.mubr.bf16.gmra.mrb[0].mxu0 %v2065
        %v2132 = vpop.f32.mrb[0].mxu0
        %v2133 = vadd.f32 %v2044, %v2132
        %v2134 = vpop.f32.mrb[0].mxu0
        %v2135 = vpop.f32.mrb[0].mxu0
        %v2136 = vadd.f32 %v2044, %v2135
        %v2137 = vpop.f32.mrb[0].mxu0
        %2138 = vmatprep.mubr.bf16.mxu0 0
        %2139 = vmatmul.mubr.bf16.gmra.mrb[0].mxu0 %v2068
        %v2140 = vpop.f32.mrb[0].mxu0
        %v2141 = vadd.f32 %v2044, %v2140
        %v2142 = vpop.f32.mrb[0].mxu0
        %v2143 = vpop.f32.mrb[0].mxu0
        %v2144 = vadd.f32 %v2044, %v2143
        %v2145 = vpop.f32.mrb[0].mxu0
        %2146 = vmatprep.mubr.bf16.mxu0 0
        %2147 = vmatmul.mubr.bf16.gmra.mrb[0].mxu0 %v2071
        %v2148 = vpop.f32.mrb[0].mxu0
        %v2149 = vadd.f32 %v2044, %v2148
        %v2150 = vpop.f32.mrb[0].mxu0
        %v2151 = vpop.f32.mrb[0].mxu0
        %v2152 = vadd.f32 %v2044, %v2151
        %v2153 = vpop.f32.mrb[0].mxu0
        %2154 = vmatprep.mubr.bf16.mxu0 0
        %2155 = vmatmul.mubr.bf16.gmra.mrb[0].mxu0 %v2074
        %v2156 = vpop.f32.mrb[0].mxu0
        %v2157 = vadd.f32 %v2044, %v2156
        %v2158 = vpop.f32.mrb[0].mxu0
        %v2159 = vpop.f32.mrb[0].mxu0
        %v2160 = vadd.f32 %v2044, %v2159
        %v2161 = vpop.f32.mrb[0].mxu0
        %2162 = vmatprep.mubr.bf16.mxu0 0
        %2163 = vmatmul.mubr.bf16.gmra.mrb[0].mxu0 %v2077
        %v2164 = vpop.f32.mrb[0].mxu0
        %v2165 = vadd.f32 %v2044, %v2164
        %v2166 = vpop.f32.mrb[0].mxu0
        %v2167 = vpop.f32.mrb[0].mxu0
        %v2168 = vadd.f32 %v2044, %v2167
        %v2169 = vpop.f32.mrb[0].mxu0
        %2170 = vmatprep.mubr.bf16.mxu0 0
        %2171 = vmatmul.mubr.bf16.gmra.mrb[0].mxu0 %v2080
        %v2172 = vpop.f32.mrb[0].mxu0
        %v2173 = vadd.f32 %v2044, %v2172
        %v2174 = vpop.f32.mrb[0].mxu0
        %v2175 = vpop.f32.mrb[0].mxu0
        %v2176 = vadd.f32 %v2044, %v2175
        %v2177 = vpop.f32.mrb[0].mxu0
        %2178 = vdwg.mxu0
        %v2179 = vsub.f32 0.0, %v2117
        %v2180 = vsub.f32 0.0, %v2120
        %v2181 = vsub.f32 0.0, %v2125
        %v2182 = vsub.f32 0.0, %v2128
        %v2183 = vsub.f32 0.0, %v2133
        %v2184 = vsub.f32 0.0, %v2136
        %v2185 = vsub.f32 0.0, %v2141
        %v2186 = vsub.f32 0.0, %v2144
        %v2187 = vsub.f32 0.0, %v2149
        %v2188 = vsub.f32 0.0, %v2152
        %v2189 = vsub.f32 0.0, %v2157
        %v2190 = vsub.f32 0.0, %v2160
        %v2191 = vsub.f32 0.0, %v2165
        %v2192 = vsub.f32 0.0, %v2168
        %v2193 = vsub.f32 0.0, %v2173
        %v2194 = vsub.f32 0.0, %v2176
        %v2195 = vmul.f32 %v2179, 1.442695
        %v2196 = vpow.pop %v2195
        %v2197 = vmul.f32 %v2180, 1.442695
        %v2198 = vpow.pop %v2197
        %v2199 = vmul.f32 %v2181, 1.442695
        %v2200 = vpow.pop %v2199
        %v2201 = vmul.f32 %v2182, 1.442695
        %v2202 = vpow.pop %v2201
        %v2203 = vmul.f32 %v2183, 1.442695
        %v2204 = vpow.pop %v2203
        %v2205 = vmul.f32 %v2184, 1.442695
        %v2206 = vpow.pop %v2205
        %v2207 = vmul.f32 %v2185, 1.442695
        %v2208 = vpow.pop %v2207
        %v2209 = vmul.f32 %v2186, 1.442695
        %v2210 = vpow.pop %v2209
        %v2211 = vmul.f32 %v2187, 1.442695
        %v2212 = vpow.pop %v2211
        %v2213 = vmul.f32 %v2188, 1.442695
        %v2214 = vpow.pop %v2213
        %v2215 = vmul.f32 %v2189, 1.442695
        %v2216 = vpow.pop %v2215
        %v2217 = vmul.f32 %v2190, 1.442695
        %v2218 = vpow.pop %v2217
        %v2219 = vmul.f32 %v2191, 1.442695
        %v2220 = vpow.pop %v2219
        %v2221 = vmul.f32 %v2192, 1.442695
        %v2222 = vpow.pop %v2221
        %v2223 = vmul.f32 %v2193, 1.442695
        %v2224 = vpow.pop %v2223
        %v2225 = vmul.f32 %v2194, 1.442695
        %v2226 = vpow.pop %v2225
        %v2227 = vadd.f32 %v2196, 1.0
        %v2228 = vadd.f32 %v2198, 1.0
        %v2229 = vadd.f32 %v2200, 1.0
        %v2230 = vadd.f32 %v2202, 1.0
        %v2231 = vadd.f32 %v2204, 1.0
        %v2232 = vadd.f32 %v2206, 1.0
        %v2233 = vadd.f32 %v2208, 1.0
        %v2234 = vadd.f32 %v2210, 1.0
        %v2235 = vadd.f32 %v2212, 1.0
        %v2236 = vadd.f32 %v2214, 1.0
        %v2237 = vadd.f32 %v2216, 1.0
        %v2238 = vadd.f32 %v2218, 1.0
        %v2239 = vadd.f32 %v2220, 1.0
        %v2240 = vadd.f32 %v2222, 1.0
        %v2241 = vadd.f32 %v2224, 1.0
        %v2242 = vadd.f32 %v2226, 1.0
        %v2243 = vrcp.pop %v2227
        %v2244 = vmul.f32 1.0, %v2243
        %v2245 = vrcp.pop %v2228
        %v2246 = vmul.f32 1.0, %v2245
        %v2247 = vrcp.pop %v2229
        %v2248 = vmul.f32 1.0, %v2247
        %v2249 = vrcp.pop %v2230
        %v2250 = vmul.f32 1.0, %v2249
        %v2251 = vrcp.pop %v2231
        %v2252 = vmul.f32 1.0, %v2251
        %v2253 = vrcp.pop %v2232
        %v2254 = vmul.f32 1.0, %v2253
        %v2255 = vrcp.pop %v2233
        %v2256 = vmul.f32 1.0, %v2255
        %v2257 = vrcp.pop %v2234
        %v2258 = vmul.f32 1.0, %v2257
        %v2259 = vrcp.pop %v2235
        %v2260 = vmul.f32 1.0, %v2259
        %v2261 = vrcp.pop %v2236
        %v2262 = vmul.f32 1.0, %v2261
        %v2263 = vrcp.pop %v2237
        %v2264 = vmul.f32 1.0, %v2263
        %v2265 = vrcp.pop %v2238
        %v2266 = vmul.f32 1.0, %v2265
        %v2267 = vrcp.pop %v2239
        %v2268 = vmul.f32 1.0, %v2267
        %v2269 = vrcp.pop %v2240
        %v2270 = vmul.f32 1.0, %v2269
        %v2271 = vrcp.pop %v2241
        %v2272 = vmul.f32 1.0, %v2271
        %v2273 = vrcp.pop %v2242
        %v2274 = vmul.f32 1.0, %v2273
        %v2275 = vld [vmem:[%s298] sm:$0xff]
        %v2276 = vld [vmem:[%s298 + $0x8] sm:$0xff]
        %v2277 = vld [vmem:[%s298 + $0x10] sm:$0xff]
        %v2278 = vld [vmem:[%s298 + $0x18] sm:$0xff]
        %v2279 = vld [vmem:[%s298 + $0x20] sm:$0xff]
        %v2280 = vld [vmem:[%s298 + $0x28] sm:$0xff]
        %v2281 = vld [vmem:[%s298 + $0x30] sm:$0xff]
        %v2282 = vld [vmem:[%s298 + $0x38] sm:$0xff]
        %v2283 = vld [vmem:[%s298 + $0x40] sm:$0xff]
        %v2284 = vld [vmem:[%s298 + $0x48] sm:$0xff]
        %v2285 = vld [vmem:[%s298 + $0x50] sm:$0xff]
        %v2286 = vld [vmem:[%s298 + $0x58] sm:$0xff]
        %v2287 = vld [vmem:[%s298 + $0x60] sm:$0xff]
        %v2288 = vld [vmem:[%s298 + $0x68] sm:$0xff]
        %v2289 = vld [vmem:[%s298 + $0x70] sm:$0xff]
        %v2290 = vld [vmem:[%s298 + $0x78] sm:$0xff]
        %v2291 = vmul.f32 %v2117, %v2275
        %v2292 = vmul.f32 %v2120, %v2276
        %v2293 = vmul.f32 %v2125, %v2277
        %v2294 = vmul.f32 %v2128, %v2278
        %v2295 = vmul.f32 %v2133, %v2279
        %v2296 = vmul.f32 %v2136, %v2280
        %v2297 = vmul.f32 %v2141, %v2281
        %v2298 = vmul.f32 %v2144, %v2282
        %v2299 = vmul.f32 %v2149, %v2283
        %v2300 = vmul.f32 %v2152, %v2284
        %v2301 = vmul.f32 %v2157, %v2285
        %v2302 = vmul.f32 %v2160, %v2286
        %v2303 = vmul.f32 %v2165, %v2287
        %v2304 = vmul.f32 %v2168, %v2288
        %v2305 = vmul.f32 %v2173, %v2289
        %v2306 = vmul.f32 %v2176, %v2290
        %2323 = vrot.lane.b32.xlu0 %v2275, 18
        %v2324 = vpop.permute.xlu0 %2323
        %2325 = vrot.lane.b32.xlu0 %v2276, 18
        %v2326 = vpop.permute.xlu0 %2325
        %2327 = vrot.lane.b32.xlu0 %v2277, 18
        %v2328 = vpop.permute.xlu0 %2327
        %2329 = vrot.lane.b32.xlu0 %v2278, 18
        %v2330 = vpop.permute.xlu0 %2329
        %2331 = vrot.lane.b32.xlu0 %v2279, 18
        %v2332 = vpop.permute.xlu0 %2331
        %2333 = vrot.lane.b32.xlu0 %v2280, 18
        %v2334 = vpop.permute.xlu0 %2333
        %2335 = vrot.lane.b32.xlu0 %v2281, 18
        %v2336 = vpop.permute.xlu0 %2335
        %2337 = vrot.lane.b32.xlu0 %v2282, 18
        %v2338 = vpop.permute.xlu0 %2337
        %2339 = vrot.lane.b32.xlu0 %v2283, 18
        %v2340 = vpop.permute.xlu0 %2339
        %2341 = vrot.lane.b32.xlu0 %v2284, 18
        %v2342 = vpop.permute.xlu0 %2341
        %2343 = vrot.lane.b32.xlu0 %v2285, 18
        %v2344 = vpop.permute.xlu0 %2343
        %2345 = vrot.lane.b32.xlu0 %v2286, 18
        %v2346 = vpop.permute.xlu0 %2345
        %2347 = vrot.lane.b32.xlu0 %v2287, 18
        %v2348 = vpop.permute.xlu0 %2347
        %2349 = vrot.lane.b32.xlu0 %v2288, 18
        %v2350 = vpop.permute.xlu0 %2349
        %2351 = vrot.lane.b32.xlu0 %v2289, 18
        %v2352 = vpop.permute.xlu0 %2351
        %2353 = vrot.lane.b32.xlu0 %v2290, 18
        %v2354 = vpop.permute.xlu0 %2353
        %v2371 = vadd.f32 %v2291, %v2324
        %v2372 = vadd.f32 %v2292, %v2326
        %v2373 = vadd.f32 %v2293, %v2328
        %v2374 = vadd.f32 %v2294, %v2330
        %v2375 = vadd.f32 %v2295, %v2332
        %v2376 = vadd.f32 %v2296, %v2334
        %v2377 = vadd.f32 %v2297, %v2336
        %v2378 = vadd.f32 %v2298, %v2338
        %v2379 = vadd.f32 %v2299, %v2340
        %v2380 = vadd.f32 %v2300, %v2342
        %v2381 = vadd.f32 %v2301, %v2344
        %v2382 = vadd.f32 %v2302, %v2346
        %v2383 = vadd.f32 %v2303, %v2348
        %v2384 = vadd.f32 %v2304, %v2350
        %v2385 = vadd.f32 %v2305, %v2352
        %v2386 = vadd.f32 %v2306, %v2354
        %v2387 = vmul.f32 %v2117, 1.442695
        %v2388 = vpow.pop %v2387
        %v2389 = vmul.f32 %v2120, 1.442695
        %v2390 = vpow.pop %v2389
        %v2391 = vmul.f32 %v2125, 1.442695
        %v2392 = vpow.pop %v2391
        %v2393 = vmul.f32 %v2128, 1.442695
        %v2394 = vpow.pop %v2393
        %v2395 = vmul.f32 %v2133, 1.442695
        %v2396 = vpow.pop %v2395
        %v2397 = vmul.f32 %v2136, 1.442695
        %v2398 = vpow.pop %v2397
        %v2399 = vmul.f32 %v2141, 1.442695
        %v2400 = vpow.pop %v2399
        %v2401 = vmul.f32 %v2144, 1.442695
        %v2402 = vpow.pop %v2401
        %v2403 = vmul.f32 %v2149, 1.442695
        %v2404 = vpow.pop %v2403
        %v2405 = vmul.f32 %v2152, 1.442695
        %v2406 = vpow.pop %v2405
        %v2407 = vmul.f32 %v2157, 1.442695
        %v2408 = vpow.pop %v2407
        %v2409 = vmul.f32 %v2160, 1.442695
        %v2410 = vpow.pop %v2409
        %v2411 = vmul.f32 %v2165, 1.442695
        %v2412 = vpow.pop %v2411
        %v2413 = vmul.f32 %v2168, 1.442695
        %v2414 = vpow.pop %v2413
        %v2415 = vmul.f32 %v2173, 1.442695
        %v2416 = vpow.pop %v2415
        %v2417 = vmul.f32 %v2176, 1.442695
        %v2418 = vpow.pop %v2417
        %v2419 = vmul.f32 %v2388, %v2324
        %v2420 = vmul.f32 %v2390, %v2326
        %v2421 = vmul.f32 %v2392, %v2328
        %v2422 = vmul.f32 %v2394, %v2330
        %v2423 = vmul.f32 %v2396, %v2332
        %v2424 = vmul.f32 %v2398, %v2334
        %v2425 = vmul.f32 %v2400, %v2336
        %v2426 = vmul.f32 %v2402, %v2338
        %v2427 = vmul.f32 %v2404, %v2340
        %v2428 = vmul.f32 %v2406, %v2342
        %v2429 = vmul.f32 %v2408, %v2344
        %v2430 = vmul.f32 %v2410, %v2346
        %v2431 = vmul.f32 %v2412, %v2348
        %v2432 = vmul.f32 %v2414, %v2350
        %v2433 = vmul.f32 %v2416, %v2352
        %v2434 = vmul.f32 %v2418, %v2354
        %v2435 = vmul.f32 %v2419, 0.5
        %v2436 = vmul.f32 %v2420, 0.5
        %v2437 = vmul.f32 %v2421, 0.5
        %v2438 = vmul.f32 %v2422, 0.5
        %v2439 = vmul.f32 %v2423, 0.5
        %v2440 = vmul.f32 %v2424, 0.5
        %v2441 = vmul.f32 %v2425, 0.5
        %v2442 = vmul.f32 %v2426, 0.5
        %v2443 = vmul.f32 %v2427, 0.5
        %v2444 = vmul.f32 %v2428, 0.5
        %v2445 = vmul.f32 %v2429, 0.5
        %v2446 = vmul.f32 %v2430, 0.5
        %v2447 = vmul.f32 %v2431, 0.5
        %v2448 = vmul.f32 %v2432, 0.5
        %v2449 = vmul.f32 %v2433, 0.5
        %v2450 = vmul.f32 %v2434, 0.5
        %2467 = vrot.lane.b32.xlu0 %v2435, 110
        %v2468 = vpop.permute.xlu0 %2467
        %2469 = vrot.lane.b32.xlu0 %v2436, 110
        %v2470 = vpop.permute.xlu0 %2469
        %2471 = vrot.lane.b32.xlu0 %v2437, 110
        %v2472 = vpop.permute.xlu0 %2471
        %2473 = vrot.lane.b32.xlu0 %v2438, 110
        %v2474 = vpop.permute.xlu0 %2473
        %2475 = vrot.lane.b32.xlu0 %v2439, 110
        %v2476 = vpop.permute.xlu0 %2475
        %2477 = vrot.lane.b32.xlu0 %v2440, 110
        %v2478 = vpop.permute.xlu0 %2477
        %2479 = vrot.lane.b32.xlu0 %v2441, 110
        %v2480 = vpop.permute.xlu0 %2479
        %2481 = vrot.lane.b32.xlu0 %v2442, 110
        %v2482 = vpop.permute.xlu0 %2481
        %2483 = vrot.lane.b32.xlu0 %v2443, 110
        %v2484 = vpop.permute.xlu0 %2483
        %2485 = vrot.lane.b32.xlu0 %v2444, 110
        %v2486 = vpop.permute.xlu0 %2485
        %2487 = vrot.lane.b32.xlu0 %v2445, 110
        %v2488 = vpop.permute.xlu0 %2487
        %2489 = vrot.lane.b32.xlu0 %v2446, 110
        %v2490 = vpop.permute.xlu0 %2489
        %2491 = vrot.lane.b32.xlu0 %v2447, 110
        %v2492 = vpop.permute.xlu0 %2491
        %2493 = vrot.lane.b32.xlu0 %v2448, 110
        %v2494 = vpop.permute.xlu0 %2493
        %2495 = vrot.lane.b32.xlu0 %v2449, 110
        %v2496 = vpop.permute.xlu0 %2495
        %2497 = vrot.lane.b32.xlu0 %v2450, 110
        %v2498 = vpop.permute.xlu0 %2497
        %v2515 = vsub.f32 %v2371, %v2468
        %v2516 = vsub.f32 %v2372, %v2470
        %v2517 = vsub.f32 %v2373, %v2472
        %v2518 = vsub.f32 %v2374, %v2474
        %v2519 = vsub.f32 %v2375, %v2476
        %v2520 = vsub.f32 %v2376, %v2478
        %v2521 = vsub.f32 %v2377, %v2480
        %v2522 = vsub.f32 %v2378, %v2482
        %v2523 = vsub.f32 %v2379, %v2484
        %v2524 = vsub.f32 %v2380, %v2486
        %v2525 = vsub.f32 %v2381, %v2488
        %v2526 = vsub.f32 %v2382, %v2490
        %v2527 = vsub.f32 %v2383, %v2492
        %v2528 = vsub.f32 %v2384, %v2494
        %v2529 = vsub.f32 %v2385, %v2496
        %v2530 = vsub.f32 %v2386, %v2498
        %v2531 = vmax.f32 %v2515, 0.0
        %v2532 = vmax.f32 %v2516, 0.0
        %v2533 = vmax.f32 %v2517, 0.0
        %v2534 = vmax.f32 %v2518, 0.0
        %v2535 = vmax.f32 %v2519, 0.0
        %v2536 = vmax.f32 %v2520, 0.0
        %v2537 = vmax.f32 %v2521, 0.0
        %v2538 = vmax.f32 %v2522, 0.0
        %v2539 = vmax.f32 %v2523, 0.0
        %v2540 = vmax.f32 %v2524, 0.0
        %v2541 = vmax.f32 %v2525, 0.0
        %v2542 = vmax.f32 %v2526, 0.0
        %v2543 = vmax.f32 %v2527, 0.0
        %v2544 = vmax.f32 %v2528, 0.0
        %v2545 = vmax.f32 %v2529, 0.0
        %v2546 = vmax.f32 %v2530, 0.0
        %v2547 = vmin.f32 %v2531, 256.0
        %v2548 = vmin.f32 %v2532, 256.0
        %v2549 = vmin.f32 %v2533, 256.0
        %v2550 = vmin.f32 %v2534, 256.0
        %v2551 = vmin.f32 %v2535, 256.0
        %v2552 = vmin.f32 %v2536, 256.0
        %v2553 = vmin.f32 %v2537, 256.0
        %v2554 = vmin.f32 %v2538, 256.0
        %v2555 = vmin.f32 %v2539, 256.0
        %v2556 = vmin.f32 %v2540, 256.0
        %v2557 = vmin.f32 %v2541, 256.0
        %v2558 = vmin.f32 %v2542, 256.0
        %v2559 = vmin.f32 %v2543, 256.0
        %v2560 = vmin.f32 %v2544, 256.0
        %v2561 = vmin.f32 %v2545, 256.0
        %v2562 = vmin.f32 %v2546, 256.0
        %v2563 = vadd.f32 %v2371, %v2468
        %v2564 = vadd.f32 %v2372, %v2470
        %v2565 = vadd.f32 %v2373, %v2472
        %v2566 = vadd.f32 %v2374, %v2474
        %v2567 = vadd.f32 %v2375, %v2476
        %v2568 = vadd.f32 %v2376, %v2478
        %v2569 = vadd.f32 %v2377, %v2480
        %v2570 = vadd.f32 %v2378, %v2482
        %v2571 = vadd.f32 %v2379, %v2484
        %v2572 = vadd.f32 %v2380, %v2486
        %v2573 = vadd.f32 %v2381, %v2488
        %v2574 = vadd.f32 %v2382, %v2490
        %v2575 = vadd.f32 %v2383, %v2492
        %v2576 = vadd.f32 %v2384, %v2494
        %v2577 = vadd.f32 %v2385, %v2496
        %v2578 = vadd.f32 %v2386, %v2498
        %v2579 = vmax.f32 %v2563, 0.0
        %v2580 = vmax.f32 %v2564, 0.0
        %v2581 = vmax.f32 %v2565, 0.0
        %v2582 = vmax.f32 %v2566, 0.0
        %v2583 = vmax.f32 %v2567, 0.0
        %v2584 = vmax.f32 %v2568, 0.0
        %v2585 = vmax.f32 %v2569, 0.0
        %v2586 = vmax.f32 %v2570, 0.0
        %v2587 = vmax.f32 %v2571, 0.0
        %v2588 = vmax.f32 %v2572, 0.0
        %v2589 = vmax.f32 %v2573, 0.0
        %v2590 = vmax.f32 %v2574, 0.0
        %v2591 = vmax.f32 %v2575, 0.0
        %v2592 = vmax.f32 %v2576, 0.0
        %v2593 = vmax.f32 %v2577, 0.0
        %v2594 = vmax.f32 %v2578, 0.0
        %v2595 = vmin.f32 %v2579, 256.0
        %v2596 = vmin.f32 %v2580, 256.0
        %v2597 = vmin.f32 %v2581, 256.0
        %v2598 = vmin.f32 %v2582, 256.0
        %v2599 = vmin.f32 %v2583, 256.0
        %v2600 = vmin.f32 %v2584, 256.0
        %v2601 = vmin.f32 %v2585, 256.0
        %v2602 = vmin.f32 %v2586, 256.0
        %v2603 = vmin.f32 %v2587, 256.0
        %v2604 = vmin.f32 %v2588, 256.0
        %v2605 = vmin.f32 %v2589, 256.0
        %v2606 = vmin.f32 %v2590, 256.0
        %v2607 = vmin.f32 %v2591, 256.0
        %v2608 = vmin.f32 %v2592, 256.0
        %v2609 = vmin.f32 %v2593, 256.0
        %v2610 = vmin.f32 %v2594, 256.0
        %2627 = vrot.lane.b32.xlu0 %v2547, 45
        %v2628 = vpop.permute.xlu0 %2627
        %2629 = vrot.lane.b32.xlu0 %v2548, 45
        %v2630 = vpop.permute.xlu0 %2629
        %2631 = vrot.lane.b32.xlu0 %v2549, 45
        %v2632 = vpop.permute.xlu0 %2631
        %2633 = vrot.lane.b32.xlu0 %v2550, 45
        %v2634 = vpop.permute.xlu0 %2633
        %2635 = vrot.lane.b32.xlu0 %v2551, 45
        %v2636 = vpop.permute.xlu0 %2635
        %2637 = vrot.lane.b32.xlu0 %v2552, 45
        %v2638 = vpop.permute.xlu0 %2637
        %2639 = vrot.lane.b32.xlu0 %v2553, 45
        %v2640 = vpop.permute.xlu0 %2639
        %2641 = vrot.lane.b32.xlu0 %v2554, 45
        %v2642 = vpop.permute.xlu0 %2641
        %2643 = vrot.lane.b32.xlu0 %v2555, 45
        %v2644 = vpop.permute.xlu0 %2643
        %2645 = vrot.lane.b32.xlu0 %v2556, 45
        %v2646 = vpop.permute.xlu0 %2645
        %2647 = vrot.lane.b32.xlu0 %v2557, 45
        %v2648 = vpop.permute.xlu0 %2647
        %2649 = vrot.lane.b32.xlu0 %v2558, 45
        %v2650 = vpop.permute.xlu0 %2649
        %2651 = vrot.lane.b32.xlu0 %v2559, 45
        %v2652 = vpop.permute.xlu0 %2651
        %2653 = vrot.lane.b32.xlu0 %v2560, 45
        %v2654 = vpop.permute.xlu0 %2653
        %2655 = vrot.lane.b32.xlu0 %v2561, 45
        %v2656 = vpop.permute.xlu0 %2655
        %2657 = vrot.lane.b32.xlu0 %v2562, 45
        %v2658 = vpop.permute.xlu0 %2657
        %2691 = vrot.lane.b32.xlu0 %v2595, 63
        %v2692 = vpop.permute.xlu0 %2691
        %2693 = vrot.lane.b32.xlu0 %v2596, 63
        %v2694 = vpop.permute.xlu0 %2693
        %2695 = vrot.lane.b32.xlu0 %v2597, 63
        %v2696 = vpop.permute.xlu0 %2695
        %2697 = vrot.lane.b32.xlu0 %v2598, 63
        %v2698 = vpop.permute.xlu0 %2697
        %2699 = vrot.lane.b32.xlu0 %v2599, 63
        %v2700 = vpop.permute.xlu0 %2699
        %2701 = vrot.lane.b32.xlu0 %v2600, 63
        %v2702 = vpop.permute.xlu0 %2701
        %2703 = vrot.lane.b32.xlu0 %v2601, 63
        %v2704 = vpop.permute.xlu0 %2703
        %2705 = vrot.lane.b32.xlu0 %v2602, 63
        %v2706 = vpop.permute.xlu0 %2705
        %2707 = vrot.lane.b32.xlu0 %v2603, 63
        %v2708 = vpop.permute.xlu0 %2707
        %2709 = vrot.lane.b32.xlu0 %v2604, 63
        %v2710 = vpop.permute.xlu0 %2709
        %2711 = vrot.lane.b32.xlu0 %v2605, 63
        %v2712 = vpop.permute.xlu0 %2711
        %2713 = vrot.lane.b32.xlu0 %v2606, 63
        %v2714 = vpop.permute.xlu0 %2713
        %2715 = vrot.lane.b32.xlu0 %v2607, 63
        %v2716 = vpop.permute.xlu0 %2715
        %2717 = vrot.lane.b32.xlu0 %v2608, 63
        %v2718 = vpop.permute.xlu0 %2717
        %2719 = vrot.lane.b32.xlu0 %v2609, 63
        %v2720 = vpop.permute.xlu0 %2719
        %2721 = vrot.lane.b32.xlu0 %v2610, 63
        %v2722 = vpop.permute.xlu0 %2721
        %vm2739 = vcmask 441344
        %v2740 = vsel %vm2739, %v2117, %v2244
        %v2741 = vsel %vm2739, %v2120, %v2246
        %v2742 = vsel %vm2739, %v2125, %v2248
        %v2743 = vsel %vm2739, %v2128, %v2250
        %v2744 = vsel %vm2739, %v2133, %v2252
        %v2745 = vsel %vm2739, %v2136, %v2254
        %v2746 = vsel %vm2739, %v2141, %v2256
        %v2747 = vsel %vm2739, %v2144, %v2258
        %v2748 = vsel %vm2739, %v2149, %v2260
        %v2749 = vsel %vm2739, %v2152, %v2262
        %v2750 = vsel %vm2739, %v2157, %v2264
        %v2751 = vsel %vm2739, %v2160, %v2266
        %v2752 = vsel %vm2739, %v2165, %v2268
        %v2753 = vsel %vm2739, %v2168, %v2270
        %v2754 = vsel %vm2739, %v2173, %v2272
        %v2755 = vsel %vm2739, %v2176, %v2274
        %vm2756 = vcmask 515072
        %v2757 = vsel %vm2756, %v2740, %v2628
        %v2758 = vsel %vm2756, %v2741, %v2630
        %v2759 = vsel %vm2756, %v2742, %v2632
        %v2760 = vsel %vm2756, %v2743, %v2634
        %v2761 = vsel %vm2756, %v2744, %v2636
        %v2762 = vsel %vm2756, %v2745, %v2638
        %v2763 = vsel %vm2756, %v2746, %v2640
        %v2764 = vsel %vm2756, %v2747, %v2642
        %v2765 = vsel %vm2756, %v2748, %v2644
        %v2766 = vsel %vm2756, %v2749, %v2646
        %v2767 = vsel %vm2756, %v2750, %v2648
        %v2768 = vsel %vm2756, %v2751, %v2650
        %v2769 = vsel %vm2756, %v2752, %v2652
        %v2770 = vsel %vm2756, %v2753, %v2654
        %v2771 = vsel %vm2756, %v2754, %v2656
        %v2772 = vsel %vm2756, %v2755, %v2658
        %vm2773 = vcmask 588800
        %v2774 = vsel %vm2773, %v2757, %v2628
        %v2775 = vsel %vm2773, %v2758, %v2630
        %v2776 = vsel %vm2773, %v2759, %v2632
        %v2777 = vsel %vm2773, %v2760, %v2634
        %v2778 = vsel %vm2773, %v2761, %v2636
        %v2779 = vsel %vm2773, %v2762, %v2638
        %v2780 = vsel %vm2773, %v2763, %v2640
        %v2781 = vsel %vm2773, %v2764, %v2642
        %v2782 = vsel %vm2773, %v2765, %v2644
        %v2783 = vsel %vm2773, %v2766, %v2646
        %v2784 = vsel %vm2773, %v2767, %v2648
        %v2785 = vsel %vm2773, %v2768, %v2650
        %v2786 = vsel %vm2773, %v2769, %v2652
        %v2787 = vsel %vm2773, %v2770, %v2654
        %v2788 = vsel %vm2773, %v2771, %v2656
        %v2789 = vsel %vm2773, %v2772, %v2658
        %vm2790 = vcmask 662528
        %v2791 = vsel %vm2790, %v2774, %v2692
        %v2792 = vsel %vm2790, %v2775, %v2694
        %v2793 = vsel %vm2790, %v2776, %v2696
        %v2794 = vsel %vm2790, %v2777, %v2698
        %v2795 = vsel %vm2790, %v2778, %v2700
        %v2796 = vsel %vm2790, %v2779, %v2702
        %v2797 = vsel %vm2790, %v2780, %v2704
        %v2798 = vsel %vm2790, %v2781, %v2706
        %v2799 = vsel %vm2790, %v2782, %v2708
        %v2800 = vsel %vm2790, %v2783, %v2710
        %v2801 = vsel %vm2790, %v2784, %v2712
        %v2802 = vsel %vm2790, %v2785, %v2714
        %v2803 = vsel %vm2790, %v2786, %v2716
        %v2804 = vsel %vm2790, %v2787, %v2718
        %v2805 = vsel %vm2790, %v2788, %v2720
        %v2806 = vsel %vm2790, %v2789, %v2722
        %vm2807 = vcmask 736256
        %v2808 = vsel %vm2807, %v2791, %v2692
        %v2809 = vsel %vm2807, %v2792, %v2694
        %v2810 = vsel %vm2807, %v2793, %v2696
        %v2811 = vsel %vm2807, %v2794, %v2698
        %v2812 = vsel %vm2807, %v2795, %v2700
        %v2813 = vsel %vm2807, %v2796, %v2702
        %v2814 = vsel %vm2807, %v2797, %v2704
        %v2815 = vsel %vm2807, %v2798, %v2706
        %v2816 = vsel %vm2807, %v2799, %v2708
        %v2817 = vsel %vm2807, %v2800, %v2710
        %v2818 = vsel %vm2807, %v2801, %v2712
        %v2819 = vsel %vm2807, %v2802, %v2714
        %v2820 = vsel %vm2807, %v2803, %v2716
        %v2821 = vsel %vm2807, %v2804, %v2718
        %v2822 = vsel %vm2807, %v2805, %v2720
        %v2823 = vsel %vm2807, %v2806, %v2722
        %vm2824 = vcmask 809984
        %v2825 = vsel %vm2824, %v2808, 0.0
        %v2826 = vsel %vm2824, %v2809, 0.0
        %v2827 = vsel %vm2824, %v2810, 0.0
        %v2828 = vsel %vm2824, %v2811, 0.0
        %v2829 = vsel %vm2824, %v2812, 0.0
        %v2830 = vsel %vm2824, %v2813, 0.0
        %v2831 = vsel %vm2824, %v2814, 0.0
        %v2832 = vsel %vm2824, %v2815, 0.0
        %v2833 = vsel %vm2824, %v2816, 0.0
        %v2834 = vsel %vm2824, %v2817, 0.0
        %v2835 = vsel %vm2824, %v2818, 0.0
        %v2836 = vsel %vm2824, %v2819, 0.0
        %v2837 = vsel %vm2824, %v2820, 0.0
        %v2838 = vsel %vm2824, %v2821, 0.0
        %v2839 = vsel %vm2824, %v2822, 0.0
        %v2840 = vsel %vm2824, %v2823, 0.0
        %2841 = vst [vmem:[%s284] sm:$0xff] %v2825
        %2842 = vst [vmem:[%s284 + $0x8] sm:$0xff] %v2826
        %2843 = vst [vmem:[%s284 + $0x10] sm:$0xff] %v2827
        %2844 = vst [vmem:[%s284 + $0x18] sm:$0xff] %v2828
        %2845 = vst [vmem:[%s284 + $0x20] sm:$0xff] %v2829
        %2846 = vst [vmem:[%s284 + $0x28] sm:$0xff] %v2830
        %2847 = vst [vmem:[%s284 + $0x30] sm:$0xff] %v2831
        %2848 = vst [vmem:[%s284 + $0x38] sm:$0xff] %v2832
        %2849 = vst [vmem:[%s284 + $0x40] sm:$0xff] %v2833
        %2850 = vst [vmem:[%s284 + $0x48] sm:$0xff] %v2834
        %2851 = vst [vmem:[%s284 + $0x50] sm:$0xff] %v2835
        %2852 = vst [vmem:[%s284 + $0x58] sm:$0xff] %v2836
        %2853 = vst [vmem:[%s284 + $0x60] sm:$0xff] %v2837
        %2854 = vst [vmem:[%s284 + $0x68] sm:$0xff] %v2838
        %2855 = vst [vmem:[%s284 + $0x70] sm:$0xff] %v2839
        %2856 = vst [vmem:[%s284 + $0x78] sm:$0xff] %v2840
        %s2857 = sand.u32 %s180, 1
        %s2858 = scalar_lea.sflag [#allocation3], %s2857
        %s2859 = sand.u32 %s180, 1
        %s2860 = smul.addr %s2859, 128
        %s2861 = scalar_lea.vmem [#allocation2], %s2860
        // Predicated region
        $region45: #{tpu_custom_call.1} parent=43 // pred_check
          %p2862 = pneg %p190
        $region46: #{tpu_custom_call.1} parent=43 // pred_check_branch
          %2864 = sbr.rel (%p2862) target = $region48
        $region47: #{tpu_custom_call.1} parent=43 // pred_region
          %s2865 = smul.u32 16, %s24
          %s2867 = ssub.s32 2048, 2048
          %2868 = vsyncadd %s2858, %s2867
          %s2869 = smul.addr %s25, 32
          %s2870 = sadd.s32 %s2865, %s2869
          %s2871 = smul.addr %s2870, 128
          %s2872 = scalar_lea.hbm %s6, %s2871
          %s2873 = sshll.u32 %s2861, 4
          %s2874 = int_to_ptr.vmem [resolvable:$true] %s2873
          %2879 = dma.vmem_to_hbm [thread:$0]  %s2874, 2048, %s2872, %s2858, 128, 128, 8
        $region48: #{tpu_custom_call.1} parent=43 // pred_fallthru
          _
      $region44: #{tpu_custom_call.1} parent=5 // pred_fallthru
        _
      %p2880 = scmp.le.s32.totalorder 2, %s15
      // Predicated region
      $region49: #{tpu_custom_call.1} parent=5 // pred_check
        %p2881 = pneg %p2880
      $region50: #{tpu_custom_call.1} parent=5 // pred_check_branch
        %2883 = sbr.rel (%p2881) target = $region52
      $region51: #{tpu_custom_call.1} parent=5 // pred_region
        %s2884 = ssub.s32 %s15, 2
        // Predicated region
        $region53: #{tpu_custom_call.1} parent=51 // pred_check
          %p2885 = pneg %p196
        $region54: #{tpu_custom_call.1} parent=51 // pred_check_branch
          %2887 = sbr.rel (%p2885) target = $region56
        $region55: #{tpu_custom_call.1} parent=51 // pred_region
          %s2888 = sand.u32 %s181, 1
          %s2889 = scalar_lea.sflag [#allocation3], %s2888
          %s2890 = sand.u32 %s181, 1
          %s2891 = smul.addr %s2890, 128
          %s2892 = scalar_lea.vmem [#allocation2], %s2891
          %2893 = dma.done %s2889, 2048
        $region56: #{tpu_custom_call.1} parent=51 // pred_fallthru
          _
      $region52: #{tpu_custom_call.1} parent=5 // pred_fallthru
        _
    $region6: #{tpu_custom_call.1} parent=1 // loop_footer
      %s19 = sadd.s32 1, %s15
    $region7: #{tpu_custom_call.1} parent=1 // loop_footer_branch
      %14 = sbr.rel target = $region3
    $region8: #{tpu_custom_call.1} parent=1 // loop_exit
      _
    %2894 = vsyncpa [#allocation3], 1
    %s2895 = scalar_lea.sflag [#allocation3], 1
    %2896 = vsyncpa %s2895, 1

// kernel: tpu_custom_call.1
$region0: #{tpu_custom_call.1}
  #allocation0 [shape = 'u32[]', space=smem, size = 0x4, offset = 0x4, fixed_abs, tag = 'smem constant byte address 0x4 - core index']
  #allocation1 [shape = 'u32[144,128]{1,0:T(1,128)}', space=vmem, size = 0x12000, scoped, tag = 'internal scratch']
  %s0 = inlined_call_operand.vmem [shape: bf16[2,2,10,18,32], index: 0, kind: input, shape index: {}]
  %s1 = inlined_call_operand.vmem [shape: bf16[288,32], index: 1, kind: input, shape index: {}]
  %s2 = inlined_call_operand.vmem [shape: f32[1,32], index: 2, kind: input, shape index: {}]
  %s3 = inlined_call_operand.vmem [shape: bf16[32,63], index: 3, kind: input, shape index: {}]
  %s4 = inlined_call_operand.vmem [shape: f32[1,63], index: 4, kind: input, shape index: {}]
  %s5 = inlined_call_operand.vmem [shape: f32[256,36], index: 5, kind: input, shape index: {}]
  %s6 = inlined_call_operand.hbm [shape: f32[2,256,128], index: 6, kind: output, shape index: {}]
  %s7 = sld [smem:[#allocation0]]
  $region57: #{tpu_custom_call.1} parent=0
    _
  %s9 = ssub.s32 1, %s7
  %s10 = scalar_select 0, %s9, %s7
  $region1: #{tpu_custom_call.1} parent=0
    #allocation2 [shape = 'u8[131072]{0}', space=vmem, size = 0x20000, scoped, tag = 'output window, operand 0']
    #allocation3 [shape = 's32[2]{0}', space=sflag, size = 0x8, scoped, tag = 'scoped memory for tpu_custom_call.1']
    %11 = vsyncpa [#allocation3], 0
    %s12 = scalar_lea.sflag [#allocation3], 1
    %13 = vsyncpa %s12, 0
    loop: start=0, step=1, limit=6
    $region2: #{tpu_custom_call.1} parent=1 // loop_pre_header
      _
    $region3: #{tpu_custom_call.1} parent=1 // loop_header
      %s15 = sphi 0, %s19
      %p16 = scmp.ge.s32.totalorder %s15, 6
      %s22 = sphi 0, %s34
      %s23 = sphi 0, %s30
      %s24 = sphi 0, %s22
      %s25 = sphi 0, %s23
      %s26 = sphi 0, %s24
      %s27 = sphi 0, %s25
      %s39 = sphi 0, %s41
      %s42 = sphi 0, %s39
      %s43 = sphi 0, %s42
      %s59 = sphi 0, %s43
      %s63 = sphi 0, %s63
      %s65 = sphi 0, %s63
      %s66 = sphi 0, %s65
      %s80 = sphi 0, %s66
      %s84 = sphi 0, %s84
      %s86 = sphi 0, %s84
      %s87 = sphi 0, %s86
      %s101 = sphi 0, %s87
      %s105 = sphi 0, %s105
      %s107 = sphi 0, %s105
      %s108 = sphi 0, %s107
      %s122 = sphi 0, %s108
      %s126 = sphi 0, %s126
      %s128 = sphi 0, %s126
      %s129 = sphi 0, %s128
      %s143 = sphi 0, %s129
      %s149 = sphi 0, %s151
      %s152 = sphi 0, %s149
      %s153 = sphi 0, %s152
      %s169 = sphi 0, %s153
      %s177 = sphi 0, %s179
      %s180 = sphi 0, %s177
      %s181 = sphi 0, %s180
      %s197 = sphi 0, %s181
    $region4: #{tpu_custom_call.1} parent=1 // loop_header_branch
      %18 = sbr.rel (%p16) target = $region8
    $region5: #{tpu_custom_call.1} parent=1 // loop_body
      %s20 = ssub.s32 %s15, 1
      %s21 = ssub.s32 %s15, 2
      %s28 = sadd.s32 1, %s23
      %p29 = scmp.ge.s32.totalorder %s28, 2
      %s30 = scalar_select %p29, 0, %s28
      %s31 = sadd.s32 1, %s22
      %s32 = scalar_select %p29, %s31, %s22
      %p33 = scmp.ge.s32.totalorder %s32, 2
      %s34 = scalar_select %p33, 0, %s32
      %s35 = ssub.s32 %s23, %s30
      %s36 = ssub.s32 %s22, %s34
      %s37 = sor.u32 %s35, %s36
      %p38 = scmp.eq.s32.totalorder %s37, 0
      %s40 = sadd.s32 %s39, 1
      %s41 = scalar_select %p38, %s39, %s40
      %p44 = pneg %p38
      %p45 = scmp.eq.s32.totalorder %s15, 3
      %p46 = por %p44, %p45
      %p47 = scmp.ne.s32.totalorder %s39, %s42
      %p48 = scmp.eq.s32.totalorder %s15, 0
      %p49 = por %p47, %p48
      %p50 = scmp.ne.s32.totalorder %s39, %s42
      %p51 = scmp.eq.s32.totalorder %s20, 3
      %p52 = por %p50, %p51
      %p53 = scmp.ne.s32.totalorder %s42, %s43
      %p54 = scmp.eq.s32.totalorder %s20, 0
      %p55 = por %p53, %p54
      %p56 = scmp.ne.s32.totalorder %s42, %s43
      %p57 = scmp.eq.s32.totalorder %s21, 3
      %p58 = por %p56, %p57
      %p60 = scmp.ne.s32.totalorder %s43, %s59
      %p61 = scmp.eq.s32.totalorder %s21, 0
      %p62 = por %p60, %p61
      %s64 = sadd.s32 %s63, 1
      %p67 = scmp.eq.s32.totalorder %s15, 3
      %p68 = scmp.ne.s32.totalorder %s63, %s65
      %p69 = scmp.eq.s32.totalorder %s15, 0
      %p70 = por %p68, %p69
      %p71 = scmp.ne.s32.totalorder %s63, %s65
      %p72 = scmp.eq.s32.totalorder %s20, 3
      %p73 = por %p71, %p72
      %p74 = scmp.ne.s32.totalorder %s65, %s66
      %p75 = scmp.eq.s32.totalorder %s20, 0
      %p76 = por %p74, %p75
      %p77 = scmp.ne.s32.totalorder %s65, %s66
      %p78 = scmp.eq.s32.totalorder %s21, 3
      %p79 = por %p77, %p78
      %p81 = scmp.ne.s32.totalorder %s66, %s80
      %p82 = scmp.eq.s32.totalorder %s21, 0
      %p83 = por %p81, %p82
      %s85 = sadd.s32 %s84, 1
      %p88 = scmp.eq.s32.totalorder %s15, 3
      %p89 = scmp.ne.s32.totalorder %s84, %s86
      %p90 = scmp.eq.s32.totalorder %s15, 0
      %p91 = por %p89, %p90
      %p92 = scmp.ne.s32.totalorder %s84, %s86
      %p93 = scmp.eq.s32.totalorder %s20, 3
      %p94 = por %p92, %p93
      %p95 = scmp.ne.s32.totalorder %s86, %s87
      %p96 = scmp.eq.s32.totalorder %s20, 0
      %p97 = por %p95, %p96
      %p98 = scmp.ne.s32.totalorder %s86, %s87
      %p99 = scmp.eq.s32.totalorder %s21, 3
      %p100 = por %p98, %p99
      %p102 = scmp.ne.s32.totalorder %s87, %s101
      %p103 = scmp.eq.s32.totalorder %s21, 0
      %p104 = por %p102, %p103
      %s106 = sadd.s32 %s105, 1
      %p109 = scmp.eq.s32.totalorder %s15, 3
      %p110 = scmp.ne.s32.totalorder %s105, %s107
      %p111 = scmp.eq.s32.totalorder %s15, 0
      %p112 = por %p110, %p111
      %p113 = scmp.ne.s32.totalorder %s105, %s107
      %p114 = scmp.eq.s32.totalorder %s20, 3
      %p115 = por %p113, %p114
      %p116 = scmp.ne.s32.totalorder %s107, %s108
      %p117 = scmp.eq.s32.totalorder %s20, 0
      %p118 = por %p116, %p117
      %p119 = scmp.ne.s32.totalorder %s107, %s108
      %p120 = scmp.eq.s32.totalorder %s21, 3
      %p121 = por %p119, %p120
      %p123 = scmp.ne.s32.totalorder %s108, %s122
      %p124 = scmp.eq.s32.totalorder %s21, 0
      %p125 = por %p123, %p124
      %s127 = sadd.s32 %s126, 1
      %p130 = scmp.eq.s32.totalorder %s15, 3
      %p131 = scmp.ne.s32.totalorder %s126, %s128
      %p132 = scmp.eq.s32.totalorder %s15, 0
      %p133 = por %p131, %p132
      %p134 = scmp.ne.s32.totalorder %s126, %s128
      %p135 = scmp.eq.s32.totalorder %s20, 3
      %p136 = por %p134, %p135
      %p137 = scmp.ne.s32.totalorder %s128, %s129
      %p138 = scmp.eq.s32.totalorder %s20, 0
      %p139 = por %p137, %p138
      %p140 = scmp.ne.s32.totalorder %s128, %s129
      %p141 = scmp.eq.s32.totalorder %s21, 3
      %p142 = por %p140, %p141
      %p144 = scmp.ne.s32.totalorder %s129, %s143
      %p145 = scmp.eq.s32.totalorder %s21, 0
      %p146 = por %p144, %p145
      %s147 = ssub.s32 %s22, %s34
      %p148 = scmp.eq.s32.totalorder %s147, 0
      %s150 = sadd.s32 %s149, 1
      %s151 = scalar_select %p148, %s149, %s150
      %p154 = pneg %p148
      %p155 = scmp.eq.s32.totalorder %s15, 3
      %p156 = por %p154, %p155
      %p157 = scmp.ne.s32.totalorder %s149, %s152
      %p158 = scmp.eq.s32.totalorder %s15, 0
      %p159 = por %p157, %p158
      %p160 = scmp.ne.s32.totalorder %s149, %s152
      %p161 = scmp.eq.s32.totalorder %s20, 3
      %p162 = por %p160, %p161
      %p163 = scmp.ne.s32.totalorder %s152, %s153
      %p164 = scmp.eq.s32.totalorder %s20, 0
      %p165 = por %p163, %p164
      %p166 = scmp.ne.s32.totalorder %s152, %s153
      %p167 = scmp.eq.s32.totalorder %s21, 3
      %p168 = por %p166, %p167
      %p170 = scmp.ne.s32.totalorder %s153, %s169
      %p171 = scmp.eq.s32.totalorder %s21, 0
      %p172 = por %p170, %p171
      %s173 = ssub.s32 %s23, %s30
      %s174 = ssub.s32 %s22, %s34
      %s175 = sor.u32 %s173, %s174
      %p176 = scmp.eq.s32.totalorder %s175, 0
      %s178 = sadd.s32 %s177, 1
      %s179 = scalar_select %p176, %s177, %s178
      %p182 = pneg %p176
      %p183 = scmp.eq.s32.totalorder %s15, 3
      %p184 = por %p182, %p183
      %p185 = scmp.ne.s32.totalorder %s177, %s180
      %p186 = scmp.eq.s32.totalorder %s15, 0
      %p187 = por %p185, %p186
      %p188 = scmp.ne.s32.totalorder %s177, %s180
      %p189 = scmp.eq.s32.totalorder %s20, 3
      %p190 = por %p188, %p189
      %p191 = scmp.ne.s32.totalorder %s180, %s181
      %p192 = scmp.eq.s32.totalorder %s20, 0
      %p193 = por %p191, %p192
      %p194 = scmp.ne.s32.totalorder %s180, %s181
      %p195 = scmp.eq.s32.totalorder %s21, 3
      %p196 = por %p194, %p195
      %p198 = scmp.ne.s32.totalorder %s181, %s197
      %p199 = scmp.eq.s32.totalorder %s21, 0
      %p200 = por %p198, %p199
      %p201 = scmp.le.s32.totalorder 1, %s15
      %p202 = scmp.lt.s32.totalorder %s15, 5
      %p203 = pnand %p201, %p202
      %p204 = pneg %p203
      // Predicated region
      $region9: #{tpu_custom_call.1} parent=5 // pred_check
        _
      $region10: #{tpu_custom_call.1} parent=5 // pred_check_branch
        %206 = sbr.rel (%p203) target = $region12
      $region11: #{tpu_custom_call.1} parent=5 // pred_region
        %s207 = ssub.s32 %s15, 1
        // Predicated region
        $region13: #{tpu_custom_call.1} parent=11 // pred_check
          %p208 = pneg %p76
        $region14: #{tpu_custom_call.1} parent=11 // pred_check_branch
          %210 = sbr.rel (%p208) target = $region16
        $region15: #{tpu_custom_call.1} parent=11 // pred_region
          _
        $region16: #{tpu_custom_call.1} parent=11 // pred_fallthru
          _
        // Predicated region
        $region17: #{tpu_custom_call.1} parent=11 // pred_check
          %p211 = pneg %p97
        $region18: #{tpu_custom_call.1} parent=11 // pred_check_branch
          %213 = sbr.rel (%p211) target = $region20
        $region19: #{tpu_custom_call.1} parent=11 // pred_region
          _
        $region20: #{tpu_custom_call.1} parent=11 // pred_fallthru
          _
        // Predicated region
        $region21: #{tpu_custom_call.1} parent=11 // pred_check
          %p214 = pneg %p118
        $region22: #{tpu_custom_call.1} parent=11 // pred_check_branch
          %216 = sbr.rel (%p214) target = $region24
        $region23: #{tpu_custom_call.1} parent=11 // pred_region
          _
        $region24: #{tpu_custom_call.1} parent=11 // pred_fallthru
          _
        // Predicated region
        $region25: #{tpu_custom_call.1} parent=11 // pred_check
          %p217 = pneg %p139
        $region26: #{tpu_custom_call.1} parent=11 // pred_check_branch
          %219 = sbr.rel (%p217) target = $region28
        $region27: #{tpu_custom_call.1} parent=11 // pred_region
          _
        $region28: #{tpu_custom_call.1} parent=11 // pred_fallthru
          _
      $region12: #{tpu_custom_call.1} parent=5 // pred_fallthru
        _
      %p220 = scmp.lt.s32.totalorder %s15, 4
      // Predicated region
      $region29: #{tpu_custom_call.1} parent=5 // pred_check
        %p221 = pneg %p220
      $region30: #{tpu_custom_call.1} parent=5 // pred_check_branch
        %223 = sbr.rel (%p221) target = $region32
      $region31: #{tpu_custom_call.1} parent=5 // pred_region
        // Predicated region
        $region33: #{tpu_custom_call.1} parent=31 // pred_check
          %p224 = pneg %p49
        $region34: #{tpu_custom_call.1} parent=31 // pred_check_branch
          %226 = sbr.rel (%p224) target = $region36
        $region35: #{tpu_custom_call.1} parent=31 // pred_region
          %p227 = scmp.lt.s32.totalorder %s23, 1
          %s228 = scalar_select %p227, %s23, 1
          %p229 = scmp.lt.s32.totalorder %s22, 1
          %s230 = scalar_select %p229, %s22, 1
          %s231 = smul.addr %s230, 30
          %s232 = smul.addr %s228, 60
          %s233 = sadd.s32 %s231, %s232
          %s234 = smul.addr %s233, 4
          %s235 = scalar_lea.vmem %s0, %s234
        $region36: #{tpu_custom_call.1} parent=31 // pred_fallthru
          _
        // Predicated region
        $region37: #{tpu_custom_call.1} parent=31 // pred_check
          %p236 = pneg %p159
        $region38: #{tpu_custom_call.1} parent=31 // pred_check_branch
          %238 = sbr.rel (%p236) target = $region40
        $region39: #{tpu_custom_call.1} parent=31 // pred_region
          %s239 = smul.u32 16, %s22
          %p240 = scmp.lt.s32.totalorder %s239, 31
          %s241 = scalar_select %p240, %s239, 31
          %s242 = smul.addr %s241, 8
          %s243 = scalar_lea.vmem %s5, %s242
          %s244 = smul.u32 16, %s22
        $region40: #{tpu_custom_call.1} parent=31 // pred_fallthru
          _
      $region32: #{tpu_custom_call.1} parent=5 // pred_fallthru
        _
      %p245 = scmp.le.s32.totalorder 1, %s15
      %p246 = scmp.lt.s32.totalorder %s15, 5
      %p247 = pnand %p245, %p246
      %p248 = pneg %p247
      // Predicated region
      $region41: #{tpu_custom_call.1} parent=5 // pred_check
        _
      $region42: #{tpu_custom_call.1} parent=5 // pred_check_branch
        %250 = sbr.rel (%p247) target = $region44
      $region43: #{tpu_custom_call.1} parent=5 // pred_region
        %s251 = ssub.s32 %s15, 1
        %p252 = scmp.lt.s32.totalorder %s25, 1
        %s253 = scalar_select %p252, %s25, 1
        %p254 = scmp.lt.s32.totalorder %s24, 1
        %s255 = scalar_select %p254, %s24, 1
        %s256 = smul.addr %s255, 30
        %s257 = smul.addr %s253, 60
        %s258 = sadd.s32 %s256, %s257
        %s259 = smul.addr %s258, 4
        %s260 = scalar_lea.vmem %s0, %s259
        %p261 = pneg %p55
        %p262 = pneg %p52
        %p263 = pneg %p76
        %p264 = pneg %p73
        %p265 = pneg %p97
        %p266 = pneg %p94
        %p267 = pneg %p118
        %p268 = pneg %p115
        %p269 = pneg %p139
        %p270 = pneg %p136
        %s271 = smul.u32 16, %s24
        %p272 = scmp.lt.s32.totalorder %s271, 31
        %s273 = scalar_select %p272, %s271, 31
        %s274 = smul.addr %s273, 8
        %s275 = scalar_lea.vmem %s5, %s274
        %p276 = pneg %p165
        %p277 = pneg %p162
        %p278 = pneg %p193
        %p279 = pneg %p190
        %s280 = sand.u32 %s180, 1
        %s281 = scalar_lea.sflag [#allocation3], %s280
        %s282 = sand.u32 %s180, 1
        %s283 = smul.addr %s282, 128
        %s284 = scalar_lea.vmem [#allocation2], %s283
        %p285 = scmp.lt.s32.totalorder %s25, 1
        %s286 = scalar_select %p285, %s25, 1
        %p287 = scmp.lt.s32.totalorder %s24, 1
        %s288 = scalar_select %p287, %s24, 1
        %s289 = smul.addr %s288, 30
        %s290 = smul.addr %s286, 60
        %s291 = sadd.s32 %s289, %s290
        %s292 = smul.addr %s291, 4
        %s293 = scalar_lea.vmem %s0, %s292
        %s294 = smul.u32 16, %s24
        %p295 = scmp.lt.s32.totalorder %s294, 31
        %s296 = scalar_select %p295, %s294, 31
        %s297 = smul.addr %s296, 8
        %s298 = scalar_lea.vmem %s5, %s297
        %s299 = smul.u32 16, %s24
        %s300 = smul.u32 16, %s24
        %v302 = vld [vmem:[%s293] sm:$0xf]
        %v303 = vld [vmem:[%s293 + $0x4] sm:$0xf]
        %v304 = vld [vmem:[%s293 + $0x8] sm:$0x1]
        %v305 = vld [vmem:[%s293 + $0xc] sm:$0xf]
        %v306 = vld [vmem:[%s293 + $0x10] sm:$0xf]
        %v307 = vld [vmem:[%s293 + $0x14] sm:$0x1]
        %v308 = vld [vmem:[%s293 + $0x18] sm:$0xf]
        %v309 = vld [vmem:[%s293 + $0x1c] sm:$0xf]
        %v310 = vld [vmem:[%s293 + $0x20] sm:$0x1]
        %v311 = vld [vmem:[%s293 + $0x24] sm:$0xf]
        %v312 = vld [vmem:[%s293 + $0x28] sm:$0xf]
        %v313 = vld [vmem:[%s293 + $0x2c] sm:$0x1]
        %v314 = vld [vmem:[%s293 + $0x30] sm:$0xf]
        %v315 = vld [vmem:[%s293 + $0x34] sm:$0xf]
        %v316 = vld [vmem:[%s293 + $0x38] sm:$0x1]
        %v317 = vld [vmem:[%s293 + $0x3c] sm:$0xf]
        %v318 = vld [vmem:[%s293 + $0x40] sm:$0xf]
        %v319 = vld [vmem:[%s293 + $0x44] sm:$0x1]
        %v320 = vld [vmem:[%s293 + $0x48] sm:$0xf]
        %v321 = vld [vmem:[%s293 + $0x4c] sm:$0xf]
        %v322 = vld [vmem:[%s293 + $0x50] sm:$0x1]
        %v323 = vld [vmem:[%s293 + $0x54] sm:$0xf]
        %v324 = vld [vmem:[%s293 + $0x58] sm:$0xf]
        %v325 = vld [vmem:[%s293 + $0x5c] sm:$0x1]
        %v326 = vld [vmem:[%s293 + $0x60] sm:$0xf]
        %v327 = vld [vmem:[%s293 + $0x64] sm:$0xf]
        %v328 = vld [vmem:[%s293 + $0x68] sm:$0x1]
        %v329 = vld [vmem:[%s293 + $0x6c] sm:$0xf]
        %v330 = vld [vmem:[%s293 + $0x70] sm:$0xf]
        %v331 = vld [vmem:[%s293 + $0x74] sm:$0x1]
        %v332 = vld [vmem:[%s1] sm:$0xf]
        %v333 = vld [vmem:[%s1 + $0x4] sm:$0xf]
        %v334 = vld [vmem:[%s1 + $0x8] sm:$0xf]
        %v335 = vld [vmem:[%s1 + $0xc] sm:$0xf]
        %v336 = vld [vmem:[%s1 + $0x10] sm:$0xf]
        %v337 = vld [vmem:[%s1 + $0x14] sm:$0xf]
        %v338 = vld [vmem:[%s1 + $0x18] sm:$0xf]
        %v339 = vld [vmem:[%s1 + $0x1c] sm:$0xf]
        %v340 = vld [vmem:[%s1 + $0x20] sm:$0xf]
        %v341 = vld [vmem:[%s1 + $0x24] sm:$0xf]
        %v342 = vld [vmem:[%s1 + $0x28] sm:$0xf]
        %v343 = vld [vmem:[%s1 + $0x2c] sm:$0xf]
        %v344 = vld [vmem:[%s1 + $0x30] sm:$0xf]
        %v345 = vld [vmem:[%s1 + $0x34] sm:$0xf]
        %v346 = vld [vmem:[%s1 + $0x38] sm:$0xf]
        %v347 = vld [vmem:[%s1 + $0x3c] sm:$0xf]
        %v348 = vld [vmem:[%s1 + $0x40] sm:$0xf]
        %v349 = vld [vmem:[%s1 + $0x44] sm:$0xf]
        %v350 = vld [vmem:[%s1 + $0x48] sm:$0xf]
        %v351 = vld [vmem:[%s1 + $0x4c] sm:$0xf]
        %v352 = vld [vmem:[%s1 + $0x50] sm:$0xf]
        %v353 = vld [vmem:[%s1 + $0x54] sm:$0xf]
        %v354 = vld [vmem:[%s1 + $0x58] sm:$0xf]
        %v355 = vld [vmem:[%s1 + $0x5c] sm:$0xf]
        %v356 = vld [vmem:[%s1 + $0x60] sm:$0xf]
        %v357 = vld [vmem:[%s1 + $0x64] sm:$0xf]
        %v358 = vld [vmem:[%s1 + $0x68] sm:$0xf]
        %v359 = vld [vmem:[%s1 + $0x6c] sm:$0xf]
        %v360 = vld [vmem:[%s1 + $0x70] sm:$0xf]
        %v361 = vld [vmem:[%s1 + $0x74] sm:$0xf]
        %v362 = vld [vmem:[%s1 + $0x78] sm:$0xf]
        %v363 = vld [vmem:[%s1 + $0x7c] sm:$0xf]
        %v364 = vld [vmem:[%s1 + $0x80] sm:$0xf]
        %v365 = vld [vmem:[%s1 + $0x84] sm:$0xf]
        %v366 = vld [vmem:[%s1 + $0x88] sm:$0xf]
        %v367 = vld [vmem:[%s1 + $0x8c] sm:$0xf]
        %vm368 = vsmask.f32 3328
        %vm369 = vsmask.f32 7440
        %vm370 = vmor %vm368, %vm369
        %v372 = vshrl.u32 %v302, 16
        %v374 = vrot.slane %v372, 4
        %v375 = vshll.u32 %v302, 16
        %v377 = vrot.slane %v375, 5
        %v378 = vor.u32 %v374, %v377
        %v379 = vrot.slane %v378, 4
        %v381 = vshll.u32 %v303, 16
        %v383 = vrot.slane %v381, 5
        %v384 = vsel %vm370, %v379, %v383
        %v385 = vshrl.u32 %v303, 16
        %v387 = vrot.slane %v385, 4
        %v388 = vor.u32 %v387, %v383
        %v389 = vrot.slane %v388, 4
        %v391 = vshll.u32 %v304, 16
        %v393 = vrot.slane %v391, 5
        %v394 = vsel %vm370, %v389, %v393
        %v396 = vshrl.u32 %v305, 16
        %v398 = vrot.slane %v396, 4
        %v399 = vshll.u32 %v305, 16
        %v401 = vrot.slane %v399, 5
        %v402 = vor.u32 %v398, %v401
        %v403 = vrot.slane %v402, 4
        %v405 = vshll.u32 %v306, 16
        %v407 = vrot.slane %v405, 5
        %v408 = vsel %vm370, %v403, %v407
        %v409 = vshrl.u32 %v306, 16
        %v411 = vrot.slane %v409, 4
        %v412 = vor.u32 %v411, %v407
        %v413 = vrot.slane %v412, 4
        %v415 = vshll.u32 %v307, 16
        %v417 = vrot.slane %v415, 5
        %v418 = vsel %vm370, %v413, %v417
        %v420 = vshrl.u32 %v308, 16
        %v422 = vrot.slane %v420, 4
        %v423 = vshll.u32 %v308, 16
        %v425 = vrot.slane %v423, 5
        %v426 = vor.u32 %v422, %v425
        %v427 = vrot.slane %v426, 4
        %v429 = vshll.u32 %v309, 16
        %v431 = vrot.slane %v429, 5
        %v432 = vsel %vm370, %v427, %v431
        %v433 = vshrl.u32 %v309, 16
        %v435 = vrot.slane %v433, 4
        %v436 = vor.u32 %v435, %v431
        %v437 = vrot.slane %v436, 4
        %v439 = vshll.u32 %v310, 16
        %v441 = vrot.slane %v439, 5
        %v442 = vsel %vm370, %v437, %v441
        %v444 = vshrl.u32 %v311, 16
        %v446 = vrot.slane %v444, 4
        %v447 = vshll.u32 %v311, 16
        %v449 = vrot.slane %v447, 5
        %v450 = vor.u32 %v446, %v449
        %v451 = vrot.slane %v450, 4
        %v453 = vshll.u32 %v312, 16
        %v455 = vrot.slane %v453, 5
        %v456 = vsel %vm370, %v451, %v455
        %v457 = vshrl.u32 %v312, 16
        %v459 = vrot.slane %v457, 4
        %v460 = vor.u32 %v459, %v455
        %v461 = vrot.slane %v460, 4
        %v463 = vshll.u32 %v313, 16
        %v465 = vrot.slane %v463, 5
        %v466 = vsel %vm370, %v461, %v465
        %v468 = vshrl.u32 %v314, 16
        %v470 = vrot.slane %v468, 4
        %v471 = vshll.u32 %v314, 16
        %v473 = vrot.slane %v471, 5
        %v474 = vor.u32 %v470, %v473
        %v475 = vrot.slane %v474, 4
        %v477 = vshll.u32 %v315, 16
        %v479 = vrot.slane %v477, 5
        %v480 = vsel %vm370, %v475, %v479
        %v481 = vshrl.u32 %v315, 16
        %v483 = vrot.slane %v481, 4
        %v484 = vor.u32 %v483, %v479
        %v485 = vrot.slane %v484, 4
        %v487 = vshll.u32 %v316, 16
        %v489 = vrot.slane %v487, 5
        %v490 = vsel %vm370, %v485, %v489
        %v492 = vshrl.u32 %v317, 16
        %v494 = vrot.slane %v492, 4
        %v495 = vshll.u32 %v317, 16
        %v497 = vrot.slane %v495, 5
        %v498 = vor.u32 %v494, %v497
        %v499 = vrot.slane %v498, 4
        %v501 = vshll.u32 %v318, 16
        %v503 = vrot.slane %v501, 5
        %v504 = vsel %vm370, %v499, %v503
        %v505 = vshrl.u32 %v318, 16
        %v507 = vrot.slane %v505, 4
        %v508 = vor.u32 %v507, %v503
        %v509 = vrot.slane %v508, 4
        %v511 = vshll.u32 %v319, 16
        %v513 = vrot.slane %v511, 5
        %v514 = vsel %vm370, %v509, %v513
        %v516 = vshrl.u32 %v320, 16
        %v518 = vrot.slane %v516, 4
        %v519 = vshll.u32 %v320, 16
        %v521 = vrot.slane %v519, 5
        %v522 = vor.u32 %v518, %v521
        %v523 = vrot.slane %v522, 4
        %v525 = vshll.u32 %v321, 16
        %v527 = vrot.slane %v525, 5
        %v528 = vsel %vm370, %v523, %v527
        %v529 = vshrl.u32 %v321, 16
        %v531 = vrot.slane %v529, 4
        %v532 = vor.u32 %v531, %v527
        %v533 = vrot.slane %v532, 4
        %v535 = vshll.u32 %v322, 16
        %v537 = vrot.slane %v535, 5
        %v538 = vsel %vm370, %v533, %v537
        %v540 = vshrl.u32 %v323, 16
        %v542 = vrot.slane %v540, 4
        %v543 = vshll.u32 %v323, 16
        %v545 = vrot.slane %v543, 5
        %v546 = vor.u32 %v542, %v545
        %v547 = vrot.slane %v546, 4
        %v549 = vshll.u32 %v324, 16
        %v551 = vrot.slane %v549, 5
        %v552 = vsel %vm370, %v547, %v551
        %v553 = vshrl.u32 %v324, 16
        %v555 = vrot.slane %v553, 4
        %v556 = vor.u32 %v555, %v551
        %v557 = vrot.slane %v556, 4
        %v559 = vshll.u32 %v325, 16
        %v561 = vrot.slane %v559, 5
        %v562 = vsel %vm370, %v557, %v561
        %v563 = vunpack.c.l.b16 %v384
        %v564 = vunpack.c.l.b16 %v394
        %v565 = vunpack.c.l.b16 %v408
        %v566 = vunpack.c.l.b16 %v418
        %v567 = vunpack.c.l.b16 %v432
        %v568 = vunpack.c.l.b16 %v442
        %v569 = vunpack.c.l.b16 %v456
        %v570 = vunpack.c.l.b16 %v466
        %v571 = vunpack.c.l.b16 %v480
        %v572 = vunpack.c.l.b16 %v490
        %v573 = vunpack.c.l.b16 %v504
        %v574 = vunpack.c.l.b16 %v514
        %v575 = vunpack.c.l.b16 %v528
        %v576 = vunpack.c.l.b16 %v538
        %v577 = vunpack.c.l.b16 %v552
        %v578 = vunpack.c.l.b16 %v562
        %v579 = vpack.c.b16 %v564, %v563
        %v580 = vpack.c.b16 %v566, %v565
        %v581 = vpack.c.b16 %v568, %v567
        %v582 = vpack.c.b16 %v570, %v569
        %v583 = vpack.c.b16 %v572, %v571
        %v584 = vpack.c.b16 %v574, %v573
        %v585 = vpack.c.b16 %v576, %v575
        %v586 = vpack.c.b16 %v578, %v577
        %v591 = vunpack.c.l.b16 %v336
        %v592 = vunpack.c.l.b16 %v337
        %v593 = vunpack.c.l.b16 %v338
        %v594 = vunpack.c.l.b16 %v339
        %v595 = vpack.c.b16 %v592, %v591
        %v596 = vpack.c.b16 %v594, %v593
        %vm599 = vcmask 261120
        %v601 = vsel %vm599, %v579, 0
        %v604 = vsel %vm599, %v580, 0
        %v607 = vsel %vm599, %v581, 0
        %v610 = vsel %vm599, %v582, 0
        %v613 = vsel %vm599, %v583, 0
        %v616 = vsel %vm599, %v584, 0
        %v619 = vsel %vm599, %v585, 0
        %v622 = vsel %vm599, %v586, 0
        %624 = vmatprep.subr.bf16.mxu0 0
        %625 = vmatpush1.bf16.msra.mxu0 %v595
        %626 = vmatprep.subr.bf16.mxu0 0
        %627 = vmatpush1.bf16.msra.mxu0 %v596
        %628 = vmatprep.subr.bf16.mxu0 0
        %629 = vmatpush1.bf16.msra.mxu0 0
        %630 = vmatprep.subr.bf16.mxu0 0
        %631 = vmatpush1.bf16.msra.mxu0 0
        %632 = vmatprep.subr.bf16.mxu0 0
        %633 = vmatpush1.bf16.msra.mxu0 0
        %634 = vmatprep.subr.bf16.mxu0 0
        %635 = vmatpush1.bf16.msra.mxu0 0
        %636 = vmatprep.subr.bf16.mxu0 0
        %637 = vmatpush1.bf16.msra.mxu0 0
        %638 = vmatprep.subr.bf16.mxu0 0
        %639 = vmatpush1.bf16.msra.mxu0 0
        %640 = vmatprep.subr.bf16.mxu0 0
        %641 = vmatpush1.bf16.msra.mxu0 0
        %642 = vmatprep.subr.bf16.mxu0 0
        %643 = vmatpush1.bf16.msra.mxu0 0
        %644 = vmatprep.subr.bf16.mxu0 0
        %645 = vmatpush1.bf16.msra.mxu0 0
        %646 = vmatprep.subr.bf16.mxu0 0
        %647 = vmatpush1.bf16.msra.mxu0 0
        %648 = vmatprep.subr.bf16.mxu0 0
        %649 = vmatpush1.bf16.msra.mxu0 0
        %650 = vmatprep.subr.bf16.mxu0 0
        %651 = vmatpush1.bf16.msra.mxu0 0
        %652 = vmatprep.subr.bf16.mxu0 0
        %653 = vmatpush1.bf16.msra.mxu0 0
        %654 = vmatprep.subr.bf16.mxu0 0
        %655 = vmatpush1.bf16.msra.mxu0 0
        %656 = vmatprep.mubr.bf16.mxu0 0
        %657 = vmatmul.mubr.bf16.gmra.mrb[0].mxu0 %v601
        %v658 = vpop.f32.mrb[0].mxu0
        %v659 = vadd.f32 0.0, %v658
        %v660 = vpop.f32.mrb[0].mxu0
        %v661 = vpop.f32.mrb[0].mxu0
        %v662 = vadd.f32 0.0, %v661
        %v663 = vpop.f32.mrb[0].mxu0
        %664 = vmatprep.mubr.bf16.mxu0 0
        %665 = vmatmul.mubr.bf16.gmra.mrb[0].mxu0 %v604
        %v666 = vpop.f32.mrb[0].mxu0
        %v667 = vadd.f32 0.0, %v666
        %v668 = vpop.f32.mrb[0].mxu0
        %v669 = vpop.f32.mrb[0].mxu0
        %v670 = vadd.f32 0.0, %v669
        %v671 = vpop.f32.mrb[0].mxu0
        %672 = vmatprep.mubr.bf16.mxu0 0
        %673 = vmatmul.mubr.bf16.gmra.mrb[0].mxu0 %v607
        %v674 = vpop.f32.mrb[0].mxu0
        %v675 = vadd.f32 0.0, %v674
        %v676 = vpop.f32.mrb[0].mxu0
        %v677 = vpop.f32.mrb[0].mxu0
        %v678 = vadd.f32 0.0, %v677
        %v679 = vpop.f32.mrb[0].mxu0
        %680 = vmatprep.mubr.bf16.mxu0 0
        %681 = vmatmul.mubr.bf16.gmra.mrb[0].mxu0 %v610
        %v682 = vpop.f32.mrb[0].mxu0
        %v683 = vadd.f32 0.0, %v682
        %v684 = vpop.f32.mrb[0].mxu0
        %v685 = vpop.f32.mrb[0].mxu0
        %v686 = vadd.f32 0.0, %v685
        %v687 = vpop.f32.mrb[0].mxu0
        %688 = vmatprep.mubr.bf16.mxu0 0
        %689 = vmatmul.mubr.bf16.gmra.mrb[0].mxu0 %v613
        %v690 = vpop.f32.mrb[0].mxu0
        %v691 = vadd.f32 0.0, %v690
        %v692 = vpop.f32.mrb[0].mxu0
        %v693 = vpop.f32.mrb[0].mxu0
        %v694 = vadd.f32 0.0, %v693
        %v695 = vpop.f32.mrb[0].mxu0
        %696 = vmatprep.mubr.bf16.mxu0 0
        %697 = vmatmul.mubr.bf16.gmra.mrb[0].mxu0 %v616
        %v698 = vpop.f32.mrb[0].mxu0
        %v699 = vadd.f32 0.0, %v698
        %v700 = vpop.f32.mrb[0].mxu0
        %v701 = vpop.f32.mrb[0].mxu0
        %v702 = vadd.f32 0.0, %v701
        %v703 = vpop.f32.mrb[0].mxu0
        %704 = vmatprep.mubr.bf16.mxu0 0
        %705 = vmatmul.mubr.bf16.gmra.mrb[0].mxu0 %v619
        %v706 = vpop.f32.mrb[0].mxu0
        %v707 = vadd.f32 0.0, %v706
        %v708 = vpop.f32.mrb[0].mxu0
        %v709 = vpop.f32.mrb[0].mxu0
        %v710 = vadd.f32 0.0, %v709
        %v711 = vpop.f32.mrb[0].mxu0
        %712 = vmatprep.mubr.bf16.mxu0 0
        %713 = vmatmul.mubr.bf16.gmra.mrb[0].mxu0 %v622
        %v714 = vpop.f32.mrb[0].mxu0
        %v715 = vadd.f32 0.0, %v714
        %v716 = vpop.f32.mrb[0].mxu0
        %v717 = vpop.f32.mrb[0].mxu0
        %v718 = vadd.f32 0.0, %v717
        %v719 = vpop.f32.mrb[0].mxu0
        %720 = vdwg.mxu0
        %v737 = vunpack.c.l.b16 %v302
        %v738 = vunpack.c.l.b16 %v303
        %v739 = vunpack.c.l.b16 %v305
        %v740 = vunpack.c.l.b16 %v306
        %v741 = vunpack.c.l.b16 %v308
        %v742 = vunpack.c.l.b16 %v309
        %v743 = vunpack.c.l.b16 %v311
        %v744 = vunpack.c.l.b16 %v312
        %v745 = vunpack.c.l.b16 %v314
        %v746 = vunpack.c.l.b16 %v315
        %v747 = vunpack.c.l.b16 %v317
        %v748 = vunpack.c.l.b16 %v318
        %v749 = vunpack.c.l.b16 %v320
        %v750 = vunpack.c.l.b16 %v321
        %v751 = vunpack.c.l.b16 %v323
        %v752 = vunpack.c.l.b16 %v324
        %v753 = vpack.c.b16 %v738, %v737
        %v754 = vpack.c.b16 %v740, %v739
        %v755 = vpack.c.b16 %v742, %v741
        %v756 = vpack.c.b16 %v744, %v743
        %v757 = vpack.c.b16 %v746, %v745
        %v758 = vpack.c.b16 %v748, %v747
        %v759 = vpack.c.b16 %v750, %v749
        %v760 = vpack.c.b16 %v752, %v751
        %v765 = vunpack.c.l.b16 %v332
        %v766 = vunpack.c.l.b16 %v333
        %v767 = vunpack.c.l.b16 %v334
        %v768 = vunpack.c.l.b16 %v335
        %v769 = vpack.c.b16 %v766, %v765
        %v770 = vpack.c.b16 %v768, %v767
        %v774 = vsel %vm599, %v753, 0
        %v777 = vsel %vm599, %v754, 0
        %v780 = vsel %vm599, %v755, 0
        %v783 = vsel %vm599, %v756, 0
        %v786 = vsel %vm599, %v757, 0
        %v789 = vsel %vm599, %v758, 0
        %v792 = vsel %vm599, %v759, 0
        %v795 = vsel %vm599, %v760, 0
        %797 = vmatprep.subr.bf16.mxu0 0
        %798 = vmatpush1.bf16.msra.mxu0 %v769
        %799 = vmatprep.subr.bf16.mxu0 0
        %800 = vmatpush1.bf16.msra.mxu0 %v770
        %801 = vmatprep.subr.bf16.mxu0 0
        %802 = vmatpush1.bf16.msra.mxu0 0
        %803 = vmatprep.subr.bf16.mxu0 0
        %804 = vmatpush1.bf16.msra.mxu0 0
        %805 = vmatprep.subr.bf16.mxu0 0
        %806 = vmatpush1.bf16.msra.mxu0 0
        %807 = vmatprep.subr.bf16.mxu0 0
        %808 = vmatpush1.bf16.msra.mxu0 0
        %809 = vmatprep.subr.bf16.mxu0 0
        %810 = vmatpush1.bf16.msra.mxu0 0
        %811 = vmatprep.subr.bf16.mxu0 0
        %812 = vmatpush1.bf16.msra.mxu0 0
        %813 = vmatprep.subr.bf16.mxu0 0
        %814 = vmatpush1.bf16.msra.mxu0 0
        %815 = vmatprep.subr.bf16.mxu0 0
        %816 = vmatpush1.bf16.msra.mxu0 0
        %817 = vmatprep.subr.bf16.mxu0 0
        %818 = vmatpush1.bf16.msra.mxu0 0
        %819 = vmatprep.subr.bf16.mxu0 0
        %820 = vmatpush1.bf16.msra.mxu0 0
        %821 = vmatprep.subr.bf16.mxu0 0
        %822 = vmatpush1.bf16.msra.mxu0 0
        %823 = vmatprep.subr.bf16.mxu0 0
        %824 = vmatpush1.bf16.msra.mxu0 0
        %825 = vmatprep.subr.bf16.mxu0 0
        %826 = vmatpush1.bf16.msra.mxu0 0
        %827 = vmatprep.subr.bf16.mxu0 0
        %828 = vmatpush1.bf16.msra.mxu0 0
        %829 = vmatprep.mubr.bf16.mxu0 0
        %830 = vmatmul.mubr.bf16.gmra.mrb[0].mxu0 %v774
        %v831 = vpop.f32.mrb[0].mxu0
        %v832 = vadd.f32 %v659, %v831
        %v833 = vpop.f32.mrb[0].mxu0
        %v834 = vpop.f32.mrb[0].mxu0
        %v835 = vadd.f32 %v662, %v834
        %v836 = vpop.f32.mrb[0].mxu0
        %837 = vmatprep.mubr.bf16.mxu0 0
        %838 = vmatmul.mubr.bf16.gmra.mrb[0].mxu0 %v777
        %v839 = vpop.f32.mrb[0].mxu0
        %v840 = vadd.f32 %v667, %v839
        %v841 = vpop.f32.mrb[0].mxu0
        %v842 = vpop.f32.mrb[0].mxu0
        %v843 = vadd.f32 %v670, %v842
        %v844 = vpop.f32.mrb[0].mxu0
        %845 = vmatprep.mubr.bf16.mxu0 0
        %846 = vmatmul.mubr.bf16.gmra.mrb[0].mxu0 %v780
        %v847 = vpop.f32.mrb[0].mxu0
        %v848 = vadd.f32 %v675, %v847
        %v849 = vpop.f32.mrb[0].mxu0
        %v850 = vpop.f32.mrb[0].mxu0
        %v851 = vadd.f32 %v678, %v850
        %v852 = vpop.f32.mrb[0].mxu0
        %853 = vmatprep.mubr.bf16.mxu0 0
        %854 = vmatmul.mubr.bf16.gmra.mrb[0].mxu0 %v783
        %v855 = vpop.f32.mrb[0].mxu0
        %v856 = vadd.f32 %v683, %v855
        %v857 = vpop.f32.mrb[0].mxu0
        %v858 = vpop.f32.mrb[0].mxu0
        %v859 = vadd.f32 %v686, %v858
        %v860 = vpop.f32.mrb[0].mxu0
        %861 = vmatprep.mubr.bf16.mxu0 0
        %862 = vmatmul.mubr.bf16.gmra.mrb[0].mxu0 %v786
        %v863 = vpop.f32.mrb[0].mxu0
        %v864 = vadd.f32 %v691, %v863
        %v865 = vpop.f32.mrb[0].mxu0
        %v866 = vpop.f32.mrb[0].mxu0
        %v867 = vadd.f32 %v694, %v866
        %v868 = vpop.f32.mrb[0].mxu0
        %869 = vmatprep.mubr.bf16.mxu0 0
        %870 = vmatmul.mubr.bf16.gmra.mrb[0].mxu0 %v789
        %v871 = vpop.f32.mrb[0].mxu0
        %v872 = vadd.f32 %v699, %v871
        %v873 = vpop.f32.mrb[0].mxu0
        %v874 = vpop.f32.mrb[0].mxu0
        %v875 = vadd.f32 %v702, %v874
        %v876 = vpop.f32.mrb[0].mxu0
        %877 = vmatprep.mubr.bf16.mxu0 0
        %878 = vmatmul.mubr.bf16.gmra.mrb[0].mxu0 %v792
        %v879 = vpop.f32.mrb[0].mxu0
        %v880 = vadd.f32 %v707, %v879
        %v881 = vpop.f32.mrb[0].mxu0
        %v882 = vpop.f32.mrb[0].mxu0
        %v883 = vadd.f32 %v710, %v882
        %v884 = vpop.f32.mrb[0].mxu0
        %885 = vmatprep.mubr.bf16.mxu0 0
        %886 = vmatmul.mubr.bf16.gmra.mrb[0].mxu0 %v795
        %v887 = vpop.f32.mrb[0].mxu0
        %v888 = vadd.f32 %v715, %v887
        %v889 = vpop.f32.mrb[0].mxu0
        %v890 = vpop.f32.mrb[0].mxu0
        %v891 = vadd.f32 %v718, %v890
        %v892 = vpop.f32.mrb[0].mxu0
        %893 = vdwg.mxu0
        %vm902 = vcmask 1042432
        %vm903 = vcmask 1046532
        %vm904 = vmor %vm902, %vm903
        %v905 = vrot.slane %v302, 5
        %v906 = vrot.slane %v905, 4
        %v907 = vrot.slane %v303, 5
        %v908 = vsel %vm904, %v906, %v907
        %v909 = vrot.slane %v907, 4
        %v910 = vrot.slane %v304, 5
        %v911 = vsel %vm904, %v909, %v910
        %v912 = vrot.slane %v305, 5
        %v913 = vrot.slane %v912, 4
        %v914 = vrot.slane %v306, 5
        %v915 = vsel %vm904, %v913, %v914
        %v916 = vrot.slane %v914, 4
        %v917 = vrot.slane %v307, 5
        %v918 = vsel %vm904, %v916, %v917
        %v919 = vrot.slane %v308, 5
        %v920 = vrot.slane %v919, 4
        %v921 = vrot.slane %v309, 5
        %v922 = vsel %vm904, %v920, %v921
        %v923 = vrot.slane %v921, 4
        %v924 = vrot.slane %v310, 5
        %v925 = vsel %vm904, %v923, %v924
        %v926 = vrot.slane %v311, 5
        %v927 = vrot.slane %v926, 4
        %v928 = vrot.slane %v312, 5
        %v929 = vsel %vm904, %v927, %v928
        %v930 = vrot.slane %v928, 4
        %v931 = vrot.slane %v313, 5
        %v932 = vsel %vm904, %v930, %v931
        %v933 = vrot.slane %v314, 5
        %v934 = vrot.slane %v933, 4
        %v935 = vrot.slane %v315, 5
        %v936 = vsel %vm904, %v934, %v935
        %v937 = vrot.slane %v935, 4
        %v938 = vrot.slane %v316, 5
        %v939 = vsel %vm904, %v937, %v938
        %v940 = vrot.slane %v317, 5
        %v941 = vrot.slane %v940, 4
        %v942 = vrot.slane %v318, 5
        %v943 = vsel %vm904, %v941, %v942
        %v944 = vrot.slane %v942, 4
        %v945 = vrot.slane %v319, 5
        %v946 = vsel %vm904, %v944, %v945
        %v947 = vrot.slane %v320, 5
        %v948 = vrot.slane %v947, 4
        %v949 = vrot.slane %v321, 5
        %v950 = vsel %vm904, %v948, %v949
        %v951 = vrot.slane %v949, 4
        %v952 = vrot.slane %v322, 5
        %v953 = vsel %vm904, %v951, %v952
        %v954 = vrot.slane %v323, 5
        %v955 = vrot.slane %v954, 4
        %v956 = vrot.slane %v324, 5
        %v957 = vsel %vm904, %v955, %v956
        %v958 = vrot.slane %v956, 4
        %v959 = vrot.slane %v325, 5
        %v960 = vsel %vm904, %v958, %v959
        %v961 = vunpack.c.l.b16 %v908
        %v962 = vunpack.c.l.b16 %v911
        %v963 = vunpack.c.l.b16 %v915
        %v964 = vunpack.c.l.b16 %v918
        %v965 = vunpack.c.l.b16 %v922
        %v966 = vunpack.c.l.b16 %v925
        %v967 = vunpack.c.l.b16 %v929
        %v968 = vunpack.c.l.b16 %v932
        %v969 = vunpack.c.l.b16 %v936
        %v970 = vunpack.c.l.b16 %v939
        %v971 = vunpack.c.l.b16 %v943
        %v972 = vunpack.c.l.b16 %v946
        %v973 = vunpack.c.l.b16 %v950
        %v974 = vunpack.c.l.b16 %v953
        %v975 = vunpack.c.l.b16 %v957
        %v976 = vunpack.c.l.b16 %v960
        %v977 = vpack.c.b16 %v962, %v961
        %v978 = vpack.c.b16 %v964, %v963
        %v979 = vpack.c.b16 %v966, %v965
        %v980 = vpack.c.b16 %v968, %v967
        %v981 = vpack.c.b16 %v970, %v969
        %v982 = vpack.c.b16 %v972, %v971
        %v983 = vpack.c.b16 %v974, %v973
        %v984 = vpack.c.b16 %v976, %v975
        %v989 = vunpack.c.l.b16 %v340
        %v990 = vunpack.c.l.b16 %v341
        %v991 = vunpack.c.l.b16 %v342
        %v992 = vunpack.c.l.b16 %v343
        %v993 = vpack.c.b16 %v990, %v989
        %v994 = vpack.c.b16 %v992, %v991
        %v998 = vsel %vm599, %v977, 0
        %v1001 = vsel %vm599, %v978, 0
        %v1004 = vsel %vm599, %v979, 0
        %v1007 = vsel %vm599, %v980, 0
        %v1010 = vsel %vm599, %v981, 0
        %v1013 = vsel %vm599, %v982, 0
        %v1016 = vsel %vm599, %v983, 0
        %v1019 = vsel %vm599, %v984, 0
        %1021 = vmatprep.subr.bf16.mxu0 0
        %1022 = vmatpush1.bf16.msra.mxu0 %v993
        %1023 = vmatprep.subr.bf16.mxu0 0
        %1024 = vmatpush1.bf16.msra.mxu0 %v994
        %1025 = vmatprep.subr.bf16.mxu0 0
        %1026 = vmatpush1.bf16.msra.mxu0 0
        %1027 = vmatprep.subr.bf16.mxu0 0
        %1028 = vmatpush1.bf16.msra.mxu0 0
        %1029 = vmatprep.subr.bf16.mxu0 0
        %1030 = vmatpush1.bf16.msra.mxu0 0
        %1031 = vmatprep.subr.bf16.mxu0 0
        %1032 = vmatpush1.bf16.msra.mxu0 0
        %1033 = vmatprep.subr.bf16.mxu0 0
        %1034 = vmatpush1.bf16.msra.mxu0 0
        %1035 = vmatprep.subr.bf16.mxu0 0
        %1036 = vmatpush1.bf16.msra.mxu0 0
        %1037 = vmatprep.subr.bf16.mxu0 0
        %1038 = vmatpush1.bf16.msra.mxu0 0
        %1039 = vmatprep.subr.bf16.mxu0 0
        %1040 = vmatpush1.bf16.msra.mxu0 0
        %1041 = vmatprep.subr.bf16.mxu0 0
        %1042 = vmatpush1.bf16.msra.mxu0 0
        %1043 = vmatprep.subr.bf16.mxu0 0
        %1044 = vmatpush1.bf16.msra.mxu0 0
        %1045 = vmatprep.subr.bf16.mxu0 0
        %1046 = vmatpush1.bf16.msra.mxu0 0
        %1047 = vmatprep.subr.bf16.mxu0 0
        %1048 = vmatpush1.bf16.msra.mxu0 0
        %1049 = vmatprep.subr.bf16.mxu0 0
        %1050 = vmatpush1.bf16.msra.mxu0 0
        %1051 = vmatprep.subr.bf16.mxu0 0
        %1052 = vmatpush1.bf16.msra.mxu0 0
        %1053 = vmatprep.mubr.bf16.mxu0 0
        %1054 = vmatmul.mubr.bf16.gmra.mrb[0].mxu0 %v998
        %v1055 = vpop.f32.mrb[0].mxu0
        %v1056 = vadd.f32 0.0, %v1055
        %v1057 = vpop.f32.mrb[0].mxu0
        %v1058 = vpop.f32.mrb[0].mxu0
        %v1059 = vadd.f32 0.0, %v1058
        %v1060 = vpop.f32.mrb[0].mxu0
        %1061 = vmatprep.mubr.bf16.mxu0 0
        %1062 = vmatmul.mubr.bf16.gmra.mrb[0].mxu0 %v1001
        %v1063 = vpop.f32.mrb[0].mxu0
        %v1064 = vadd.f32 0.0, %v1063
        %v1065 = vpop.f32.mrb[0].mxu0
        %v1066 = vpop.f32.mrb[0].mxu0
        %v1067 = vadd.f32 0.0, %v1066
        %v1068 = vpop.f32.mrb[0].mxu0
        %1069 = vmatprep.mubr.bf16.mxu0 0
        %1070 = vmatmul.mubr.bf16.gmra.mrb[0].mxu0 %v1004
        %v1071 = vpop.f32.mrb[0].mxu0
        %v1072 = vadd.f32 0.0, %v1071
        %v1073 = vpop.f32.mrb[0].mxu0
        %v1074 = vpop.f32.mrb[0].mxu0
        %v1075 = vadd.f32 0.0, %v1074
        %v1076 = vpop.f32.mrb[0].mxu0
        %1077 = vmatprep.mubr.bf16.mxu0 0
        %1078 = vmatmul.mubr.bf16.gmra.mrb[0].mxu0 %v1007
        %v1079 = vpop.f32.mrb[0].mxu0
        %v1080 = vadd.f32 0.0, %v1079
        %v1081 = vpop.f32.mrb[0].mxu0
        %v1082 = vpop.f32.mrb[0].mxu0
        %v1083 = vadd.f32 0.0, %v1082
        %v1084 = vpop.f32.mrb[0].mxu0
        %1085 = vmatprep.mubr.bf16.mxu0 0
        %1086 = vmatmul.mubr.bf16.gmra.mrb[0].mxu0 %v1010
        %v1087 = vpop.f32.mrb[0].mxu0
        %v1088 = vadd.f32 0.0, %v1087
        %v1089 = vpop.f32.mrb[0].mxu0
        %v1090 = vpop.f32.mrb[0].mxu0
        %v1091 = vadd.f32 0.0, %v1090
        %v1092 = vpop.f32.mrb[0].mxu0
        %1093 = vmatprep.mubr.bf16.mxu0 0
        %1094 = vmatmul.mubr.bf16.gmra.mrb[0].mxu0 %v1013
        %v1095 = vpop.f32.mrb[0].mxu0
        %v1096 = vadd.f32 0.0, %v1095
        %v1097 = vpop.f32.mrb[0].mxu0
        %v1098 = vpop.f32.mrb[0].mxu0
        %v1099 = vadd.f32 0.0, %v1098
        %v1100 = vpop.f32.mrb[0].mxu0
        %1101 = vmatprep.mubr.bf16.mxu0 0
        %1102 = vmatmul.mubr.bf16.gmra.mrb[0].mxu0 %v1016
        %v1103 = vpop.f32.mrb[0].mxu0
        %v1104 = vadd.f32 0.0, %v1103
        %v1105 = vpop.f32.mrb[0].mxu0
        %v1106 = vpop.f32.mrb[0].mxu0
        %v1107 = vadd.f32 0.0, %v1106
        %v1108 = vpop.f32.mrb[0].mxu0
        %1109 = vmatprep.mubr.bf16.mxu0 0
        %1110 = vmatmul.mubr.bf16.gmra.mrb[0].mxu0 %v1019
        %v1111 = vpop.f32.mrb[0].mxu0
        %v1112 = vadd.f32 0.0, %v1111
        %v1113 = vpop.f32.mrb[0].mxu0
        %v1114 = vpop.f32.mrb[0].mxu0
        %v1115 = vadd.f32 0.0, %v1114
        %v1116 = vpop.f32.mrb[0].mxu0
        %1117 = vdwg.mxu0
        %v1118 = vadd.f32 %v832, %v1056
        %v1119 = vadd.f32 %v835, %v1059
        %v1120 = vadd.f32 %v840, %v1064
        %v1121 = vadd.f32 %v843, %v1067
        %v1122 = vadd.f32 %v848, %v1072
        %v1123 = vadd.f32 %v851, %v1075
        %v1124 = vadd.f32 %v856, %v1080
        %v1125 = vadd.f32 %v859, %v1083
        %v1126 = vadd.f32 %v864, %v1088
        %v1127 = vadd.f32 %v867, %v1091
        %v1128 = vadd.f32 %v872, %v1096
        %v1129 = vadd.f32 %v875, %v1099
        %v1130 = vadd.f32 %v880, %v1104
        %v1131 = vadd.f32 %v883, %v1107
        %v1132 = vadd.f32 %v888, %v1112
        %v1133 = vadd.f32 %v891, %v1115
        %v1136 = vunpack.c.l.b16 %v326
        %v1137 = vunpack.c.l.b16 %v327
        %v1138 = vpack.c.b16 %v1137, %v1136
        %v1143 = vunpack.c.l.b16 %v344
        %v1144 = vunpack.c.l.b16 %v345
        %v1145 = vunpack.c.l.b16 %v346
        %v1146 = vunpack.c.l.b16 %v347
        %v1147 = vpack.c.b16 %v1144, %v1143
        %v1148 = vpack.c.b16 %v1146, %v1145
        %v1152 = vsel %vm599, %v1138, 0
        %1154 = vmatprep.subr.bf16.mxu0 0
        %1155 = vmatpush1.bf16.msra.mxu0 %v1147
        %1156 = vmatprep.subr.bf16.mxu0 0
        %1157 = vmatpush1.bf16.msra.mxu0 %v1148
        %1158 = vmatprep.subr.bf16.mxu0 0
        %1159 = vmatpush1.bf16.msra.mxu0 0
        %1160 = vmatprep.subr.bf16.mxu0 0
        %1161 = vmatpush1.bf16.msra.mxu0 0
        %1162 = vmatprep.subr.bf16.mxu0 0
        %1163 = vmatpush1.bf16.msra.mxu0 0
        %1164 = vmatprep.subr.bf16.mxu0 0
        %1165 = vmatpush1.bf16.msra.mxu0 0
        %1166 = vmatprep.subr.bf16.mxu0 0
        %1167 = vmatpush1.bf16.msra.mxu0 0
        %1168 = vmatprep.subr.bf16.mxu0 0
        %1169 = vmatpush1.bf16.msra.mxu0 0
        %1170 = vmatprep.subr.bf16.mxu0 0
        %1171 = vmatpush1.bf16.msra.mxu0 0
        %1172 = vmatprep.subr.bf16.mxu0 0
        %1173 = vmatpush1.bf16.msra.mxu0 0
        %1174 = vmatprep.subr.bf16.mxu0 0
        %1175 = vmatpush1.bf16.msra.mxu0 0
        %1176 = vmatprep.subr.bf16.mxu0 0
        %1177 = vmatpush1.bf16.msra.mxu0 0
        %1178 = vmatprep.subr.bf16.mxu0 0
        %1179 = vmatpush1.bf16.msra.mxu0 0
        %1180 = vmatprep.subr.bf16.mxu0 0
        %1181 = vmatpush1.bf16.msra.mxu0 0
        %1182 = vmatprep.subr.bf16.mxu0 0
        %1183 = vmatpush1.bf16.msra.mxu0 0
        %1184 = vmatprep.subr.bf16.mxu0 0
        %1185 = vmatpush1.bf16.msra.mxu0 0
        %1186 = vmatprep.mubr.bf16.mxu0 0
        %1187 = vmatmul.mubr.bf16.gmra.mrb[0].mxu0 %v777
        %v1188 = vpop.f32.mrb[0].mxu0
        %v1189 = vadd.f32 0.0, %v1188
        %v1190 = vpop.f32.mrb[0].mxu0
        %v1191 = vpop.f32.mrb[0].mxu0
        %v1192 = vadd.f32 0.0, %v1191
        %v1193 = vpop.f32.mrb[0].mxu0
        %1194 = vmatprep.mubr.bf16.mxu0 0
        %1195 = vmatmul.mubr.bf16.gmra.mrb[0].mxu0 %v780
        %v1196 = vpop.f32.mrb[0].mxu0
        %v1197 = vadd.f32 0.0, %v1196
        %v1198 = vpop.f32.mrb[0].mxu0
        %v1199 = vpop.f32.mrb[0].mxu0
        %v1200 = vadd.f32 0.0, %v1199
        %v1201 = vpop.f32.mrb[0].mxu0
        %1202 = vmatprep.mubr.bf16.mxu0 0
        %1203 = vmatmul.mubr.bf16.gmra.mrb[0].mxu0 %v783
        %v1204 = vpop.f32.mrb[0].mxu0
        %v1205 = vadd.f32 0.0, %v1204
        %v1206 = vpop.f32.mrb[0].mxu0
        %v1207 = vpop.f32.mrb[0].mxu0
        %v1208 = vadd.f32 0.0, %v1207
        %v1209 = vpop.f32.mrb[0].mxu0
        %1210 = vmatprep.mubr.bf16.mxu0 0
        %1211 = vmatmul.mubr.bf16.gmra.mrb[0].mxu0 %v786
        %v1212 = vpop.f32.mrb[0].mxu0
        %v1213 = vadd.f32 0.0, %v1212
        %v1214 = vpop.f32.mrb[0].mxu0
        %v1215 = vpop.f32.mrb[0].mxu0
        %v1216 = vadd.f32 0.0, %v1215
        %v1217 = vpop.f32.mrb[0].mxu0
        %1218 = vmatprep.mubr.bf16.mxu0 0
        %1219 = vmatmul.mubr.bf16.gmra.mrb[0].mxu0 %v789
        %v1220 = vpop.f32.mrb[0].mxu0
        %v1221 = vadd.f32 0.0, %v1220
        %v1222 = vpop.f32.mrb[0].mxu0
        %v1223 = vpop.f32.mrb[0].mxu0
        %v1224 = vadd.f32 0.0, %v1223
        %v1225 = vpop.f32.mrb[0].mxu0
        %1226 = vmatprep.mubr.bf16.mxu0 0
        %1227 = vmatmul.mubr.bf16.gmra.mrb[0].mxu0 %v792
        %v1228 = vpop.f32.mrb[0].mxu0
        %v1229 = vadd.f32 0.0, %v1228
        %v1230 = vpop.f32.mrb[0].mxu0
        %v1231 = vpop.f32.mrb[0].mxu0
        %v1232 = vadd.f32 0.0, %v1231
        %v1233 = vpop.f32.mrb[0].mxu0
        %1234 = vmatprep.mubr.bf16.mxu0 0
        %1235 = vmatmul.mubr.bf16.gmra.mrb[0].mxu0 %v795
        %v1236 = vpop.f32.mrb[0].mxu0
        %v1237 = vadd.f32 0.0, %v1236
        %v1238 = vpop.f32.mrb[0].mxu0
        %v1239 = vpop.f32.mrb[0].mxu0
        %v1240 = vadd.f32 0.0, %v1239
        %v1241 = vpop.f32.mrb[0].mxu0
        %1242 = vmatprep.mubr.bf16.mxu0 0
        %1243 = vmatmul.mubr.bf16.gmra.mrb[0].mxu0 %v1152
        %v1244 = vpop.f32.mrb[0].mxu0
        %v1245 = vadd.f32 0.0, %v1244
        %v1246 = vpop.f32.mrb[0].mxu0
        %v1247 = vpop.f32.mrb[0].mxu0
        %v1248 = vadd.f32 0.0, %v1247
        %v1249 = vpop.f32.mrb[0].mxu0
        %1250 = vdwg.mxu0
        %v1251 = vadd.f32 %v1118, %v1189
        %v1252 = vadd.f32 %v1119, %v1192
        %v1253 = vadd.f32 %v1120, %v1197
        %v1254 = vadd.f32 %v1121, %v1200
        %v1255 = vadd.f32 %v1122, %v1205
        %v1256 = vadd.f32 %v1123, %v1208
        %v1257 = vadd.f32 %v1124, %v1213
        %v1258 = vadd.f32 %v1125, %v1216
        %v1259 = vadd.f32 %v1126, %v1221
        %v1260 = vadd.f32 %v1127, %v1224
        %v1261 = vadd.f32 %v1128, %v1229
        %v1262 = vadd.f32 %v1129, %v1232
        %v1263 = vadd.f32 %v1130, %v1237
        %v1264 = vadd.f32 %v1131, %v1240
        %v1265 = vadd.f32 %v1132, %v1245
        %v1266 = vadd.f32 %v1133, %v1248
        %v1268 = vshrl.u32 %v326, 16
        %v1270 = vrot.slane %v1268, 4
        %v1271 = vshll.u32 %v326, 16
        %v1273 = vrot.slane %v1271, 5
        %v1274 = vor.u32 %v1270, %v1273
        %v1275 = vrot.slane %v1274, 4
        %v1277 = vshll.u32 %v327, 16
        %v1279 = vrot.slane %v1277, 5
        %v1280 = vsel %vm370, %v1275, %v1279
        %v1281 = vshrl.u32 %v327, 16
        %v1283 = vrot.slane %v1281, 4
        %v1284 = vor.u32 %v1283, %v1279
        %v1285 = vrot.slane %v1284, 4
        %v1287 = vshll.u32 %v328, 16
        %v1289 = vrot.slane %v1287, 5
        %v1290 = vsel %vm370, %v1285, %v1289
        %v1291 = vunpack.c.l.b16 %v1280
        %v1292 = vunpack.c.l.b16 %v1290
        %v1293 = vpack.c.b16 %v1292, %v1291
        %v1298 = vunpack.c.l.b16 %v348
        %v1299 = vunpack.c.l.b16 %v349
        %v1300 = vunpack.c.l.b16 %v350
        %v1301 = vunpack.c.l.b16 %v351
        %v1302 = vpack.c.b16 %v1299, %v1298
        %v1303 = vpack.c.b16 %v1301, %v1300
        %v1307 = vsel %vm599, %v1293, 0
        %1309 = vmatprep.subr.bf16.mxu0 0
        %1310 = vmatpush1.bf16.msra.mxu0 %v1302
        %1311 = vmatprep.subr.bf16.mxu0 0
        %1312 = vmatpush1.bf16.msra.mxu0 %v1303
        %1313 = vmatprep.subr.bf16.mxu0 0
        %1314 = vmatpush1.bf16.msra.mxu0 0
        %1315 = vmatprep.subr.bf16.mxu0 0
        %1316 = vmatpush1.bf16.msra.mxu0 0
        %1317 = vmatprep.subr.bf16.mxu0 0
        %1318 = vmatpush1.bf16.msra.mxu0 0
        %1319 = vmatprep.subr.bf16.mxu0 0
        %1320 = vmatpush1.bf16.msra.mxu0 0
        %1321 = vmatprep.subr.bf16.mxu0 0
        %1322 = vmatpush1.bf16.msra.mxu0 0
        %1323 = vmatprep.subr.bf16.mxu0 0
        %1324 = vmatpush1.bf16.msra.mxu0 0
        %1325 = vmatprep.subr.bf16.mxu0 0
        %1326 = vmatpush1.bf16.msra.mxu0 0
        %1327 = vmatprep.subr.bf16.mxu0 0
        %1328 = vmatpush1.bf16.msra.mxu0 0
        %1329 = vmatprep.subr.bf16.mxu0 0
        %1330 = vmatpush1.bf16.msra.mxu0 0
        %1331 = vmatprep.subr.bf16.mxu0 0
        %1332 = vmatpush1.bf16.msra.mxu0 0
        %1333 = vmatprep.subr.bf16.mxu0 0
        %1334 = vmatpush1.bf16.msra.mxu0 0
        %1335 = vmatprep.subr.bf16.mxu0 0
        %1336 = vmatpush1.bf16.msra.mxu0 0
        %1337 = vmatprep.subr.bf16.mxu0 0
        %1338 = vmatpush1.bf16.msra.mxu0 0
        %1339 = vmatprep.subr.bf16.mxu0 0
        %1340 = vmatpush1.bf16.msra.mxu0 0
        %1341 = vmatprep.mubr.bf16.mxu0 0
        %1342 = vmatmul.mubr.bf16.gmra.mrb[0].mxu0 %v604
        %v1343 = vpop.f32.mrb[0].mxu0
        %v1344 = vadd.f32 0.0, %v1343
        %v1345 = vpop.f32.mrb[0].mxu0
        %v1346 = vpop.f32.mrb[0].mxu0
        %v1347 = vadd.f32 0.0, %v1346
        %v1348 = vpop.f32.mrb[0].mxu0
        %1349 = vmatprep.mubr.bf16.mxu0 0
        %1350 = vmatmul.mubr.bf16.gmra.mrb[0].mxu0 %v607
        %v1351 = vpop.f32.mrb[0].mxu0
        %v1352 = vadd.f32 0.0, %v1351
        %v1353 = vpop.f32.mrb[0].mxu0
        %v1354 = vpop.f32.mrb[0].mxu0
        %v1355 = vadd.f32 0.0, %v1354
        %v1356 = vpop.f32.mrb[0].mxu0
        %1357 = vmatprep.mubr.bf16.mxu0 0
        %1358 = vmatmul.mubr.bf16.gmra.mrb[0].mxu0 %v610
        %v1359 = vpop.f32.mrb[0].mxu0
        %v1360 = vadd.f32 0.0, %v1359
        %v1361 = vpop.f32.mrb[0].mxu0
        %v1362 = vpop.f32.mrb[0].mxu0
        %v1363 = vadd.f32 0.0, %v1362
        %v1364 = vpop.f32.mrb[0].mxu0
        %1365 = vmatprep.mubr.bf16.mxu0 0
        %1366 = vmatmul.mubr.bf16.gmra.mrb[0].mxu0 %v613
        %v1367 = vpop.f32.mrb[0].mxu0
        %v1368 = vadd.f32 0.0, %v1367
        %v1369 = vpop.f32.mrb[0].mxu0
        %v1370 = vpop.f32.mrb[0].mxu0
        %v1371 = vadd.f32 0.0, %v1370
        %v1372 = vpop.f32.mrb[0].mxu0
        %1373 = vmatprep.mubr.bf16.mxu0 0
        %1374 = vmatmul.mubr.bf16.gmra.mrb[0].mxu0 %v616
        %v1375 = vpop.f32.mrb[0].mxu0
        %v1376 = vadd.f32 0.0, %v1375
        %v1377 = vpop.f32.mrb[0].mxu0
        %v1378 = vpop.f32.mrb[0].mxu0
        %v1379 = vadd.f32 0.0, %v1378
        %v1380 = vpop.f32.mrb[0].mxu0
        %1381 = vmatprep.mubr.bf16.mxu0 0
        %1382 = vmatmul.mubr.bf16.gmra.mrb[0].mxu0 %v619
        %v1383 = vpop.f32.mrb[0].mxu0
        %v1384 = vadd.f32 0.0, %v1383
        %v1385 = vpop.f32.mrb[0].mxu0
        %v1386 = vpop.f32.mrb[0].mxu0
        %v1387 = vadd.f32 0.0, %v1386
        %v1388 = vpop.f32.mrb[0].mxu0
        %1389 = vmatprep.mubr.bf16.mxu0 0
        %1390 = vmatmul.mubr.bf16.gmra.mrb[0].mxu0 %v622
        %v1391 = vpop.f32.mrb[0].mxu0
        %v1392 = vadd.f32 0.0, %v1391
        %v1393 = vpop.f32.mrb[0].mxu0
        %v1394 = vpop.f32.mrb[0].mxu0
        %v1395 = vadd.f32 0.0, %v1394
        %v1396 = vpop.f32.mrb[0].mxu0
        %1397 = vmatprep.mubr.bf16.mxu0 0
        %1398 = vmatmul.mubr.bf16.gmra.mrb[0].mxu0 %v1307
        %v1399 = vpop.f32.mrb[0].mxu0
        %v1400 = vadd.f32 0.0, %v1399
        %v1401 = vpop.f32.mrb[0].mxu0
        %v1402 = vpop.f32.mrb[0].mxu0
        %v1403 = vadd.f32 0.0, %v1402
        %v1404 = vpop.f32.mrb[0].mxu0
        %1405 = vdwg.mxu0
        %v1406 = vadd.f32 %v1251, %v1344
        %v1407 = vadd.f32 %v1252, %v1347
        %v1408 = vadd.f32 %v1253, %v1352
        %v1409 = vadd.f32 %v1254, %v1355
        %v1410 = vadd.f32 %v1255, %v1360
        %v1411 = vadd.f32 %v1256, %v1363
        %v1412 = vadd.f32 %v1257, %v1368
        %v1413 = vadd.f32 %v1258, %v1371
        %v1414 = vadd.f32 %v1259, %v1376
        %v1415 = vadd.f32 %v1260, %v1379
        %v1416 = vadd.f32 %v1261, %v1384
        %v1417 = vadd.f32 %v1262, %v1387
        %v1418 = vadd.f32 %v1263, %v1392
        %v1419 = vadd.f32 %v1264, %v1395
        %v1420 = vadd.f32 %v1265, %v1400
        %v1421 = vadd.f32 %v1266, %v1403
        %v1423 = vrot.slane %v326, 5
        %v1424 = vrot.slane %v1423, 4
        %v1425 = vrot.slane %v327, 5
        %v1426 = vsel %vm904, %v1424, %v1425
        %v1427 = vrot.slane %v1425, 4
        %v1428 = vrot.slane %v328, 5
        %v1429 = vsel %vm904, %v1427, %v1428
        %v1430 = vunpack.c.l.b16 %v1426
        %v1431 = vunpack.c.l.b16 %v1429
        %v1432 = vpack.c.b16 %v1431, %v1430
        %v1437 = vunpack.c.l.b16 %v352
        %v1438 = vunpack.c.l.b16 %v353
        %v1439 = vunpack.c.l.b16 %v354
        %v1440 = vunpack.c.l.b16 %v355
        %v1441 = vpack.c.b16 %v1438, %v1437
        %v1442 = vpack.c.b16 %v1440, %v1439
        %v1446 = vsel %vm599, %v1432, 0
        %1448 = vmatprep.subr.bf16.mxu0 0
        %1449 = vmatpush1.bf16.msra.mxu0 %v1441
        %1450 = vmatprep.subr.bf16.mxu0 0
        %1451 = vmatpush1.bf16.msra.mxu0 %v1442
        %1452 = vmatprep.subr.bf16.mxu0 0
        %1453 = vmatpush1.bf16.msra.mxu0 0
        %1454 = vmatprep.subr.bf16.mxu0 0
        %1455 = vmatpush1.bf16.msra.mxu0 0
        %1456 = vmatprep.subr.bf16.mxu0 0
        %1457 = vmatpush1.bf16.msra.mxu0 0
        %1458 = vmatprep.subr.bf16.mxu0 0
        %1459 = vmatpush1.bf16.msra.mxu0 0
        %1460 = vmatprep.subr.bf16.mxu0 0
        %1461 = vmatpush1.bf16.msra.mxu0 0
        %1462 = vmatprep.subr.bf16.mxu0 0
        %1463 = vmatpush1.bf16.msra.mxu0 0
        %1464 = vmatprep.subr.bf16.mxu0 0
        %1465 = vmatpush1.bf16.msra.mxu0 0
        %1466 = vmatprep.subr.bf16.mxu0 0
        %1467 = vmatpush1.bf16.msra.mxu0 0
        %1468 = vmatprep.subr.bf16.mxu0 0
        %1469 = vmatpush1.bf16.msra.mxu0 0
        %1470 = vmatprep.subr.bf16.mxu0 0
        %1471 = vmatpush1.bf16.msra.mxu0 0
        %1472 = vmatprep.subr.bf16.mxu0 0
        %1473 = vmatpush1.bf16.msra.mxu0 0
        %1474 = vmatprep.subr.bf16.mxu0 0
        %1475 = vmatpush1.bf16.msra.mxu0 0
        %1476 = vmatprep.subr.bf16.mxu0 0
        %1477 = vmatpush1.bf16.msra.mxu0 0
        %1478 = vmatprep.subr.bf16.mxu0 0
        %1479 = vmatpush1.bf16.msra.mxu0 0
        %1480 = vmatprep.mubr.bf16.mxu0 0
        %1481 = vmatmul.mubr.bf16.gmra.mrb[0].mxu0 %v1001
        %v1482 = vpop.f32.mrb[0].mxu0
        %v1483 = vadd.f32 0.0, %v1482
        %v1484 = vpop.f32.mrb[0].mxu0
        %v1485 = vpop.f32.mrb[0].mxu0
        %v1486 = vadd.f32 0.0, %v1485
        %v1487 = vpop.f32.mrb[0].mxu0
        %1488 = vmatprep.mubr.bf16.mxu0 0
        %1489 = vmatmul.mubr.bf16.gmra.mrb[0].mxu0 %v1004
        %v1490 = vpop.f32.mrb[0].mxu0
        %v1491 = vadd.f32 0.0, %v1490
        %v1492 = vpop.f32.mrb[0].mxu0
        %v1493 = vpop.f32.mrb[0].mxu0
        %v1494 = vadd.f32 0.0, %v1493
        %v1495 = vpop.f32.mrb[0].mxu0
        %1496 = vmatprep.mubr.bf16.mxu0 0
        %1497 = vmatmul.mubr.bf16.gmra.mrb[0].mxu0 %v1007
        %v1498 = vpop.f32.mrb[0].mxu0
        %v1499 = vadd.f32 0.0, %v1498
        %v1500 = vpop.f32.mrb[0].mxu0
        %v1501 = vpop.f32.mrb[0].mxu0
        %v1502 = vadd.f32 0.0, %v1501
        %v1503 = vpop.f32.mrb[0].mxu0
        %1504 = vmatprep.mubr.bf16.mxu0 0
        %1505 = vmatmul.mubr.bf16.gmra.mrb[0].mxu0 %v1010
        %v1506 = vpop.f32.mrb[0].mxu0
        %v1507 = vadd.f32 0.0, %v1506
        %v1508 = vpop.f32.mrb[0].mxu0
        %v1509 = vpop.f32.mrb[0].mxu0
        %v1510 = vadd.f32 0.0, %v1509
        %v1511 = vpop.f32.mrb[0].mxu0
        %1512 = vmatprep.mubr.bf16.mxu0 0
        %1513 = vmatmul.mubr.bf16.gmra.mrb[0].mxu0 %v1013
        %v1514 = vpop.f32.mrb[0].mxu0
        %v1515 = vadd.f32 0.0, %v1514
        %v1516 = vpop.f32.mrb[0].mxu0
        %v1517 = vpop.f32.mrb[0].mxu0
        %v1518 = vadd.f32 0.0, %v1517
        %v1519 = vpop.f32.mrb[0].mxu0
        %1520 = vmatprep.mubr.bf16.mxu0 0
        %1521 = vmatmul.mubr.bf16.gmra.mrb[0].mxu0 %v1016
        %v1522 = vpop.f32.mrb[0].mxu0
        %v1523 = vadd.f32 0.0, %v1522
        %v1524 = vpop.f32.mrb[0].mxu0
        %v1525 = vpop.f32.mrb[0].mxu0
        %v1526 = vadd.f32 0.0, %v1525
        %v1527 = vpop.f32.mrb[0].mxu0
        %1528 = vmatprep.mubr.bf16.mxu0 0
        %1529 = vmatmul.mubr.bf16.gmra.mrb[0].mxu0 %v1019
        %v1530 = vpop.f32.mrb[0].mxu0
        %v1531 = vadd.f32 0.0, %v1530
        %v1532 = vpop.f32.mrb[0].mxu0
        %v1533 = vpop.f32.mrb[0].mxu0
        %v1534 = vadd.f32 0.0, %v1533
        %v1535 = vpop.f32.mrb[0].mxu0
        %1536 = vmatprep.mubr.bf16.mxu0 0
        %1537 = vmatmul.mubr.bf16.gmra.mrb[0].mxu0 %v1446
        %v1538 = vpop.f32.mrb[0].mxu0
        %v1539 = vadd.f32 0.0, %v1538
        %v1540 = vpop.f32.mrb[0].mxu0
        %v1541 = vpop.f32.mrb[0].mxu0
        %v1542 = vadd.f32 0.0, %v1541
        %v1543 = vpop.f32.mrb[0].mxu0
        %1544 = vdwg.mxu0
        %v1545 = vadd.f32 %v1406, %v1483
        %v1546 = vadd.f32 %v1407, %v1486
        %v1547 = vadd.f32 %v1408, %v1491
        %v1548 = vadd.f32 %v1409, %v1494
        %v1549 = vadd.f32 %v1410, %v1499
        %v1550 = vadd.f32 %v1411, %v1502
        %v1551 = vadd.f32 %v1412, %v1507
        %v1552 = vadd.f32 %v1413, %v1510
        %v1553 = vadd.f32 %v1414, %v1515
        %v1554 = vadd.f32 %v1415, %v1518
        %v1555 = vadd.f32 %v1416, %v1523
        %v1556 = vadd.f32 %v1417, %v1526
        %v1557 = vadd.f32 %v1418, %v1531
        %v1558 = vadd.f32 %v1419, %v1534
        %v1559 = vadd.f32 %v1420, %v1539
        %v1560 = vadd.f32 %v1421, %v1542
        %v1563 = vunpack.c.l.b16 %v329
        %v1564 = vunpack.c.l.b16 %v330
        %v1565 = vpack.c.b16 %v1564, %v1563
        %v1570 = vunpack.c.l.b16 %v356
        %v1571 = vunpack.c.l.b16 %v357
        %v1572 = vunpack.c.l.b16 %v358
        %v1573 = vunpack.c.l.b16 %v359
        %v1574 = vpack.c.b16 %v1571, %v1570
        %v1575 = vpack.c.b16 %v1573, %v1572
        %v1579 = vsel %vm599, %v1565, 0
        %1581 = vmatprep.subr.bf16.mxu0 0
        %1582 = vmatpush1.bf16.msra.mxu0 %v1574
        %1583 = vmatprep.subr.bf16.mxu0 0
        %1584 = vmatpush1.bf16.msra.mxu0 %v1575
        %1585 = vmatprep.subr.bf16.mxu0 0
        %1586 = vmatpush1.bf16.msra.mxu0 0
        %1587 = vmatprep.subr.bf16.mxu0 0
        %1588 = vmatpush1.bf16.msra.mxu0 0
        %1589 = vmatprep.subr.bf16.mxu0 0
        %1590 = vmatpush1.bf16.msra.mxu0 0
        %1591 = vmatprep.subr.bf16.mxu0 0
        %1592 = vmatpush1.bf16.msra.mxu0 0
        %1593 = vmatprep.subr.bf16.mxu0 0
        %1594 = vmatpush1.bf16.msra.mxu0 0
        %1595 = vmatprep.subr.bf16.mxu0 0
        %1596 = vmatpush1.bf16.msra.mxu0 0
        %1597 = vmatprep.subr.bf16.mxu0 0
        %1598 = vmatpush1.bf16.msra.mxu0 0
        %1599 = vmatprep.subr.bf16.mxu0 0
        %1600 = vmatpush1.bf16.msra.mxu0 0
        %1601 = vmatprep.subr.bf16.mxu0 0
        %1602 = vmatpush1.bf16.msra.mxu0 0
        %1603 = vmatprep.subr.bf16.mxu0 0
        %1604 = vmatpush1.bf16.msra.mxu0 0
        %1605 = vmatprep.subr.bf16.mxu0 0
        %1606 = vmatpush1.bf16.msra.mxu0 0
        %1607 = vmatprep.subr.bf16.mxu0 0
        %1608 = vmatpush1.bf16.msra.mxu0 0
        %1609 = vmatprep.subr.bf16.mxu0 0
        %1610 = vmatpush1.bf16.msra.mxu0 0
        %1611 = vmatprep.subr.bf16.mxu0 0
        %1612 = vmatpush1.bf16.msra.mxu0 0
        %1613 = vmatprep.mubr.bf16.mxu0 0
        %1614 = vmatmul.mubr.bf16.gmra.mrb[0].mxu0 %v780
        %v1615 = vpop.f32.mrb[0].mxu0
        %v1616 = vadd.f32 0.0, %v1615
        %v1617 = vpop.f32.mrb[0].mxu0
        %v1618 = vpop.f32.mrb[0].mxu0
        %v1619 = vadd.f32 0.0, %v1618
        %v1620 = vpop.f32.mrb[0].mxu0
        %1621 = vmatprep.mubr.bf16.mxu0 0
        %1622 = vmatmul.mubr.bf16.gmra.mrb[0].mxu0 %v783
        %v1623 = vpop.f32.mrb[0].mxu0
        %v1624 = vadd.f32 0.0, %v1623
        %v1625 = vpop.f32.mrb[0].mxu0
        %v1626 = vpop.f32.mrb[0].mxu0
        %v1627 = vadd.f32 0.0, %v1626
        %v1628 = vpop.f32.mrb[0].mxu0
        %1629 = vmatprep.mubr.bf16.mxu0 0
        %1630 = vmatmul.mubr.bf16.gmra.mrb[0].mxu0 %v786
        %v1631 = vpop.f32.mrb[0].mxu0
        %v1632 = vadd.f32 0.0, %v1631
        %v1633 = vpop.f32.mrb[0].mxu0
        %v1634 = vpop.f32.mrb[0].mxu0
        %v1635 = vadd.f32 0.0, %v1634
        %v1636 = vpop.f32.mrb[0].mxu0
        %1637 = vmatprep.mubr.bf16.mxu0 0
        %1638 = vmatmul.mubr.bf16.gmra.mrb[0].mxu0 %v789
        %v1639 = vpop.f32.mrb[0].mxu0
        %v1640 = vadd.f32 0.0, %v1639
        %v1641 = vpop.f32.mrb[0].mxu0
        %v1642 = vpop.f32.mrb[0].mxu0
        %v1643 = vadd.f32 0.0, %v1642
        %v1644 = vpop.f32.mrb[0].mxu0
        %1645 = vmatprep.mubr.bf16.mxu0 0
        %1646 = vmatmul.mubr.bf16.gmra.mrb[0].mxu0 %v792
        %v1647 = vpop.f32.mrb[0].mxu0
        %v1648 = vadd.f32 0.0, %v1647
        %v1649 = vpop.f32.mrb[0].mxu0
        %v1650 = vpop.f32.mrb[0].mxu0
        %v1651 = vadd.f32 0.0, %v1650
        %v1652 = vpop.f32.mrb[0].mxu0
        %1653 = vmatprep.mubr.bf16.mxu0 0
        %1654 = vmatmul.mubr.bf16.gmra.mrb[0].mxu0 %v795
        %v1655 = vpop.f32.mrb[0].mxu0
        %v1656 = vadd.f32 0.0, %v1655
        %v1657 = vpop.f32.mrb[0].mxu0
        %v1658 = vpop.f32.mrb[0].mxu0
        %v1659 = vadd.f32 0.0, %v1658
        %v1660 = vpop.f32.mrb[0].mxu0
        %1661 = vmatprep.mubr.bf16.mxu0 0
        %1662 = vmatmul.mubr.bf16.gmra.mrb[0].mxu0 %v1152
        %v1663 = vpop.f32.mrb[0].mxu0
        %v1664 = vadd.f32 0.0, %v1663
        %v1665 = vpop.f32.mrb[0].mxu0
        %v1666 = vpop.f32.mrb[0].mxu0
        %v1667 = vadd.f32 0.0, %v1666
        %v1668 = vpop.f32.mrb[0].mxu0
        %1669 = vmatprep.mubr.bf16.mxu0 0
        %1670 = vmatmul.mubr.bf16.gmra.mrb[0].mxu0 %v1579
        %v1671 = vpop.f32.mrb[0].mxu0
        %v1672 = vadd.f32 0.0, %v1671
        %v1673 = vpop.f32.mrb[0].mxu0
        %v1674 = vpop.f32.mrb[0].mxu0
        %v1675 = vadd.f32 0.0, %v1674
        %v1676 = vpop.f32.mrb[0].mxu0
        %1677 = vdwg.mxu0
        %v1678 = vadd.f32 %v1545, %v1616
        %v1679 = vadd.f32 %v1546, %v1619
        %v1680 = vadd.f32 %v1547, %v1624
        %v1681 = vadd.f32 %v1548, %v1627
        %v1682 = vadd.f32 %v1549, %v1632
        %v1683 = vadd.f32 %v1550, %v1635
        %v1684 = vadd.f32 %v1551, %v1640
        %v1685 = vadd.f32 %v1552, %v1643
        %v1686 = vadd.f32 %v1553, %v1648
        %v1687 = vadd.f32 %v1554, %v1651
        %v1688 = vadd.f32 %v1555, %v1656
        %v1689 = vadd.f32 %v1556, %v1659
        %v1690 = vadd.f32 %v1557, %v1664
        %v1691 = vadd.f32 %v1558, %v1667
        %v1692 = vadd.f32 %v1559, %v1672
        %v1693 = vadd.f32 %v1560, %v1675
        %v1695 = vshrl.u32 %v329, 16
        %v1697 = vrot.slane %v1695, 4
        %v1698 = vshll.u32 %v329, 16
        %v1700 = vrot.slane %v1698, 5
        %v1701 = vor.u32 %v1697, %v1700
        %v1702 = vrot.slane %v1701, 4
        %v1704 = vshll.u32 %v330, 16
        %v1706 = vrot.slane %v1704, 5
        %v1707 = vsel %vm370, %v1702, %v1706
        %v1708 = vshrl.u32 %v330, 16
        %v1710 = vrot.slane %v1708, 4
        %v1711 = vor.u32 %v1710, %v1706
        %v1712 = vrot.slane %v1711, 4
        %v1714 = vshll.u32 %v331, 16
        %v1716 = vrot.slane %v1714, 5
        %v1717 = vsel %vm370, %v1712, %v1716
        %v1718 = vunpack.c.l.b16 %v1707
        %v1719 = vunpack.c.l.b16 %v1717
        %v1720 = vpack.c.b16 %v1719, %v1718
        %v1725 = vunpack.c.l.b16 %v360
        %v1726 = vunpack.c.l.b16 %v361
        %v1727 = vunpack.c.l.b16 %v362
        %v1728 = vunpack.c.l.b16 %v363
        %v1729 = vpack.c.b16 %v1726, %v1725
        %v1730 = vpack.c.b16 %v1728, %v1727
        %v1734 = vsel %vm599, %v1720, 0
        %1736 = vmatprep.subr.bf16.mxu0 0
        %1737 = vmatpush1.bf16.msra.mxu0 %v1729
        %1738 = vmatprep.subr.bf16.mxu0 0
        %1739 = vmatpush1.bf16.msra.mxu0 %v1730
        %1740 = vmatprep.subr.bf16.mxu0 0
        %1741 = vmatpush1.bf16.msra.mxu0 0
        %1742 = vmatprep.subr.bf16.mxu0 0
        %1743 = vmatpush1.bf16.msra.mxu0 0
        %1744 = vmatprep.subr.bf16.mxu0 0
        %1745 = vmatpush1.bf16.msra.mxu0 0
        %1746 = vmatprep.subr.bf16.mxu0 0
        %1747 = vmatpush1.bf16.msra.mxu0 0
        %1748 = vmatprep.subr.bf16.mxu0 0
        %1749 = vmatpush1.bf16.msra.mxu0 0
        %1750 = vmatprep.subr.bf16.mxu0 0
        %1751 = vmatpush1.bf16.msra.mxu0 0
        %1752 = vmatprep.subr.bf16.mxu0 0
        %1753 = vmatpush1.bf16.msra.mxu0 0
        %1754 = vmatprep.subr.bf16.mxu0 0
        %1755 = vmatpush1.bf16.msra.mxu0 0
        %1756 = vmatprep.subr.bf16.mxu0 0
        %1757 = vmatpush1.bf16.msra.mxu0 0
        %1758 = vmatprep.subr.bf16.mxu0 0
        %1759 = vmatpush1.bf16.msra.mxu0 0
        %1760 = vmatprep.subr.bf16.mxu0 0
        %1761 = vmatpush1.bf16.msra.mxu0 0
        %1762 = vmatprep.subr.bf16.mxu0 0
        %1763 = vmatpush1.bf16.msra.mxu0 0
        %1764 = vmatprep.subr.bf16.mxu0 0
        %1765 = vmatpush1.bf16.msra.mxu0 0
        %1766 = vmatprep.subr.bf16.mxu0 0
        %1767 = vmatpush1.bf16.msra.mxu0 0
        %1768 = vmatprep.mubr.bf16.mxu0 0
        %1769 = vmatmul.mubr.bf16.gmra.mrb[0].mxu0 %v607
        %v1770 = vpop.f32.mrb[0].mxu0
        %v1771 = vadd.f32 0.0, %v1770
        %v1772 = vpop.f32.mrb[0].mxu0
        %v1773 = vpop.f32.mrb[0].mxu0
        %v1774 = vadd.f32 0.0, %v1773
        %v1775 = vpop.f32.mrb[0].mxu0
        %1776 = vmatprep.mubr.bf16.mxu0 0
        %1777 = vmatmul.mubr.bf16.gmra.mrb[0].mxu0 %v610
        %v1778 = vpop.f32.mrb[0].mxu0
        %v1779 = vadd.f32 0.0, %v1778
        %v1780 = vpop.f32.mrb[0].mxu0
        %v1781 = vpop.f32.mrb[0].mxu0
        %v1782 = vadd.f32 0.0, %v1781
        %v1783 = vpop.f32.mrb[0].mxu0
        %1784 = vmatprep.mubr.bf16.mxu0 0
        %1785 = vmatmul.mubr.bf16.gmra.mrb[0].mxu0 %v613
        %v1786 = vpop.f32.mrb[0].mxu0
        %v1787 = vadd.f32 0.0, %v1786
        %v1788 = vpop.f32.mrb[0].mxu0
        %v1789 = vpop.f32.mrb[0].mxu0
        %v1790 = vadd.f32 0.0, %v1789
        %v1791 = vpop.f32.mrb[0].mxu0
        %1792 = vmatprep.mubr.bf16.mxu0 0
        %1793 = vmatmul.mubr.bf16.gmra.mrb[0].mxu0 %v616
        %v1794 = vpop.f32.mrb[0].mxu0
        %v1795 = vadd.f32 0.0, %v1794
        %v1796 = vpop.f32.mrb[0].mxu0
        %v1797 = vpop.f32.mrb[0].mxu0
        %v1798 = vadd.f32 0.0, %v1797
        %v1799 = vpop.f32.mrb[0].mxu0
        %1800 = vmatprep.mubr.bf16.mxu0 0
        %1801 = vmatmul.mubr.bf16.gmra.mrb[0].mxu0 %v619
        %v1802 = vpop.f32.mrb[0].mxu0
        %v1803 = vadd.f32 0.0, %v1802
        %v1804 = vpop.f32.mrb[0].mxu0
        %v1805 = vpop.f32.mrb[0].mxu0
        %v1806 = vadd.f32 0.0, %v1805
        %v1807 = vpop.f32.mrb[0].mxu0
        %1808 = vmatprep.mubr.bf16.mxu0 0
        %1809 = vmatmul.mubr.bf16.gmra.mrb[0].mxu0 %v622
        %v1810 = vpop.f32.mrb[0].mxu0
        %v1811 = vadd.f32 0.0, %v1810
        %v1812 = vpop.f32.mrb[0].mxu0
        %v1813 = vpop.f32.mrb[0].mxu0
        %v1814 = vadd.f32 0.0, %v1813
        %v1815 = vpop.f32.mrb[0].mxu0
        %1816 = vmatprep.mubr.bf16.mxu0 0
        %1817 = vmatmul.mubr.bf16.gmra.mrb[0].mxu0 %v1307
        %v1818 = vpop.f32.mrb[0].mxu0
        %v1819 = vadd.f32 0.0, %v1818
        %v1820 = vpop.f32.mrb[0].mxu0
        %v1821 = vpop.f32.mrb[0].mxu0
        %v1822 = vadd.f32 0.0, %v1821
        %v1823 = vpop.f32.mrb[0].mxu0
        %1824 = vmatprep.mubr.bf16.mxu0 0
        %1825 = vmatmul.mubr.bf16.gmra.mrb[0].mxu0 %v1734
        %v1826 = vpop.f32.mrb[0].mxu0
        %v1827 = vadd.f32 0.0, %v1826
        %v1828 = vpop.f32.mrb[0].mxu0
        %v1829 = vpop.f32.mrb[0].mxu0
        %v1830 = vadd.f32 0.0, %v1829
        %v1831 = vpop.f32.mrb[0].mxu0
        %1832 = vdwg.mxu0
        %v1833 = vadd.f32 %v1678, %v1771
        %v1834 = vadd.f32 %v1679, %v1774
        %v1835 = vadd.f32 %v1680, %v1779
        %v1836 = vadd.f32 %v1681, %v1782
        %v1837 = vadd.f32 %v1682, %v1787
        %v1838 = vadd.f32 %v1683, %v1790
        %v1839 = vadd.f32 %v1684, %v1795
        %v1840 = vadd.f32 %v1685, %v1798
        %v1841 = vadd.f32 %v1686, %v1803
        %v1842 = vadd.f32 %v1687, %v1806
        %v1843 = vadd.f32 %v1688, %v1811
        %v1844 = vadd.f32 %v1689, %v1814
        %v1845 = vadd.f32 %v1690, %v1819
        %v1846 = vadd.f32 %v1691, %v1822
        %v1847 = vadd.f32 %v1692, %v1827
        %v1848 = vadd.f32 %v1693, %v1830
        %v1850 = vrot.slane %v329, 5
        %v1851 = vrot.slane %v1850, 4
        %v1852 = vrot.slane %v330, 5
        %v1853 = vsel %vm904, %v1851, %v1852
        %v1854 = vrot.slane %v1852, 4
        %v1855 = vrot.slane %v331, 5
        %v1856 = vsel %vm904, %v1854, %v1855
        %v1857 = vunpack.c.l.b16 %v1853
        %v1858 = vunpack.c.l.b16 %v1856
        %v1859 = vpack.c.b16 %v1858, %v1857
        %v1864 = vunpack.c.l.b16 %v364
        %v1865 = vunpack.c.l.b16 %v365
        %v1866 = vunpack.c.l.b16 %v366
        %v1867 = vunpack.c.l.b16 %v367
        %v1868 = vpack.c.b16 %v1865, %v1864
        %v1869 = vpack.c.b16 %v1867, %v1866
        %v1873 = vsel %vm599, %v1859, 0
        %1875 = vmatprep.subr.bf16.mxu0 0
        %1876 = vmatpush1.bf16.msra.mxu0 %v1868
        %1877 = vmatprep.subr.bf16.mxu0 0
        %1878 = vmatpush1.bf16.msra.mxu0 %v1869
        %1879 = vmatprep.subr.bf16.mxu0 0
        %1880 = vmatpush1.bf16.msra.mxu0 0
        %1881 = vmatprep.subr.bf16.mxu0 0
        %1882 = vmatpush1.bf16.msra.mxu0 0
        %1883 = vmatprep.subr.bf16.mxu0 0
        %1884 = vmatpush1.bf16.msra.mxu0 0
        %1885 = vmatprep.subr.bf16.mxu0 0
        %1886 = vmatpush1.bf16.msra.mxu0 0
        %1887 = vmatprep.subr.bf16.mxu0 0
        %1888 = vmatpush1.bf16.msra.mxu0 0
        %1889 = vmatprep.subr.bf16.mxu0 0
        %1890 = vmatpush1.bf16.msra.mxu0 0
        %1891 = vmatprep.subr.bf16.mxu0 0
        %1892 = vmatpush1.bf16.msra.mxu0 0
        %1893 = vmatprep.subr.bf16.mxu0 0
        %1894 = vmatpush1.bf16.msra.mxu0 0
        %1895 = vmatprep.subr.bf16.mxu0 0
        %1896 = vmatpush1.bf16.msra.mxu0 0
        %1897 = vmatprep.subr.bf16.mxu0 0
        %1898 = vmatpush1.bf16.msra.mxu0 0
        %1899 = vmatprep.subr.bf16.mxu0 0
        %1900 = vmatpush1.bf16.msra.mxu0 0
        %1901 = vmatprep.subr.bf16.mxu0 0
        %1902 = vmatpush1.bf16.msra.mxu0 0
        %1903 = vmatprep.subr.bf16.mxu0 0
        %1904 = vmatpush1.bf16.msra.mxu0 0
        %1905 = vmatprep.subr.bf16.mxu0 0
        %1906 = vmatpush1.bf16.msra.mxu0 0
        %1907 = vmatprep.mubr.bf16.mxu0 0
        %1908 = vmatmul.mubr.bf16.gmra.mrb[0].mxu0 %v1004
        %v1909 = vpop.f32.mrb[0].mxu0
        %v1910 = vadd.f32 0.0, %v1909
        %v1911 = vpop.f32.mrb[0].mxu0
        %v1912 = vpop.f32.mrb[0].mxu0
        %v1913 = vadd.f32 0.0, %v1912
        %v1914 = vpop.f32.mrb[0].mxu0
        %1915 = vmatprep.mubr.bf16.mxu0 0
        %1916 = vmatmul.mubr.bf16.gmra.mrb[0].mxu0 %v1007
        %v1917 = vpop.f32.mrb[0].mxu0
        %v1918 = vadd.f32 0.0, %v1917
        %v1919 = vpop.f32.mrb[0].mxu0
        %v1920 = vpop.f32.mrb[0].mxu0
        %v1921 = vadd.f32 0.0, %v1920
        %v1922 = vpop.f32.mrb[0].mxu0
        %1923 = vmatprep.mubr.bf16.mxu0 0
        %1924 = vmatmul.mubr.bf16.gmra.mrb[0].mxu0 %v1010
        %v1925 = vpop.f32.mrb[0].mxu0
        %v1926 = vadd.f32 0.0, %v1925
        %v1927 = vpop.f32.mrb[0].mxu0
        %v1928 = vpop.f32.mrb[0].mxu0
        %v1929 = vadd.f32 0.0, %v1928
        %v1930 = vpop.f32.mrb[0].mxu0
        %1931 = vmatprep.mubr.bf16.mxu0 0
        %1932 = vmatmul.mubr.bf16.gmra.mrb[0].mxu0 %v1013
        %v1933 = vpop.f32.mrb[0].mxu0
        %v1934 = vadd.f32 0.0, %v1933
        %v1935 = vpop.f32.mrb[0].mxu0
        %v1936 = vpop.f32.mrb[0].mxu0
        %v1937 = vadd.f32 0.0, %v1936
        %v1938 = vpop.f32.mrb[0].mxu0
        %1939 = vmatprep.mubr.bf16.mxu0 0
        %1940 = vmatmul.mubr.bf16.gmra.mrb[0].mxu0 %v1016
        %v1941 = vpop.f32.mrb[0].mxu0
        %v1942 = vadd.f32 0.0, %v1941
        %v1943 = vpop.f32.mrb[0].mxu0
        %v1944 = vpop.f32.mrb[0].mxu0
        %v1945 = vadd.f32 0.0, %v1944
        %v1946 = vpop.f32.mrb[0].mxu0
        %1947 = vmatprep.mubr.bf16.mxu0 0
        %1948 = vmatmul.mubr.bf16.gmra.mrb[0].mxu0 %v1019
        %v1949 = vpop.f32.mrb[0].mxu0
        %v1950 = vadd.f32 0.0, %v1949
        %v1951 = vpop.f32.mrb[0].mxu0
        %v1952 = vpop.f32.mrb[0].mxu0
        %v1953 = vadd.f32 0.0, %v1952
        %v1954 = vpop.f32.mrb[0].mxu0
        %1955 = vmatprep.mubr.bf16.mxu0 0
        %1956 = vmatmul.mubr.bf16.gmra.mrb[0].mxu0 %v1446
        %v1957 = vpop.f32.mrb[0].mxu0
        %v1958 = vadd.f32 0.0, %v1957
        %v1959 = vpop.f32.mrb[0].mxu0
        %v1960 = vpop.f32.mrb[0].mxu0
        %v1961 = vadd.f32 0.0, %v1960
        %v1962 = vpop.f32.mrb[0].mxu0
        %1963 = vmatprep.mubr.bf16.mxu0 0
        %1964 = vmatmul.mubr.bf16.gmra.mrb[0].mxu0 %v1873
        %v1965 = vpop.f32.mrb[0].mxu0
        %v1966 = vadd.f32 0.0, %v1965
        %v1967 = vpop.f32.mrb[0].mxu0
        %v1968 = vpop.f32.mrb[0].mxu0
        %v1969 = vadd.f32 0.0, %v1968
        %v1970 = vpop.f32.mrb[0].mxu0
        %1971 = vdwg.mxu0
        %v1972 = vadd.f32 %v1833, %v1910
        %v1973 = vadd.f32 %v1834, %v1913
        %v1974 = vadd.f32 %v1835, %v1918
        %v1975 = vadd.f32 %v1836, %v1921
        %v1976 = vadd.f32 %v1837, %v1926
        %v1977 = vadd.f32 %v1838, %v1929
        %v1978 = vadd.f32 %v1839, %v1934
        %v1979 = vadd.f32 %v1840, %v1937
        %v1980 = vadd.f32 %v1841, %v1942
        %v1981 = vadd.f32 %v1842, %v1945
        %v1982 = vadd.f32 %v1843, %v1950
        %v1983 = vadd.f32 %v1844, %v1953
        %v1984 = vadd.f32 %v1845, %v1958
        %v1985 = vadd.f32 %v1846, %v1961
        %v1986 = vadd.f32 %v1847, %v1966
        %v1987 = vadd.f32 %v1848, %v1969
        %v1988 = vld [vmem:[%s2] sm:$0x1]
        %v1990 = vlaneseq
        %v1991 = vshrl.u32 %v1990, 7
        %v1992 = vsub.s32 0, %v1991
        %v1993 = vrot.slane %v1988, %v1992
        %v1995 = vadd.f32 %v1972, %v1993
        %v1996 = vadd.f32 %v1973, %v1993
        %v1997 = vadd.f32 %v1974, %v1993
        %v1998 = vadd.f32 %v1975, %v1993
        %v1999 = vadd.f32 %v1976, %v1993
        %v2000 = vadd.f32 %v1977, %v1993
        %v2001 = vadd.f32 %v1978, %v1993
        %v2002 = vadd.f32 %v1979, %v1993
        %v2003 = vadd.f32 %v1980, %v1993
        %v2004 = vadd.f32 %v1981, %v1993
        %v2005 = vadd.f32 %v1982, %v1993
        %v2006 = vadd.f32 %v1983, %v1993
        %v2007 = vadd.f32 %v1984, %v1993
        %v2008 = vadd.f32 %v1985, %v1993
        %v2009 = vadd.f32 %v1986, %v1993
        %v2010 = vadd.f32 %v1987, %v1993
        %v2011 = vmax.f32 %v1995, 0.0
        %v2012 = vmax.f32 %v1996, 0.0
        %v2013 = vmax.f32 %v1997, 0.0
        %v2014 = vmax.f32 %v1998, 0.0
        %v2015 = vmax.f32 %v1999, 0.0
        %v2016 = vmax.f32 %v2000, 0.0
        %v2017 = vmax.f32 %v2001, 0.0
        %v2018 = vmax.f32 %v2002, 0.0
        %v2019 = vmax.f32 %v2003, 0.0
        %v2020 = vmax.f32 %v2004, 0.0
        %v2021 = vmax.f32 %v2005, 0.0
        %v2022 = vmax.f32 %v2006, 0.0
        %v2023 = vmax.f32 %v2007, 0.0
        %v2024 = vmax.f32 %v2008, 0.0
        %v2025 = vmax.f32 %v2009, 0.0
        %v2026 = vmax.f32 %v2010, 0.0
        %v2027 = vpack.c.bf16 %v2012, %v2011
        %v2028 = vpack.c.bf16 %v2014, %v2013
        %v2029 = vpack.c.bf16 %v2016, %v2015
        %v2030 = vpack.c.bf16 %v2018, %v2017
        %v2031 = vpack.c.bf16 %v2020, %v2019
        %v2032 = vpack.c.bf16 %v2022, %v2021
        %v2033 = vpack.c.bf16 %v2024, %v2023
        %v2034 = vpack.c.bf16 %v2026, %v2025
        %v2035 = vld [vmem:[%s3] sm:$0xf]
        %v2036 = vld [vmem:[%s3 + $0x4] sm:$0xf]
        %v2037 = vld [vmem:[%s3 + $0x8] sm:$0xf]
        %v2038 = vld [vmem:[%s3 + $0xc] sm:$0xf]
        %v2039 = vld [vmem:[%s4] sm:$0x1]
        %v2041 = vlaneseq
        %v2042 = vshrl.u32 %v2041, 7
        %v2043 = vsub.s32 0, %v2042
        %v2044 = vrot.slane %v2039, %v2043
        %v2050 = vunpack.c.l.b16 %v2035
        %v2051 = vunpack.c.l.b16 %v2036
        %v2052 = vunpack.c.l.b16 %v2037
        %v2053 = vunpack.c.l.b16 %v2038
        %v2054 = vpack.c.b16 %v2051, %v2050
        %v2055 = vpack.c.b16 %v2053, %v2052
        %v2059 = vsel %vm599, %v2027, 0
        %v2062 = vsel %vm599, %v2028, 0
        %v2065 = vsel %vm599, %v2029, 0
        %v2068 = vsel %vm599, %v2030, 0
        %v2071 = vsel %vm599, %v2031, 0
        %v2074 = vsel %vm599, %v2032, 0
        %v2077 = vsel %vm599, %v2033, 0
        %v2080 = vsel %vm599, %v2034, 0
        %2082 = vmatprep.subr.bf16.mxu0 0
        %2083 = vmatpush1.bf16.msra.mxu0 %v2054
        %2084 = vmatprep.subr.bf16.mxu0 0
        %2085 = vmatpush1.bf16.msra.mxu0 %v2055
        %2086 = vmatprep.subr.bf16.mxu0 0
        %2087 = vmatpush1.bf16.msra.mxu0 0
        %2088 = vmatprep.subr.bf16.mxu0 0
        %2089 = vmatpush1.bf16.msra.mxu0 0
        %2090 = vmatprep.subr.bf16.mxu0 0
        %2091 = vmatpush1.bf16.msra.mxu0 0
        %2092 = vmatprep.subr.bf16.mxu0 0
        %2093 = vmatpush1.bf16.msra.mxu0 0
        %2094 = vmatprep.subr.bf16.mxu0 0
        %2095 = vmatpush1.bf16.msra.mxu0 0
        %2096 = vmatprep.subr.bf16.mxu0 0
        %2097 = vmatpush1.bf16.msra.mxu0 0
        %2098 = vmatprep.subr.bf16.mxu0 0
        %2099 = vmatpush1.bf16.msra.mxu0 0
        %2100 = vmatprep.subr.bf16.mxu0 0
        %2101 = vmatpush1.bf16.msra.mxu0 0
        %2102 = vmatprep.subr.bf16.mxu0 0
        %2103 = vmatpush1.bf16.msra.mxu0 0
        %2104 = vmatprep.subr.bf16.mxu0 0
        %2105 = vmatpush1.bf16.msra.mxu0 0
        %2106 = vmatprep.subr.bf16.mxu0 0
        %2107 = vmatpush1.bf16.msra.mxu0 0
        %2108 = vmatprep.subr.bf16.mxu0 0
        %2109 = vmatpush1.bf16.msra.mxu0 0
        %2110 = vmatprep.subr.bf16.mxu0 0
        %2111 = vmatpush1.bf16.msra.mxu0 0
        %2112 = vmatprep.subr.bf16.mxu0 0
        %2113 = vmatpush1.bf16.msra.mxu0 0
        %2114 = vmatprep.mubr.bf16.mxu0 0
        %2115 = vmatmul.mubr.bf16.gmra.mrb[0].mxu0 %v2059
        %v2116 = vpop.f32.mrb[0].mxu0
        %v2117 = vadd.f32 %v2044, %v2116
        %v2118 = vpop.f32.mrb[0].mxu0
        %v2119 = vpop.f32.mrb[0].mxu0
        %v2120 = vadd.f32 %v2044, %v2119
        %v2121 = vpop.f32.mrb[0].mxu0
        %2122 = vmatprep.mubr.bf16.mxu0 0
        %2123 = vmatmul.mubr.bf16.gmra.mrb[0].mxu0 %v2062
        %v2124 = vpop.f32.mrb[0].mxu0
        %v2125 = vadd.f32 %v2044, %v2124
        %v2126 = vpop.f32.mrb[0].mxu0
        %v2127 = vpop.f32.mrb[0].mxu0
        %v2128 = vadd.f32 %v2044, %v2127
        %v2129 = vpop.f32.mrb[0].mxu0
        %2130 = vmatprep.mubr.bf16.mxu0 0
        %2131 = vmatmul.mubr.bf16.gmra.mrb[0].mxu0 %v2065
        %v2132 = vpop.f32.mrb[0].mxu0
        %v2133 = vadd.f32 %v2044, %v2132
        %v2134 = vpop.f32.mrb[0].mxu0
        %v2135 = vpop.f32.mrb[0].mxu0
        %v2136 = vadd.f32 %v2044, %v2135
        %v2137 = vpop.f32.mrb[0].mxu0
        %2138 = vmatprep.mubr.bf16.mxu0 0
        %2139 = vmatmul.mubr.bf16.gmra.mrb[0].mxu0 %v2068
        %v2140 = vpop.f32.mrb[0].mxu0
        %v2141 = vadd.f32 %v2044, %v2140
        %v2142 = vpop.f32.mrb[0].mxu0
        %v2143 = vpop.f32.mrb[0].mxu0
        %v2144 = vadd.f32 %v2044, %v2143
        %v2145 = vpop.f32.mrb[0].mxu0
        %2146 = vmatprep.mubr.bf16.mxu0 0
        %2147 = vmatmul.mubr.bf16.gmra.mrb[0].mxu0 %v2071
        %v2148 = vpop.f32.mrb[0].mxu0
        %v2149 = vadd.f32 %v2044, %v2148
        %v2150 = vpop.f32.mrb[0].mxu0
        %v2151 = vpop.f32.mrb[0].mxu0
        %v2152 = vadd.f32 %v2044, %v2151
        %v2153 = vpop.f32.mrb[0].mxu0
        %2154 = vmatprep.mubr.bf16.mxu0 0
        %2155 = vmatmul.mubr.bf16.gmra.mrb[0].mxu0 %v2074
        %v2156 = vpop.f32.mrb[0].mxu0
        %v2157 = vadd.f32 %v2044, %v2156
        %v2158 = vpop.f32.mrb[0].mxu0
        %v2159 = vpop.f32.mrb[0].mxu0
        %v2160 = vadd.f32 %v2044, %v2159
        %v2161 = vpop.f32.mrb[0].mxu0
        %2162 = vmatprep.mubr.bf16.mxu0 0
        %2163 = vmatmul.mubr.bf16.gmra.mrb[0].mxu0 %v2077
        %v2164 = vpop.f32.mrb[0].mxu0
        %v2165 = vadd.f32 %v2044, %v2164
        %v2166 = vpop.f32.mrb[0].mxu0
        %v2167 = vpop.f32.mrb[0].mxu0
        %v2168 = vadd.f32 %v2044, %v2167
        %v2169 = vpop.f32.mrb[0].mxu0
        %2170 = vmatprep.mubr.bf16.mxu0 0
        %2171 = vmatmul.mubr.bf16.gmra.mrb[0].mxu0 %v2080
        %v2172 = vpop.f32.mrb[0].mxu0
        %v2173 = vadd.f32 %v2044, %v2172
        %v2174 = vpop.f32.mrb[0].mxu0
        %v2175 = vpop.f32.mrb[0].mxu0
        %v2176 = vadd.f32 %v2044, %v2175
        %v2177 = vpop.f32.mrb[0].mxu0
        %2178 = vdwg.mxu0
        %v2179 = vsub.f32 0.0, %v2117
        %v2180 = vsub.f32 0.0, %v2120
        %v2181 = vsub.f32 0.0, %v2125
        %v2182 = vsub.f32 0.0, %v2128
        %v2183 = vsub.f32 0.0, %v2133
        %v2184 = vsub.f32 0.0, %v2136
        %v2185 = vsub.f32 0.0, %v2141
        %v2186 = vsub.f32 0.0, %v2144
        %v2187 = vsub.f32 0.0, %v2149
        %v2188 = vsub.f32 0.0, %v2152
        %v2189 = vsub.f32 0.0, %v2157
        %v2190 = vsub.f32 0.0, %v2160
        %v2191 = vsub.f32 0.0, %v2165
        %v2192 = vsub.f32 0.0, %v2168
        %v2193 = vsub.f32 0.0, %v2173
        %v2194 = vsub.f32 0.0, %v2176
        %v2195 = vmul.f32 %v2179, 1.442695
        %v2196 = vpow.pop %v2195
        %v2197 = vmul.f32 %v2180, 1.442695
        %v2198 = vpow.pop %v2197
        %v2199 = vmul.f32 %v2181, 1.442695
        %v2200 = vpow.pop %v2199
        %v2201 = vmul.f32 %v2182, 1.442695
        %v2202 = vpow.pop %v2201
        %v2203 = vmul.f32 %v2183, 1.442695
        %v2204 = vpow.pop %v2203
        %v2205 = vmul.f32 %v2184, 1.442695
        %v2206 = vpow.pop %v2205
        %v2207 = vmul.f32 %v2185, 1.442695
        %v2208 = vpow.pop %v2207
        %v2209 = vmul.f32 %v2186, 1.442695
        %v2210 = vpow.pop %v2209
        %v2211 = vmul.f32 %v2187, 1.442695
        %v2212 = vpow.pop %v2211
        %v2213 = vmul.f32 %v2188, 1.442695
        %v2214 = vpow.pop %v2213
        %v2215 = vmul.f32 %v2189, 1.442695
        %v2216 = vpow.pop %v2215
        %v2217 = vmul.f32 %v2190, 1.442695
        %v2218 = vpow.pop %v2217
        %v2219 = vmul.f32 %v2191, 1.442695
        %v2220 = vpow.pop %v2219
        %v2221 = vmul.f32 %v2192, 1.442695
        %v2222 = vpow.pop %v2221
        %v2223 = vmul.f32 %v2193, 1.442695
        %v2224 = vpow.pop %v2223
        %v2225 = vmul.f32 %v2194, 1.442695
        %v2226 = vpow.pop %v2225
        %v2227 = vadd.f32 %v2196, 1.0
        %v2228 = vadd.f32 %v2198, 1.0
        %v2229 = vadd.f32 %v2200, 1.0
        %v2230 = vadd.f32 %v2202, 1.0
        %v2231 = vadd.f32 %v2204, 1.0
        %v2232 = vadd.f32 %v2206, 1.0
        %v2233 = vadd.f32 %v2208, 1.0
        %v2234 = vadd.f32 %v2210, 1.0
        %v2235 = vadd.f32 %v2212, 1.0
        %v2236 = vadd.f32 %v2214, 1.0
        %v2237 = vadd.f32 %v2216, 1.0
        %v2238 = vadd.f32 %v2218, 1.0
        %v2239 = vadd.f32 %v2220, 1.0
        %v2240 = vadd.f32 %v2222, 1.0
        %v2241 = vadd.f32 %v2224, 1.0
        %v2242 = vadd.f32 %v2226, 1.0
        %v2243 = vrcp.pop %v2227
        %v2244 = vmul.f32 1.0, %v2243
        %v2245 = vrcp.pop %v2228
        %v2246 = vmul.f32 1.0, %v2245
        %v2247 = vrcp.pop %v2229
        %v2248 = vmul.f32 1.0, %v2247
        %v2249 = vrcp.pop %v2230
        %v2250 = vmul.f32 1.0, %v2249
        %v2251 = vrcp.pop %v2231
        %v2252 = vmul.f32 1.0, %v2251
        %v2253 = vrcp.pop %v2232
        %v2254 = vmul.f32 1.0, %v2253
        %v2255 = vrcp.pop %v2233
        %v2256 = vmul.f32 1.0, %v2255
        %v2257 = vrcp.pop %v2234
        %v2258 = vmul.f32 1.0, %v2257
        %v2259 = vrcp.pop %v2235
        %v2260 = vmul.f32 1.0, %v2259
        %v2261 = vrcp.pop %v2236
        %v2262 = vmul.f32 1.0, %v2261
        %v2263 = vrcp.pop %v2237
        %v2264 = vmul.f32 1.0, %v2263
        %v2265 = vrcp.pop %v2238
        %v2266 = vmul.f32 1.0, %v2265
        %v2267 = vrcp.pop %v2239
        %v2268 = vmul.f32 1.0, %v2267
        %v2269 = vrcp.pop %v2240
        %v2270 = vmul.f32 1.0, %v2269
        %v2271 = vrcp.pop %v2241
        %v2272 = vmul.f32 1.0, %v2271
        %v2273 = vrcp.pop %v2242
        %v2274 = vmul.f32 1.0, %v2273
        %v2275 = vld [vmem:[%s298] sm:$0xff]
        %v2276 = vld [vmem:[%s298 + $0x8] sm:$0xff]
        %v2277 = vld [vmem:[%s298 + $0x10] sm:$0xff]
        %v2278 = vld [vmem:[%s298 + $0x18] sm:$0xff]
        %v2279 = vld [vmem:[%s298 + $0x20] sm:$0xff]
        %v2280 = vld [vmem:[%s298 + $0x28] sm:$0xff]
        %v2281 = vld [vmem:[%s298 + $0x30] sm:$0xff]
        %v2282 = vld [vmem:[%s298 + $0x38] sm:$0xff]
        %v2283 = vld [vmem:[%s298 + $0x40] sm:$0xff]
        %v2284 = vld [vmem:[%s298 + $0x48] sm:$0xff]
        %v2285 = vld [vmem:[%s298 + $0x50] sm:$0xff]
        %v2286 = vld [vmem:[%s298 + $0x58] sm:$0xff]
        %v2287 = vld [vmem:[%s298 + $0x60] sm:$0xff]
        %v2288 = vld [vmem:[%s298 + $0x68] sm:$0xff]
        %v2289 = vld [vmem:[%s298 + $0x70] sm:$0xff]
        %v2290 = vld [vmem:[%s298 + $0x78] sm:$0xff]
        %v2291 = vmul.f32 %v2117, %v2275
        %v2292 = vmul.f32 %v2120, %v2276
        %v2293 = vmul.f32 %v2125, %v2277
        %v2294 = vmul.f32 %v2128, %v2278
        %v2295 = vmul.f32 %v2133, %v2279
        %v2296 = vmul.f32 %v2136, %v2280
        %v2297 = vmul.f32 %v2141, %v2281
        %v2298 = vmul.f32 %v2144, %v2282
        %v2299 = vmul.f32 %v2149, %v2283
        %v2300 = vmul.f32 %v2152, %v2284
        %v2301 = vmul.f32 %v2157, %v2285
        %v2302 = vmul.f32 %v2160, %v2286
        %v2303 = vmul.f32 %v2165, %v2287
        %v2304 = vmul.f32 %v2168, %v2288
        %v2305 = vmul.f32 %v2173, %v2289
        %v2306 = vmul.f32 %v2176, %v2290
        %2323 = vrot.lane.b32.xlu0 %v2275, 18
        %v2324 = vpop.permute.xlu0 %2323
        %2325 = vrot.lane.b32.xlu0 %v2276, 18
        %v2326 = vpop.permute.xlu0 %2325
        %2327 = vrot.lane.b32.xlu0 %v2277, 18
        %v2328 = vpop.permute.xlu0 %2327
        %2329 = vrot.lane.b32.xlu0 %v2278, 18
        %v2330 = vpop.permute.xlu0 %2329
        %2331 = vrot.lane.b32.xlu0 %v2279, 18
        %v2332 = vpop.permute.xlu0 %2331
        %2333 = vrot.lane.b32.xlu0 %v2280, 18
        %v2334 = vpop.permute.xlu0 %2333
        %2335 = vrot.lane.b32.xlu0 %v2281, 18
        %v2336 = vpop.permute.xlu0 %2335
        %2337 = vrot.lane.b32.xlu0 %v2282, 18
        %v2338 = vpop.permute.xlu0 %2337
        %2339 = vrot.lane.b32.xlu0 %v2283, 18
        %v2340 = vpop.permute.xlu0 %2339
        %2341 = vrot.lane.b32.xlu0 %v2284, 18
        %v2342 = vpop.permute.xlu0 %2341
        %2343 = vrot.lane.b32.xlu0 %v2285, 18
        %v2344 = vpop.permute.xlu0 %2343
        %2345 = vrot.lane.b32.xlu0 %v2286, 18
        %v2346 = vpop.permute.xlu0 %2345
        %2347 = vrot.lane.b32.xlu0 %v2287, 18
        %v2348 = vpop.permute.xlu0 %2347
        %2349 = vrot.lane.b32.xlu0 %v2288, 18
        %v2350 = vpop.permute.xlu0 %2349
        %2351 = vrot.lane.b32.xlu0 %v2289, 18
        %v2352 = vpop.permute.xlu0 %2351
        %2353 = vrot.lane.b32.xlu0 %v2290, 18
        %v2354 = vpop.permute.xlu0 %2353
        %v2371 = vadd.f32 %v2291, %v2324
        %v2372 = vadd.f32 %v2292, %v2326
        %v2373 = vadd.f32 %v2293, %v2328
        %v2374 = vadd.f32 %v2294, %v2330
        %v2375 = vadd.f32 %v2295, %v2332
        %v2376 = vadd.f32 %v2296, %v2334
        %v2377 = vadd.f32 %v2297, %v2336
        %v2378 = vadd.f32 %v2298, %v2338
        %v2379 = vadd.f32 %v2299, %v2340
        %v2380 = vadd.f32 %v2300, %v2342
        %v2381 = vadd.f32 %v2301, %v2344
        %v2382 = vadd.f32 %v2302, %v2346
        %v2383 = vadd.f32 %v2303, %v2348
        %v2384 = vadd.f32 %v2304, %v2350
        %v2385 = vadd.f32 %v2305, %v2352
        %v2386 = vadd.f32 %v2306, %v2354
        %v2387 = vmul.f32 %v2117, 1.442695
        %v2388 = vpow.pop %v2387
        %v2389 = vmul.f32 %v2120, 1.442695
        %v2390 = vpow.pop %v2389
        %v2391 = vmul.f32 %v2125, 1.442695
        %v2392 = vpow.pop %v2391
        %v2393 = vmul.f32 %v2128, 1.442695
        %v2394 = vpow.pop %v2393
        %v2395 = vmul.f32 %v2133, 1.442695
        %v2396 = vpow.pop %v2395
        %v2397 = vmul.f32 %v2136, 1.442695
        %v2398 = vpow.pop %v2397
        %v2399 = vmul.f32 %v2141, 1.442695
        %v2400 = vpow.pop %v2399
        %v2401 = vmul.f32 %v2144, 1.442695
        %v2402 = vpow.pop %v2401
        %v2403 = vmul.f32 %v2149, 1.442695
        %v2404 = vpow.pop %v2403
        %v2405 = vmul.f32 %v2152, 1.442695
        %v2406 = vpow.pop %v2405
        %v2407 = vmul.f32 %v2157, 1.442695
        %v2408 = vpow.pop %v2407
        %v2409 = vmul.f32 %v2160, 1.442695
        %v2410 = vpow.pop %v2409
        %v2411 = vmul.f32 %v2165, 1.442695
        %v2412 = vpow.pop %v2411
        %v2413 = vmul.f32 %v2168, 1.442695
        %v2414 = vpow.pop %v2413
        %v2415 = vmul.f32 %v2173, 1.442695
        %v2416 = vpow.pop %v2415
        %v2417 = vmul.f32 %v2176, 1.442695
        %v2418 = vpow.pop %v2417
        %v2419 = vmul.f32 %v2388, %v2324
        %v2420 = vmul.f32 %v2390, %v2326
        %v2421 = vmul.f32 %v2392, %v2328
        %v2422 = vmul.f32 %v2394, %v2330
        %v2423 = vmul.f32 %v2396, %v2332
        %v2424 = vmul.f32 %v2398, %v2334
        %v2425 = vmul.f32 %v2400, %v2336
        %v2426 = vmul.f32 %v2402, %v2338
        %v2427 = vmul.f32 %v2404, %v2340
        %v2428 = vmul.f32 %v2406, %v2342
        %v2429 = vmul.f32 %v2408, %v2344
        %v2430 = vmul.f32 %v2410, %v2346
        %v2431 = vmul.f32 %v2412, %v2348
        %v2432 = vmul.f32 %v2414, %v2350
        %v2433 = vmul.f32 %v2416, %v2352
        %v2434 = vmul.f32 %v2418, %v2354
        %v2435 = vmul.f32 %v2419, 0.5
        %v2436 = vmul.f32 %v2420, 0.5
        %v2437 = vmul.f32 %v2421, 0.5
        %v2438 = vmul.f32 %v2422, 0.5
        %v2439 = vmul.f32 %v2423, 0.5
        %v2440 = vmul.f32 %v2424, 0.5
        %v2441 = vmul.f32 %v2425, 0.5
        %v2442 = vmul.f32 %v2426, 0.5
        %v2443 = vmul.f32 %v2427, 0.5
        %v2444 = vmul.f32 %v2428, 0.5
        %v2445 = vmul.f32 %v2429, 0.5
        %v2446 = vmul.f32 %v2430, 0.5
        %v2447 = vmul.f32 %v2431, 0.5
        %v2448 = vmul.f32 %v2432, 0.5
        %v2449 = vmul.f32 %v2433, 0.5
        %v2450 = vmul.f32 %v2434, 0.5
        %2467 = vrot.lane.b32.xlu0 %v2435, 110
        %v2468 = vpop.permute.xlu0 %2467
        %2469 = vrot.lane.b32.xlu0 %v2436, 110
        %v2470 = vpop.permute.xlu0 %2469
        %2471 = vrot.lane.b32.xlu0 %v2437, 110
        %v2472 = vpop.permute.xlu0 %2471
        %2473 = vrot.lane.b32.xlu0 %v2438, 110
        %v2474 = vpop.permute.xlu0 %2473
        %2475 = vrot.lane.b32.xlu0 %v2439, 110
        %v2476 = vpop.permute.xlu0 %2475
        %2477 = vrot.lane.b32.xlu0 %v2440, 110
        %v2478 = vpop.permute.xlu0 %2477
        %2479 = vrot.lane.b32.xlu0 %v2441, 110
        %v2480 = vpop.permute.xlu0 %2479
        %2481 = vrot.lane.b32.xlu0 %v2442, 110
        %v2482 = vpop.permute.xlu0 %2481
        %2483 = vrot.lane.b32.xlu0 %v2443, 110
        %v2484 = vpop.permute.xlu0 %2483
        %2485 = vrot.lane.b32.xlu0 %v2444, 110
        %v2486 = vpop.permute.xlu0 %2485
        %2487 = vrot.lane.b32.xlu0 %v2445, 110
        %v2488 = vpop.permute.xlu0 %2487
        %2489 = vrot.lane.b32.xlu0 %v2446, 110
        %v2490 = vpop.permute.xlu0 %2489
        %2491 = vrot.lane.b32.xlu0 %v2447, 110
        %v2492 = vpop.permute.xlu0 %2491
        %2493 = vrot.lane.b32.xlu0 %v2448, 110
        %v2494 = vpop.permute.xlu0 %2493
        %2495 = vrot.lane.b32.xlu0 %v2449, 110
        %v2496 = vpop.permute.xlu0 %2495
        %2497 = vrot.lane.b32.xlu0 %v2450, 110
        %v2498 = vpop.permute.xlu0 %2497
        %v2515 = vsub.f32 %v2371, %v2468
        %v2516 = vsub.f32 %v2372, %v2470
        %v2517 = vsub.f32 %v2373, %v2472
        %v2518 = vsub.f32 %v2374, %v2474
        %v2519 = vsub.f32 %v2375, %v2476
        %v2520 = vsub.f32 %v2376, %v2478
        %v2521 = vsub.f32 %v2377, %v2480
        %v2522 = vsub.f32 %v2378, %v2482
        %v2523 = vsub.f32 %v2379, %v2484
        %v2524 = vsub.f32 %v2380, %v2486
        %v2525 = vsub.f32 %v2381, %v2488
        %v2526 = vsub.f32 %v2382, %v2490
        %v2527 = vsub.f32 %v2383, %v2492
        %v2528 = vsub.f32 %v2384, %v2494
        %v2529 = vsub.f32 %v2385, %v2496
        %v2530 = vsub.f32 %v2386, %v2498
        %v2531 = vmax.f32 %v2515, 0.0
        %v2532 = vmax.f32 %v2516, 0.0
        %v2533 = vmax.f32 %v2517, 0.0
        %v2534 = vmax.f32 %v2518, 0.0
        %v2535 = vmax.f32 %v2519, 0.0
        %v2536 = vmax.f32 %v2520, 0.0
        %v2537 = vmax.f32 %v2521, 0.0
        %v2538 = vmax.f32 %v2522, 0.0
        %v2539 = vmax.f32 %v2523, 0.0
        %v2540 = vmax.f32 %v2524, 0.0
        %v2541 = vmax.f32 %v2525, 0.0
        %v2542 = vmax.f32 %v2526, 0.0
        %v2543 = vmax.f32 %v2527, 0.0
        %v2544 = vmax.f32 %v2528, 0.0
        %v2545 = vmax.f32 %v2529, 0.0
        %v2546 = vmax.f32 %v2530, 0.0
        %v2547 = vmin.f32 %v2531, 256.0
        %v2548 = vmin.f32 %v2532, 256.0
        %v2549 = vmin.f32 %v2533, 256.0
        %v2550 = vmin.f32 %v2534, 256.0
        %v2551 = vmin.f32 %v2535, 256.0
        %v2552 = vmin.f32 %v2536, 256.0
        %v2553 = vmin.f32 %v2537, 256.0
        %v2554 = vmin.f32 %v2538, 256.0
        %v2555 = vmin.f32 %v2539, 256.0
        %v2556 = vmin.f32 %v2540, 256.0
        %v2557 = vmin.f32 %v2541, 256.0
        %v2558 = vmin.f32 %v2542, 256.0
        %v2559 = vmin.f32 %v2543, 256.0
        %v2560 = vmin.f32 %v2544, 256.0
        %v2561 = vmin.f32 %v2545, 256.0
        %v2562 = vmin.f32 %v2546, 256.0
        %v2563 = vadd.f32 %v2371, %v2468
        %v2564 = vadd.f32 %v2372, %v2470
        %v2565 = vadd.f32 %v2373, %v2472
        %v2566 = vadd.f32 %v2374, %v2474
        %v2567 = vadd.f32 %v2375, %v2476
        %v2568 = vadd.f32 %v2376, %v2478
        %v2569 = vadd.f32 %v2377, %v2480
        %v2570 = vadd.f32 %v2378, %v2482
        %v2571 = vadd.f32 %v2379, %v2484
        %v2572 = vadd.f32 %v2380, %v2486
        %v2573 = vadd.f32 %v2381, %v2488
        %v2574 = vadd.f32 %v2382, %v2490
        %v2575 = vadd.f32 %v2383, %v2492
        %v2576 = vadd.f32 %v2384, %v2494
        %v2577 = vadd.f32 %v2385, %v2496
        %v2578 = vadd.f32 %v2386, %v2498
        %v2579 = vmax.f32 %v2563, 0.0
        %v2580 = vmax.f32 %v2564, 0.0
        %v2581 = vmax.f32 %v2565, 0.0
        %v2582 = vmax.f32 %v2566, 0.0
        %v2583 = vmax.f32 %v2567, 0.0
        %v2584 = vmax.f32 %v2568, 0.0
        %v2585 = vmax.f32 %v2569, 0.0
        %v2586 = vmax.f32 %v2570, 0.0
        %v2587 = vmax.f32 %v2571, 0.0
        %v2588 = vmax.f32 %v2572, 0.0
        %v2589 = vmax.f32 %v2573, 0.0
        %v2590 = vmax.f32 %v2574, 0.0
        %v2591 = vmax.f32 %v2575, 0.0
        %v2592 = vmax.f32 %v2576, 0.0
        %v2593 = vmax.f32 %v2577, 0.0
        %v2594 = vmax.f32 %v2578, 0.0
        %v2595 = vmin.f32 %v2579, 256.0
        %v2596 = vmin.f32 %v2580, 256.0
        %v2597 = vmin.f32 %v2581, 256.0
        %v2598 = vmin.f32 %v2582, 256.0
        %v2599 = vmin.f32 %v2583, 256.0
        %v2600 = vmin.f32 %v2584, 256.0
        %v2601 = vmin.f32 %v2585, 256.0
        %v2602 = vmin.f32 %v2586, 256.0
        %v2603 = vmin.f32 %v2587, 256.0
        %v2604 = vmin.f32 %v2588, 256.0
        %v2605 = vmin.f32 %v2589, 256.0
        %v2606 = vmin.f32 %v2590, 256.0
        %v2607 = vmin.f32 %v2591, 256.0
        %v2608 = vmin.f32 %v2592, 256.0
        %v2609 = vmin.f32 %v2593, 256.0
        %v2610 = vmin.f32 %v2594, 256.0
        %2627 = vrot.lane.b32.xlu0 %v2547, 45
        %v2628 = vpop.permute.xlu0 %2627
        %2629 = vrot.lane.b32.xlu0 %v2548, 45
        %v2630 = vpop.permute.xlu0 %2629
        %2631 = vrot.lane.b32.xlu0 %v2549, 45
        %v2632 = vpop.permute.xlu0 %2631
        %2633 = vrot.lane.b32.xlu0 %v2550, 45
        %v2634 = vpop.permute.xlu0 %2633
        %2635 = vrot.lane.b32.xlu0 %v2551, 45
        %v2636 = vpop.permute.xlu0 %2635
        %2637 = vrot.lane.b32.xlu0 %v2552, 45
        %v2638 = vpop.permute.xlu0 %2637
        %2639 = vrot.lane.b32.xlu0 %v2553, 45
        %v2640 = vpop.permute.xlu0 %2639
        %2641 = vrot.lane.b32.xlu0 %v2554, 45
        %v2642 = vpop.permute.xlu0 %2641
        %2643 = vrot.lane.b32.xlu0 %v2555, 45
        %v2644 = vpop.permute.xlu0 %2643
        %2645 = vrot.lane.b32.xlu0 %v2556, 45
        %v2646 = vpop.permute.xlu0 %2645
        %2647 = vrot.lane.b32.xlu0 %v2557, 45
        %v2648 = vpop.permute.xlu0 %2647
        %2649 = vrot.lane.b32.xlu0 %v2558, 45
        %v2650 = vpop.permute.xlu0 %2649
        %2651 = vrot.lane.b32.xlu0 %v2559, 45
        %v2652 = vpop.permute.xlu0 %2651
        %2653 = vrot.lane.b32.xlu0 %v2560, 45
        %v2654 = vpop.permute.xlu0 %2653
        %2655 = vrot.lane.b32.xlu0 %v2561, 45
        %v2656 = vpop.permute.xlu0 %2655
        %2657 = vrot.lane.b32.xlu0 %v2562, 45
        %v2658 = vpop.permute.xlu0 %2657
        %2691 = vrot.lane.b32.xlu0 %v2595, 63
        %v2692 = vpop.permute.xlu0 %2691
        %2693 = vrot.lane.b32.xlu0 %v2596, 63
        %v2694 = vpop.permute.xlu0 %2693
        %2695 = vrot.lane.b32.xlu0 %v2597, 63
        %v2696 = vpop.permute.xlu0 %2695
        %2697 = vrot.lane.b32.xlu0 %v2598, 63
        %v2698 = vpop.permute.xlu0 %2697
        %2699 = vrot.lane.b32.xlu0 %v2599, 63
        %v2700 = vpop.permute.xlu0 %2699
        %2701 = vrot.lane.b32.xlu0 %v2600, 63
        %v2702 = vpop.permute.xlu0 %2701
        %2703 = vrot.lane.b32.xlu0 %v2601, 63
        %v2704 = vpop.permute.xlu0 %2703
        %2705 = vrot.lane.b32.xlu0 %v2602, 63
        %v2706 = vpop.permute.xlu0 %2705
        %2707 = vrot.lane.b32.xlu0 %v2603, 63
        %v2708 = vpop.permute.xlu0 %2707
        %2709 = vrot.lane.b32.xlu0 %v2604, 63
        %v2710 = vpop.permute.xlu0 %2709
        %2711 = vrot.lane.b32.xlu0 %v2605, 63
        %v2712 = vpop.permute.xlu0 %2711
        %2713 = vrot.lane.b32.xlu0 %v2606, 63
        %v2714 = vpop.permute.xlu0 %2713
        %2715 = vrot.lane.b32.xlu0 %v2607, 63
        %v2716 = vpop.permute.xlu0 %2715
        %2717 = vrot.lane.b32.xlu0 %v2608, 63
        %v2718 = vpop.permute.xlu0 %2717
        %2719 = vrot.lane.b32.xlu0 %v2609, 63
        %v2720 = vpop.permute.xlu0 %2719
        %2721 = vrot.lane.b32.xlu0 %v2610, 63
        %v2722 = vpop.permute.xlu0 %2721
        %vm2739 = vcmask 441344
        %v2740 = vsel %vm2739, %v2117, %v2244
        %v2741 = vsel %vm2739, %v2120, %v2246
        %v2742 = vsel %vm2739, %v2125, %v2248
        %v2743 = vsel %vm2739, %v2128, %v2250
        %v2744 = vsel %vm2739, %v2133, %v2252
        %v2745 = vsel %vm2739, %v2136, %v2254
        %v2746 = vsel %vm2739, %v2141, %v2256
        %v2747 = vsel %vm2739, %v2144, %v2258
        %v2748 = vsel %vm2739, %v2149, %v2260
        %v2749 = vsel %vm2739, %v2152, %v2262
        %v2750 = vsel %vm2739, %v2157, %v2264
        %v2751 = vsel %vm2739, %v2160, %v2266
        %v2752 = vsel %vm2739, %v2165, %v2268
        %v2753 = vsel %vm2739, %v2168, %v2270
        %v2754 = vsel %vm2739, %v2173, %v2272
        %v2755 = vsel %vm2739, %v2176, %v2274
        %vm2756 = vcmask 515072
        %v2757 = vsel %vm2756, %v2740, %v2628
        %v2758 = vsel %vm2756, %v2741, %v2630
        %v2759 = vsel %vm2756, %v2742, %v2632
        %v2760 = vsel %vm2756, %v2743, %v2634
        %v2761 = vsel %vm2756, %v2744, %v2636
        %v2762 = vsel %vm2756, %v2745, %v2638
        %v2763 = vsel %vm2756, %v2746, %v2640
        %v2764 = vsel %vm2756, %v2747, %v2642
        %v2765 = vsel %vm2756, %v2748, %v2644
        %v2766 = vsel %vm2756, %v2749, %v2646
        %v2767 = vsel %vm2756, %v2750, %v2648
        %v2768 = vsel %vm2756, %v2751, %v2650
        %v2769 = vsel %vm2756, %v2752, %v2652
        %v2770 = vsel %vm2756, %v2753, %v2654
        %v2771 = vsel %vm2756, %v2754, %v2656
        %v2772 = vsel %vm2756, %v2755, %v2658
        %vm2773 = vcmask 588800
        %v2774 = vsel %vm2773, %v2757, %v2628
        %v2775 = vsel %vm2773, %v2758, %v2630
        %v2776 = vsel %vm2773, %v2759, %v2632
        %v2777 = vsel %vm2773, %v2760, %v2634
        %v2778 = vsel %vm2773, %v2761, %v2636
        %v2779 = vsel %vm2773, %v2762, %v2638
        %v2780 = vsel %vm2773, %v2763, %v2640
        %v2781 = vsel %vm2773, %v2764, %v2642
        %v2782 = vsel %vm2773, %v2765, %v2644
        %v2783 = vsel %vm2773, %v2766, %v2646
        %v2784 = vsel %vm2773, %v2767, %v2648
        %v2785 = vsel %vm2773, %v2768, %v2650
        %v2786 = vsel %vm2773, %v2769, %v2652
        %v2787 = vsel %vm2773, %v2770, %v2654
        %v2788 = vsel %vm2773, %v2771, %v2656
        %v2789 = vsel %vm2773, %v2772, %v2658
        %vm2790 = vcmask 662528
        %v2791 = vsel %vm2790, %v2774, %v2692
        %v2792 = vsel %vm2790, %v2775, %v2694
        %v2793 = vsel %vm2790, %v2776, %v2696
        %v2794 = vsel %vm2790, %v2777, %v2698
        %v2795 = vsel %vm2790, %v2778, %v2700
        %v2796 = vsel %vm2790, %v2779, %v2702
        %v2797 = vsel %vm2790, %v2780, %v2704
        %v2798 = vsel %vm2790, %v2781, %v2706
        %v2799 = vsel %vm2790, %v2782, %v2708
        %v2800 = vsel %vm2790, %v2783, %v2710
        %v2801 = vsel %vm2790, %v2784, %v2712
        %v2802 = vsel %vm2790, %v2785, %v2714
        %v2803 = vsel %vm2790, %v2786, %v2716
        %v2804 = vsel %vm2790, %v2787, %v2718
        %v2805 = vsel %vm2790, %v2788, %v2720
        %v2806 = vsel %vm2790, %v2789, %v2722
        %vm2807 = vcmask 736256
        %v2808 = vsel %vm2807, %v2791, %v2692
        %v2809 = vsel %vm2807, %v2792, %v2694
        %v2810 = vsel %vm2807, %v2793, %v2696
        %v2811 = vsel %vm2807, %v2794, %v2698
        %v2812 = vsel %vm2807, %v2795, %v2700
        %v2813 = vsel %vm2807, %v2796, %v2702
        %v2814 = vsel %vm2807, %v2797, %v2704
        %v2815 = vsel %vm2807, %v2798, %v2706
        %v2816 = vsel %vm2807, %v2799, %v2708
        %v2817 = vsel %vm2807, %v2800, %v2710
        %v2818 = vsel %vm2807, %v2801, %v2712
        %v2819 = vsel %vm2807, %v2802, %v2714
        %v2820 = vsel %vm2807, %v2803, %v2716
        %v2821 = vsel %vm2807, %v2804, %v2718
        %v2822 = vsel %vm2807, %v2805, %v2720
        %v2823 = vsel %vm2807, %v2806, %v2722
        %vm2824 = vcmask 809984
        %v2825 = vsel %vm2824, %v2808, 0.0
        %v2826 = vsel %vm2824, %v2809, 0.0
        %v2827 = vsel %vm2824, %v2810, 0.0
        %v2828 = vsel %vm2824, %v2811, 0.0
        %v2829 = vsel %vm2824, %v2812, 0.0
        %v2830 = vsel %vm2824, %v2813, 0.0
        %v2831 = vsel %vm2824, %v2814, 0.0
        %v2832 = vsel %vm2824, %v2815, 0.0
        %v2833 = vsel %vm2824, %v2816, 0.0
        %v2834 = vsel %vm2824, %v2817, 0.0
        %v2835 = vsel %vm2824, %v2818, 0.0
        %v2836 = vsel %vm2824, %v2819, 0.0
        %v2837 = vsel %vm2824, %v2820, 0.0
        %v2838 = vsel %vm2824, %v2821, 0.0
        %v2839 = vsel %vm2824, %v2822, 0.0
        %v2840 = vsel %vm2824, %v2823, 0.0
        %2841 = vst [vmem:[%s284] sm:$0xff] %v2825
        %2842 = vst [vmem:[%s284 + $0x8] sm:$0xff] %v2826
        %2843 = vst [vmem:[%s284 + $0x10] sm:$0xff] %v2827
        %2844 = vst [vmem:[%s284 + $0x18] sm:$0xff] %v2828
        %2845 = vst [vmem:[%s284 + $0x20] sm:$0xff] %v2829
        %2846 = vst [vmem:[%s284 + $0x28] sm:$0xff] %v2830
        %2847 = vst [vmem:[%s284 + $0x30] sm:$0xff] %v2831
        %2848 = vst [vmem:[%s284 + $0x38] sm:$0xff] %v2832
        %2849 = vst [vmem:[%s284 + $0x40] sm:$0xff] %v2833
        %2850 = vst [vmem:[%s284 + $0x48] sm:$0xff] %v2834
        %2851 = vst [vmem:[%s284 + $0x50] sm:$0xff] %v2835
        %2852 = vst [vmem:[%s284 + $0x58] sm:$0xff] %v2836
        %2853 = vst [vmem:[%s284 + $0x60] sm:$0xff] %v2837
        %2854 = vst [vmem:[%s284 + $0x68] sm:$0xff] %v2838
        %2855 = vst [vmem:[%s284 + $0x70] sm:$0xff] %v2839
        %2856 = vst [vmem:[%s284 + $0x78] sm:$0xff] %v2840
        %s2857 = sand.u32 %s180, 1
        %s2858 = scalar_lea.sflag [#allocation3], %s2857
        %s2859 = sand.u32 %s180, 1
        %s2860 = smul.addr %s2859, 128
        %s2861 = scalar_lea.vmem [#allocation2], %s2860
        // Predicated region
        $region45: #{tpu_custom_call.1} parent=43 // pred_check
          %p2862 = pneg %p190
        $region46: #{tpu_custom_call.1} parent=43 // pred_check_branch
          %2864 = sbr.rel (%p2862) target = $region48
        $region47: #{tpu_custom_call.1} parent=43 // pred_region
          %s2865 = smul.u32 16, %s24
          %s2867 = ssub.s32 2048, 2048
          %2868 = vsyncadd %s2858, %s2867
          %s2869 = smul.addr %s25, 32
          %s2870 = sadd.s32 %s2865, %s2869
          %s2871 = smul.addr %s2870, 128
          %s2872 = scalar_lea.hbm %s6, %s2871
          %s2873 = sshll.u32 %s2861, 4
          %s2874 = int_to_ptr.vmem [resolvable:$true] %s2873
          %2879 = dma.vmem_to_hbm [thread:$0]  %s2874, 2048, %s2872, %s2858, 128, 128, 8
        $region48: #{tpu_custom_call.1} parent=43 // pred_fallthru
          _
      $region44: #{tpu_custom_call.1} parent=5 // pred_fallthru
        _
      %p2880 = scmp.le.s32.totalorder 2, %s15
      // Predicated region
      $region49: #{tpu_custom_call.1} parent=5 // pred_check
        %p2881 = pneg %p2880
      $region50: #{tpu_custom_call.1} parent=5 // pred_check_branch
        %2883 = sbr.rel (%p2881) target = $region52
      $region51: #{tpu_custom_call.1} parent=5 // pred_region
        %s2884 = ssub.s32 %s15, 2
        // Predicated region
        $region53: #{tpu_custom_call.1} parent=51 // pred_check
          %p2885 = pneg %p196
        $region54: #{tpu_custom_call.1} parent=51 // pred_check_branch
          %2887 = sbr.rel (%p2885) target = $region56
        $region55: #{tpu_custom_call.1} parent=51 // pred_region
          %s2888 = sand.u32 %s181, 1
          %s2889 = scalar_lea.sflag [#allocation3], %s2888
          %s2890 = sand.u32 %s181, 1
          %s2891 = smul.addr %s2890, 128
          %s2892 = scalar_lea.vmem [#allocation2], %s2891
          %2893 = dma.done %s2889, 2048
        $region56: #{tpu_custom_call.1} parent=51 // pred_fallthru
          _
      $region52: #{tpu_custom_call.1} parent=5 // pred_fallthru
        _
    $region6: #{tpu_custom_call.1} parent=1 // loop_footer
      %s19 = sadd.s32 1, %s15
    $region7: #{tpu_custom_call.1} parent=1 // loop_footer_branch
      %14 = sbr.rel target = $region3
    $region8: #{tpu_custom_call.1} parent=1 // loop_exit
      _
    %2894 = vsyncpa [#allocation3], 1
    %s2895 = scalar_lea.sflag [#allocation3], 1
    %2896 = vsyncpa %s2895, 1

</llo_original>
